<compile_context>
chip_gen: v7x
topology: tpu7x:2x2x1
jax: 0.10.0
libtpu: 0.0.40
codegen_flags: <defaults>
</compile_context>

<pallas_src>
import math
import functools

import jax
import jax.numpy as jnp
from jax.experimental import pallas as pl
from jax.experimental.pallas import tpu as pltpu

_LN_EPS = 1e-5
_INV_SQRT2 = 1.0 / math.sqrt(2.0)


def _fused_blocks_kernel(x_ref, wq_ref, wk_ref, wv_ref, wo_ref,
                         w1_ref, b1_ref, w2_ref, b2_ref,
                         g1_ref, be1_ref, g2_ref, be2_ref,
                         o_ref, x_state,
                         *, Bn, L, D, F, H, d_k, num_blocks):
    """One TransformerBlock layer for a chunk of Bn graphs.

    Grid is (graph_chunks, num_blocks). The token state is kept resident in the
    VMEM scratch `x_state` across the (innermost) layer axis; only the readout
    row of the final layer is written to HBM.
    """
    layer = pl.program_id(1)

    @pl.when(layer == 0)
    def _init():
        x_state[...] = x_ref[...].reshape(Bn * L, D).astype(jnp.float32)

    x = x_state[...]                                               # [Bn*L, D] fp32

    wq = wq_ref[0]
    wk = wk_ref[0]
    wv = wv_ref[0]
    wo = wo_ref[0]

    # QKV projections over all Bn*L tokens at once (single 2-D MXU matmuls).
    q = jnp.dot(x, wq, preferred_element_type=jnp.float32)         # [Bn*L, D]
    k = jnp.dot(x, wk, preferred_element_type=jnp.float32)
    v = jnp.dot(x, wv, preferred_element_type=jnp.float32)

    q3 = q.reshape(Bn, L, D)
    k3 = k.reshape(Bn, L, D)
    v3 = v.reshape(Bn, L, D)

    # Multi-head attention, batched over graphs. Per-head context is folded
    # directly into the output projection, so no lane-axis concatenate.
    scale = 1.0 / math.sqrt(d_k)
    attn_proj = jnp.zeros((Bn * L, D), jnp.float32)
    for h in range(H):                                             # static unroll
        sl = slice(h * d_k, (h + 1) * d_k)
        s = jnp.einsum('nqd,nkd->nqk', q3[:, :, sl], k3[:, :, sl],
                       preferred_element_type=jnp.float32) * scale   # [Bn, L, L]
        s = s - jnp.max(s, axis=-1, keepdims=True)
        p = jnp.exp(s)
        p = p / jnp.sum(p, axis=-1, keepdims=True)
        ctx = jnp.einsum('nqk,nkd->nqd', p, v3[:, :, sl],
                         preferred_element_type=jnp.float32)         # [Bn, L, d_k]
        attn_proj = attn_proj + jnp.dot(ctx.reshape(Bn * L, d_k), wo[sl, :],
                                        preferred_element_type=jnp.float32)

    # residual (dropout[1] = identity in eval) + LayerNorm1
    x1 = x + attn_proj
    mu1 = jnp.mean(x1, axis=-1, keepdims=True)
    var1 = jnp.mean((x1 - mu1) ** 2, axis=-1, keepdims=True)
    xn1 = (x1 - mu1) * jax.lax.rsqrt(var1 + _LN_EPS) * g1_ref[0] + be1_ref[0]

    # FFN: linear1 -> exact (erf) GELU -> linear2   (dropout[2] = identity)
    hdn = jnp.dot(xn1, w1_ref[0], preferred_element_type=jnp.float32) + b1_ref[0]
    hdn = 0.5 * hdn * (1.0 + jax.lax.erf(hdn * _INV_SQRT2))
    x2 = jnp.dot(hdn, w2_ref[0], preferred_element_type=jnp.float32) + b2_ref[0]

    # residual (dropout[3] = identity) + LayerNorm2
    x3 = x1 + x2
    mu2 = jnp.mean(x3, axis=-1, keepdims=True)
    var2 = jnp.mean((x3 - mu2) ** 2, axis=-1, keepdims=True)
    out = (x3 - mu2) * jax.lax.rsqrt(var2 + _LN_EPS) * g2_ref[0] + be2_ref[0]

    x_state[...] = out                                             # carry to next layer

    @pl.when(layer == num_blocks - 1)
    def _emit():
        # Only the readout token xs[:, 0, :] is consumed downstream.
        o_ref[...] = out.reshape(Bn, L, D)[:, 0, :].astype(o_ref.dtype)


def _choose_bn(N, L, max_rows=1024):
    """Largest divisor of N with Bn*L <= max_rows; if the batch is chunked
    (G > 1) keep Bn a multiple of 8 so the [Bn, D] output block stays
    sublane-aligned."""
    for bn in range(N, 0, -1):
        if N % bn:
            continue
        if bn * L > max_rows:
            continue
        if bn != N and bn % 8 != 0:
            continue
        return bn
    return N


def make_fused_call(N, Bn, L, D, F, H, num_blocks, dtype=jnp.float32):
    d_k = D // H
    kernel = functools.partial(_fused_blocks_kernel, Bn=Bn, L=L, D=D, F=F,
                               H=H, d_k=d_k, num_blocks=num_blocks)
    G = N // Bn

    def wmap(g, l):
        return (l, 0, 0)

    in_specs = [
        pl.BlockSpec((Bn, L, D), lambda g, l: (g, 0, 0)),  # x (resident per chunk)
        pl.BlockSpec((1, D, D), wmap),                     # wq
        pl.BlockSpec((1, D, D), wmap),                     # wk
        pl.BlockSpec((1, D, D), wmap),                     # wv
        pl.BlockSpec((1, D, D), wmap),                     # wo
        pl.BlockSpec((1, D, F), wmap),                     # w1
        pl.BlockSpec((1, 1, F), wmap),                     # b1
        pl.BlockSpec((1, F, D), wmap),                     # w2
        pl.BlockSpec((1, 1, D), wmap),                     # b2
        pl.BlockSpec((1, 1, D), wmap),                     # norm1 gamma
        pl.BlockSpec((1, 1, D), wmap),                     # norm1 beta
        pl.BlockSpec((1, 1, D), wmap),                     # norm2 gamma
        pl.BlockSpec((1, 1, D), wmap),                     # norm2 beta
    ]

    flops = num_blocks * (N * L * (8 * D * D + 4 * D * F)
                          + N * H * 4 * L * L * d_k)
    transcendentals = num_blocks * N * (H * L * L + L * F)
    bytes_accessed = 4 * (N * L * D + N * D
                          + num_blocks * (4 * D * D + 2 * D * F + 2 * F + 5 * D))

    return pl.pallas_call(
        kernel,
        out_shape=jax.ShapeDtypeStruct((N, D), dtype),
        grid=(G, num_blocks),
        in_specs=in_specs,
        out_specs=pl.BlockSpec((Bn, D), lambda g, l: (g, 0)),
        scratch_shapes=[pltpu.VMEM((Bn * L, D), jnp.float32)],
        compiler_params=pltpu.CompilerParams(
            dimension_semantics=("parallel", "arbitrary")),
        cost_estimate=pl.CostEstimate(
            flops=flops, transcendentals=transcendentals,
            bytes_accessed=bytes_accessed),
    )


def init_block_params(key, D, F):
    """Deterministic synthetic weights (shapes match nn.Linear / nn.LayerNorm).
    Linear weights are stored [in, out] (i.e. torch weight transposed)."""
    ks = jax.random.split(key, 8)

    def lin(k, fan_in, shape):
        bound = 1.0 / math.sqrt(fan_in)
        return jax.random.uniform(k, shape, jnp.float32, -bound, bound)

    wq = lin(ks[0], D, (D, D))
    wk = lin(ks[1], D, (D, D))
    wv = lin(ks[2], D, (D, D))
    wo = lin(ks[3], D, (D, D))
    w1 = lin(ks[4], D, (D, F))
    b1 = lin(ks[5], D, (1, F))
    w2 = lin(ks[6], F, (F, D))
    b2 = lin(ks[7], F, (1, D))
    g1 = jnp.ones((1, D), jnp.float32)
    be1 = jnp.zeros((1, D), jnp.float32)
    g2 = jnp.ones((1, D), jnp.float32)
    be2 = jnp.zeros((1, D), jnp.float32)
    return (wq, wk, wv, wo, w1, b1, w2, b2, g1, be1, g2, be2)


def readout_transformer_block(xs_list, all_params, N, L, D, F, H):
    """rearrange(xs, 'l n d -> n l d'); apply all blocks fused; return xs[:, 0, :]."""
    x = jnp.transpose(jnp.stack(xs_list, axis=0), (1, 0, 2))      # [N, L, D]
    num_blocks = len(all_params)
    # Stack every per-block parameter along a leading layer axis.
    stacked = tuple(jnp.stack([blk[i] for blk in all_params], axis=0)
                    for i in range(len(all_params[0])))
    Bn = _choose_bn(N, L)
    call = make_fused_call(N, Bn, L, D, F, H, num_blocks, x.dtype)
    return call(x, *stacked)                                      # [N, D]


def _reference(xs_list, all_params, H):
    """Plain-JAX reference of the eval-mode PyTorch forward for validation."""
    x = jnp.transpose(jnp.stack(xs_list, axis=0), (1, 0, 2)).astype(jnp.float32)
    N, L, D = x.shape
    d_k = D // H
    for (wq, wk, wv, wo, w1, b1, w2, b2, g1, be1, g2, be2) in all_params:
        q = (x @ wq).reshape(N, L, H, d_k)
        k = (x @ wk).reshape(N, L, H, d_k)
        v = (x @ wv).reshape(N, L, H, d_k)
        s = jnp.einsum('nqhd,nkhd->nhqk', q, k) / math.sqrt(d_k)
        p = jax.nn.softmax(s, axis=-1)
        ctx = jnp.einsum('nhqk,nkhd->nqhd', p, v).reshape(N, L, D)
        x1 = x + ctx @ wo
        mu = x1.mean(-1, keepdims=True)
        var = ((x1 - mu) ** 2).mean(-1, keepdims=True)
        xn = (x1 - mu) * jax.lax.rsqrt(var + _LN_EPS) * g1 + be1
        h = xn @ w1 + b1
        h = 0.5 * h * (1.0 + jax.lax.erf(h * _INV_SQRT2))
        x2 = h @ w2 + b2
        x3 = x1 + x2
        mu2 = x3.mean(-1, keepdims=True)
        var2 = ((x3 - mu2) ** 2).mean(-1, keepdims=True)
        x = (x3 - mu2) * jax.lax.rsqrt(var2 + _LN_EPS) * g2 + be2
    return x[:, 0, :]


if __name__ == "__main__":
    # Small shapes consistent with the module.
    NUM_BLOCKS = 2
    N, L = 2, 8          # batch (graphs), number of hierarchy levels (seq)
    D, F, H = 32, 64, 4  # hidden_dim, ffn_dim, num_heads

    key = jax.random.PRNGKey(0)
    kx, kp = jax.random.split(key)

    # Input: list of L tensors of shape [N, D] (as the torch module receives).
    x_keys = jax.random.split(kx, L)
    xs_list = [jax.random.normal(x_keys[i], (N, D), jnp.float32) for i in range(L)]

    # Deterministic per-block parameters.
    p_keys = jax.random.split(kp, NUM_BLOCKS)
    all_params = [init_block_params(p_keys[i], D, F) for i in range(NUM_BLOCKS)]

    out = readout_transformer_block(xs_list, all_params, N, L, D, F, H)
    out = jax.block_until_ready(out)
    assert out.shape == (N, D)

    ref = jax.block_until_ready(_reference(xs_list, all_params, H))
    max_err = float(jnp.max(jnp.abs(out - ref)))
    assert max_err < 1e-3, f"kernel/reference mismatch: max abs err {max_err}"

    print("KERNEL_OK")
</pallas_src>

<mosaic_0001>
module attributes {stable_mosaic.version = 11 : i64} {
  func.func @_fused_blocks_kernel(%arg0: i32, %arg1: i32, %arg2: memref<2x8x32xf32, #tpu.memory_space<vmem>>, %arg3: memref<1x32x32xf32, #tpu.memory_space<vmem>>, %arg4: memref<1x32x32xf32, #tpu.memory_space<vmem>>, %arg5: memref<1x32x32xf32, #tpu.memory_space<vmem>>, %arg6: memref<1x32x32xf32, #tpu.memory_space<vmem>>, %arg7: memref<1x32x64xf32, #tpu.memory_space<vmem>>, %arg8: memref<1x1x64xf32, #tpu.memory_space<vmem>>, %arg9: memref<1x64x32xf32, #tpu.memory_space<vmem>>, %arg10: memref<1x1x32xf32, #tpu.memory_space<vmem>>, %arg11: memref<1x1x32xf32, #tpu.memory_space<vmem>>, %arg12: memref<1x1x32xf32, #tpu.memory_space<vmem>>, %arg13: memref<1x1x32xf32, #tpu.memory_space<vmem>>, %arg14: memref<1x1x32xf32, #tpu.memory_space<vmem>>, %arg15: memref<2x32xf32, #tpu.memory_space<vmem>>, %arg16: memref<16x32xf32, #tpu.memory_space<vmem>>) attributes {dimension_semantics = [#tpu.dimension_semantics<parallel>, #tpu.dimension_semantics<arbitrary>], iteration_bounds = array<i64: 1, 2>, scalar_prefetch = 0 : i64, scratch_operands = 1 : i64, tpu.core_type = #tpu.core_type<tc>, window_params = [{transform_indices = @transform_0, window_bounds = array<i64: 2, 8, 32>}, {transform_indices = @transform_1, window_bounds = array<i64: 1, 32, 32>}, {transform_indices = @transform_2, window_bounds = array<i64: 1, 32, 32>}, {transform_indices = @transform_3, window_bounds = array<i64: 1, 32, 32>}, {transform_indices = @transform_4, window_bounds = array<i64: 1, 32, 32>}, {transform_indices = @transform_5, window_bounds = array<i64: 1, 32, 64>}, {transform_indices = @transform_6, window_bounds = array<i64: 1, 1, 64>}, {transform_indices = @transform_7, window_bounds = array<i64: 1, 64, 32>}, {transform_indices = @transform_8, window_bounds = array<i64: 1, 1, 32>}, {transform_indices = @transform_9, window_bounds = array<i64: 1, 1, 32>}, {transform_indices = @transform_10, window_bounds = array<i64: 1, 1, 32>}, {transform_indices = @transform_11, window_bounds = array<i64: 1, 1, 32>}, {transform_indices = @transform_12, window_bounds = array<i64: 1, 1, 32>}, {transform_indices = @transform_13, window_bounds = array<i64: 2, 32>}]} {
    %c0_i32 = arith.constant 0 : i32
    %0 = arith.cmpi eq, %arg1, %c0_i32 : i32
    %1 = arith.extui %0 : i1 to i32
    %c0_i32_0 = arith.constant 0 : i32
    %2 = arith.cmpi ne, %1, %c0_i32_0 : i32
    scf.if %2 {
      %c0_83 = arith.constant 0 : index
      %c0_84 = arith.constant 0 : index
      %c0_85 = arith.constant 0 : index
      %179 = vector.load %arg2[%c0_83, %c0_84, %c0_85] : memref<2x8x32xf32, #tpu.memory_space<vmem>>, vector<2x8x32xf32>
      %180 = vector.shape_cast %179 : vector<2x8x32xf32> to vector<16x32xf32>
      %c0_86 = arith.constant 0 : index
      %c0_87 = arith.constant 0 : index
      %181 = vector.load %arg16[%c0_86, %c0_87] : memref<16x32xf32, #tpu.memory_space<vmem>>, vector<16x32xf32>
      tpu.vector_store %arg16[%c0_86, %c0_87], %180 {strides = array<i32>} : memref<16x32xf32, #tpu.memory_space<vmem>>, vector<16x32xf32>,
    } else {
    }
    %c0 = arith.constant 0 : index
    %c0_1 = arith.constant 0 : index
    %3 = vector.load %arg16[%c0, %c0_1] : memref<16x32xf32, #tpu.memory_space<vmem>>, vector<16x32xf32>
    %c0_2 = arith.constant 0 : index
    %c0_3 = arith.constant 0 : index
    %c0_4 = arith.constant 0 : index
    %4 = vector.load %arg3[%c0_2, %c0_3, %c0_4] : memref<1x32x32xf32, #tpu.memory_space<vmem>>, vector<1x32x32xf32>
    %5 = vector.shape_cast %4 : vector<1x32x32xf32> to vector<32x32xf32>
    %c0_5 = arith.constant 0 : index
    %c0_6 = arith.constant 0 : index
    %c0_7 = arith.constant 0 : index
    %6 = vector.load %arg4[%c0_5, %c0_6, %c0_7] : memref<1x32x32xf32, #tpu.memory_space<vmem>>, vector<1x32x32xf32>
    %7 = vector.shape_cast %6 : vector<1x32x32xf32> to vector<32x32xf32>
    %c0_8 = arith.constant 0 : index
    %c0_9 = arith.constant 0 : index
    %c0_10 = arith.constant 0 : index
    %8 = vector.load %arg5[%c0_8, %c0_9, %c0_10] : memref<1x32x32xf32, #tpu.memory_space<vmem>>, vector<1x32x32xf32>
    %9 = vector.shape_cast %8 : vector<1x32x32xf32> to vector<32x32xf32>
    %c0_11 = arith.constant 0 : index
    %c0_12 = arith.constant 0 : index
    %c0_13 = arith.constant 0 : index
    %10 = vector.load %arg6[%c0_11, %c0_12, %c0_13] : memref<1x32x32xf32, #tpu.memory_space<vmem>>, vector<1x32x32xf32>
    %11 = vector.shape_cast %10 : vector<1x32x32xf32> to vector<32x32xf32>
    %cst = arith.constant dense<0.000000e+00> : vector<16x32xf32>
    %12 = tpu.matmul %3, %5, %cst {dimension_numbers = #tpu.dot_dimension_numbers<[1], [0], [0], [1], [0, 0, 1, 1], [], []>} : vector<16x32xf32>, vector<32x32xf32>, vector<16x32xf32> -> vector<16x32xf32>
    %cst_14 = arith.constant dense<0.000000e+00> : vector<16x32xf32>
    %13 = tpu.matmul %3, %7, %cst_14 {dimension_numbers = #tpu.dot_dimension_numbers<[1], [0], [0], [1], [0, 0, 1, 1], [], []>} : vector<16x32xf32>, vector<32x32xf32>, vector<16x32xf32> -> vector<16x32xf32>
    %cst_15 = arith.constant dense<0.000000e+00> : vector<16x32xf32>
    %14 = tpu.matmul %3, %9, %cst_15 {dimension_numbers = #tpu.dot_dimension_numbers<[1], [0], [0], [1], [0, 0, 1, 1], [], []>} : vector<16x32xf32>, vector<32x32xf32>, vector<16x32xf32> -> vector<16x32xf32>
    %15 = vector.shape_cast %12 : vector<16x32xf32> to vector<2x8x32xf32>
    %16 = vector.shape_cast %13 : vector<16x32xf32> to vector<2x8x32xf32>
    %17 = vector.shape_cast %14 : vector<16x32xf32> to vector<2x8x32xf32>
    %cst_16 = arith.constant 0.000000e+00 : f32
    %18 = vector.broadcast %cst_16 : f32 to vector<16x32xf32>
    %19 = vector.extract_strided_slice %15 {offsets = [0, 0, 0], sizes = [2, 8, 8], strides = [1, 1, 1]} : vector<2x8x32xf32> to vector<2x8x8xf32>
    %20 = vector.extract_strided_slice %16 {offsets = [0, 0, 0], sizes = [2, 8, 8], strides = [1, 1, 1]} : vector<2x8x32xf32> to vector<2x8x8xf32>
    "tpu.trace_start"() <{level = 10 : i32, message = "nqd,nkd->nqk"}> : () -> ()
    %cst_17 = arith.constant dense<0.000000e+00> : vector<2x8x8xf32>
    %21 = tpu.matmul %19, %20, %cst_17 {dimension_numbers = #tpu.dot_dimension_numbers<[2], [2], [1], [1], [0, 0, 0, 1, 1, 1], [0], [0]>} : vector<2x8x8xf32>, vector<2x8x8xf32>, vector<2x8x8xf32> -> vector<2x8x8xf32>
    "tpu.trace_stop"() : () -> ()
    %cst_18 = arith.constant 0.353553385 : f32
    %22 = vector.broadcast %cst_18 : f32 to vector<2x8x8xf32>
    %23 = arith.mulf %21, %22 : vector<2x8x8xf32>
    %cst_19 = arith.constant dense<0xFF800000> : vector<2x8xf32>
    %24 = vector.multi_reduction <maximumf>, %23, %cst_19 [2] : vector<2x8x8xf32> to vector<2x8xf32>
    %25 = vector.shape_cast %24 : vector<2x8xf32> to vector<2x8x1xf32>
    %26 = vector.broadcast %25 : vector<2x8x1xf32> to vector<2x8x8xf32>
    %27 = arith.subf %23, %26 : vector<2x8x8xf32>
    %28 = math.exp %27 : vector<2x8x8xf32>
    %cst_20 = arith.constant dense<0.000000e+00> : vector<2x8xf32>
    %29 = vector.multi_reduction <add>, %28, %cst_20 [2] : vector<2x8x8xf32> to vector<2x8xf32>
    %30 = vector.shape_cast %29 : vector<2x8xf32> to vector<2x8x1xf32>
    %31 = vector.broadcast %30 : vector<2x8x1xf32> to vector<2x8x8xf32>
    %32 = arith.divf %28, %31 : vector<2x8x8xf32>
    %33 = vector.extract_strided_slice %17 {offsets = [0, 0, 0], sizes = [2, 8, 8], strides = [1, 1, 1]} : vector<2x8x32xf32> to vector<2x8x8xf32>
    "tpu.trace_start"() <{level = 10 : i32, message = "nqk,nkd->nqd"}> : () -> ()
    %cst_21 = arith.constant dense<0.000000e+00> : vector<2x8x8xf32>
    %34 = tpu.matmul %32, %33, %cst_21 {dimension_numbers = #tpu.dot_dimension_numbers<[2], [1], [1], [2], [0, 0, 0, 1, 1, 2], [0], [0]>} : vector<2x8x8xf32>, vector<2x8x8xf32>, vector<2x8x8xf32> -> vector<2x8x8xf32>
    "tpu.trace_stop"() : () -> ()
    %35 = vector.shape_cast %34 : vector<2x8x8xf32> to vector<16x8xf32>
    %36 = vector.extract_strided_slice %11 {offsets = [0, 0], sizes = [8, 32], strides = [1, 1]} : vector<32x32xf32> to vector<8x32xf32>
    %cst_22 = arith.constant dense<0.000000e+00> : vector<16x32xf32>
    %37 = tpu.matmul %35, %36, %cst_22 {dimension_numbers = #tpu.dot_dimension_numbers<[1], [0], [0], [1], [0, 0, 1, 1], [], []>} : vector<16x8xf32>, vector<8x32xf32>, vector<16x32xf32> -> vector<16x32xf32>
    %38 = arith.addf %18, %37 : vector<16x32xf32>
    %39 = vector.extract_strided_slice %15 {offsets = [0, 0, 8], sizes = [2, 8, 8], strides = [1, 1, 1]} : vector<2x8x32xf32> to vector<2x8x8xf32>
    %40 = vector.extract_strided_slice %16 {offsets = [0, 0, 8], sizes = [2, 8, 8], strides = [1, 1, 1]} : vector<2x8x32xf32> to vector<2x8x8xf32>
    "tpu.trace_start"() <{level = 10 : i32, message = "nqd,nkd->nqk"}> : () -> ()
    %cst_23 = arith.constant dense<0.000000e+00> : vector<2x8x8xf32>
    %41 = tpu.matmul %39, %40, %cst_23 {dimension_numbers = #tpu.dot_dimension_numbers<[2], [2], [1], [1], [0, 0, 0, 1, 1, 1], [0], [0]>} : vector<2x8x8xf32>, vector<2x8x8xf32>, vector<2x8x8xf32> -> vector<2x8x8xf32>
    "tpu.trace_stop"() : () -> ()
    %cst_24 = arith.constant 0.353553385 : f32
    %42 = vector.broadcast %cst_24 : f32 to vector<2x8x8xf32>
    %43 = arith.mulf %41, %42 : vector<2x8x8xf32>
    %cst_25 = arith.constant dense<0xFF800000> : vector<2x8xf32>
    %44 = vector.multi_reduction <maximumf>, %43, %cst_25 [2] : vector<2x8x8xf32> to vector<2x8xf32>
    %45 = vector.shape_cast %44 : vector<2x8xf32> to vector<2x8x1xf32>
    %46 = vector.broadcast %45 : vector<2x8x1xf32> to vector<2x8x8xf32>
    %47 = arith.subf %43, %46 : vector<2x8x8xf32>
    %48 = math.exp %47 : vector<2x8x8xf32>
    %cst_26 = arith.constant dense<0.000000e+00> : vector<2x8xf32>
    %49 = vector.multi_reduction <add>, %48, %cst_26 [2] : vector<2x8x8xf32> to vector<2x8xf32>
    %50 = vector.shape_cast %49 : vector<2x8xf32> to vector<2x8x1xf32>
    %51 = vector.broadcast %50 : vector<2x8x1xf32> to vector<2x8x8xf32>
    %52 = arith.divf %48, %51 : vector<2x8x8xf32>
    %53 = vector.extract_strided_slice %17 {offsets = [0, 0, 8], sizes = [2, 8, 8], strides = [1, 1, 1]} : vector<2x8x32xf32> to vector<2x8x8xf32>
    "tpu.trace_start"() <{level = 10 : i32, message = "nqk,nkd->nqd"}> : () -> ()
    %cst_27 = arith.constant dense<0.000000e+00> : vector<2x8x8xf32>
    %54 = tpu.matmul %52, %53, %cst_27 {dimension_numbers = #tpu.dot_dimension_numbers<[2], [1], [1], [2], [0, 0, 0, 1, 1, 2], [0], [0]>} : vector<2x8x8xf32>, vector<2x8x8xf32>, vector<2x8x8xf32> -> vector<2x8x8xf32>
    "tpu.trace_stop"() : () -> ()
    %55 = vector.shape_cast %54 : vector<2x8x8xf32> to vector<16x8xf32>
    %56 = vector.extract_strided_slice %11 {offsets = [8, 0], sizes = [8, 32], strides = [1, 1]} : vector<32x32xf32> to vector<8x32xf32>
    %cst_28 = arith.constant dense<0.000000e+00> : vector<16x32xf32>
    %57 = tpu.matmul %55, %56, %cst_28 {dimension_numbers = #tpu.dot_dimension_numbers<[1], [0], [0], [1], [0, 0, 1, 1], [], []>} : vector<16x8xf32>, vector<8x32xf32>, vector<16x32xf32> -> vector<16x32xf32>
    %58 = arith.addf %38, %57 : vector<16x32xf32>
    %59 = vector.extract_strided_slice %15 {offsets = [0, 0, 16], sizes = [2, 8, 8], strides = [1, 1, 1]} : vector<2x8x32xf32> to vector<2x8x8xf32>
    %60 = vector.extract_strided_slice %16 {offsets = [0, 0, 16], sizes = [2, 8, 8], strides = [1, 1, 1]} : vector<2x8x32xf32> to vector<2x8x8xf32>
    "tpu.trace_start"() <{level = 10 : i32, message = "nqd,nkd->nqk"}> : () -> ()
    %cst_29 = arith.constant dense<0.000000e+00> : vector<2x8x8xf32>
    %61 = tpu.matmul %59, %60, %cst_29 {dimension_numbers = #tpu.dot_dimension_numbers<[2], [2], [1], [1], [0, 0, 0, 1, 1, 1], [0], [0]>} : vector<2x8x8xf32>, vector<2x8x8xf32>, vector<2x8x8xf32> -> vector<2x8x8xf32>
    "tpu.trace_stop"() : () -> ()
    %cst_30 = arith.constant 0.353553385 : f32
    %62 = vector.broadcast %cst_30 : f32 to vector<2x8x8xf32>
    %63 = arith.mulf %61, %62 : vector<2x8x8xf32>
    %cst_31 = arith.constant dense<0xFF800000> : vector<2x8xf32>
    %64 = vector.multi_reduction <maximumf>, %63, %cst_31 [2] : vector<2x8x8xf32> to vector<2x8xf32>
    %65 = vector.shape_cast %64 : vector<2x8xf32> to vector<2x8x1xf32>
    %66 = vector.broadcast %65 : vector<2x8x1xf32> to vector<2x8x8xf32>
    %67 = arith.subf %63, %66 : vector<2x8x8xf32>
    %68 = math.exp %67 : vector<2x8x8xf32>
    %cst_32 = arith.constant dense<0.000000e+00> : vector<2x8xf32>
    %69 = vector.multi_reduction <add>, %68, %cst_32 [2] : vector<2x8x8xf32> to vector<2x8xf32>
    %70 = vector.shape_cast %69 : vector<2x8xf32> to vector<2x8x1xf32>
    %71 = vector.broadcast %70 : vector<2x8x1xf32> to vector<2x8x8xf32>
    %72 = arith.divf %68, %71 : vector<2x8x8xf32>
    %73 = vector.extract_strided_slice %17 {offsets = [0, 0, 16], sizes = [2, 8, 8], strides = [1, 1, 1]} : vector<2x8x32xf32> to vector<2x8x8xf32>
    "tpu.trace_start"() <{level = 10 : i32, message = "nqk,nkd->nqd"}> : () -> ()
    %cst_33 = arith.constant dense<0.000000e+00> : vector<2x8x8xf32>
    %74 = tpu.matmul %72, %73, %cst_33 {dimension_numbers = #tpu.dot_dimension_numbers<[2], [1], [1], [2], [0, 0, 0, 1, 1, 2], [0], [0]>} : vector<2x8x8xf32>, vector<2x8x8xf32>, vector<2x8x8xf32> -> vector<2x8x8xf32>
    "tpu.trace_stop"() : () -> ()
    %75 = vector.shape_cast %74 : vector<2x8x8xf32> to vector<16x8xf32>
    %76 = vector.extract_strided_slice %11 {offsets = [16, 0], sizes = [8, 32], strides = [1, 1]} : vector<32x32xf32> to vector<8x32xf32>
    %cst_34 = arith.constant dense<0.000000e+00> : vector<16x32xf32>
    %77 = tpu.matmul %75, %76, %cst_34 {dimension_numbers = #tpu.dot_dimension_numbers<[1], [0], [0], [1], [0, 0, 1, 1], [], []>} : vector<16x8xf32>, vector<8x32xf32>, vector<16x32xf32> -> vector<16x32xf32>
    %78 = arith.addf %58, %77 : vector<16x32xf32>
    %79 = vector.extract_strided_slice %15 {offsets = [0, 0, 24], sizes = [2, 8, 8], strides = [1, 1, 1]} : vector<2x8x32xf32> to vector<2x8x8xf32>
    %80 = vector.extract_strided_slice %16 {offsets = [0, 0, 24], sizes = [2, 8, 8], strides = [1, 1, 1]} : vector<2x8x32xf32> to vector<2x8x8xf32>
    "tpu.trace_start"() <{level = 10 : i32, message = "nqd,nkd->nqk"}> : () -> ()
    %cst_35 = arith.constant dense<0.000000e+00> : vector<2x8x8xf32>
    %81 = tpu.matmul %79, %80, %cst_35 {dimension_numbers = #tpu.dot_dimension_numbers<[2], [2], [1], [1], [0, 0, 0, 1, 1, 1], [0], [0]>} : vector<2x8x8xf32>, vector<2x8x8xf32>, vector<2x8x8xf32> -> vector<2x8x8xf32>
    "tpu.trace_stop"() : () -> ()
    %cst_36 = arith.constant 0.353553385 : f32
    %82 = vector.broadcast %cst_36 : f32 to vector<2x8x8xf32>
    %83 = arith.mulf %81, %82 : vector<2x8x8xf32>
    %cst_37 = arith.constant dense<0xFF800000> : vector<2x8xf32>
    %84 = vector.multi_reduction <maximumf>, %83, %cst_37 [2] : vector<2x8x8xf32> to vector<2x8xf32>
    %85 = vector.shape_cast %84 : vector<2x8xf32> to vector<2x8x1xf32>
    %86 = vector.broadcast %85 : vector<2x8x1xf32> to vector<2x8x8xf32>
    %87 = arith.subf %83, %86 : vector<2x8x8xf32>
    %88 = math.exp %87 : vector<2x8x8xf32>
    %cst_38 = arith.constant dense<0.000000e+00> : vector<2x8xf32>
    %89 = vector.multi_reduction <add>, %88, %cst_38 [2] : vector<2x8x8xf32> to vector<2x8xf32>
    %90 = vector.shape_cast %89 : vector<2x8xf32> to vector<2x8x1xf32>
    %91 = vector.broadcast %90 : vector<2x8x1xf32> to vector<2x8x8xf32>
    %92 = arith.divf %88, %91 : vector<2x8x8xf32>
    %93 = vector.extract_strided_slice %17 {offsets = [0, 0, 24], sizes = [2, 8, 8], strides = [1, 1, 1]} : vector<2x8x32xf32> to vector<2x8x8xf32>
    "tpu.trace_start"() <{level = 10 : i32, message = "nqk,nkd->nqd"}> : () -> ()
    %cst_39 = arith.constant dense<0.000000e+00> : vector<2x8x8xf32>
    %94 = tpu.matmul %92, %93, %cst_39 {dimension_numbers = #tpu.dot_dimension_numbers<[2], [1], [1], [2], [0, 0, 0, 1, 1, 2], [0], [0]>} : vector<2x8x8xf32>, vector<2x8x8xf32>, vector<2x8x8xf32> -> vector<2x8x8xf32>
    "tpu.trace_stop"() : () -> ()
    %95 = vector.shape_cast %94 : vector<2x8x8xf32> to vector<16x8xf32>
    %96 = vector.extract_strided_slice %11 {offsets = [24, 0], sizes = [8, 32], strides = [1, 1]} : vector<32x32xf32> to vector<8x32xf32>
    %cst_40 = arith.constant dense<0.000000e+00> : vector<16x32xf32>
    %97 = tpu.matmul %95, %96, %cst_40 {dimension_numbers = #tpu.dot_dimension_numbers<[1], [0], [0], [1], [0, 0, 1, 1], [], []>} : vector<16x8xf32>, vector<8x32xf32>, vector<16x32xf32> -> vector<16x32xf32>
    %98 = arith.addf %78, %97 : vector<16x32xf32>
    %99 = arith.addf %3, %98 : vector<16x32xf32>
    %cst_41 = arith.constant dense<0.000000e+00> : vector<16xf32>
    %100 = vector.multi_reduction <add>, %99, %cst_41 [1] : vector<16x32xf32> to vector<16xf32>
    %101 = vector.shape_cast %100 : vector<16xf32> to vector<16x1xf32>
    %cst_42 = arith.constant 3.200000e+01 : f32
    %102 = vector.broadcast %cst_42 : f32 to vector<16x1xf32>
    %103 = arith.divf %101, %102 : vector<16x1xf32>
    %104 = vector.broadcast %103 : vector<16x1xf32> to vector<16x32xf32>
    %105 = arith.subf %99, %104 : vector<16x32xf32>
    %106 = arith.mulf %105, %105 : vector<16x32xf32>
    %cst_43 = arith.constant dense<0.000000e+00> : vector<16xf32>
    %107 = vector.multi_reduction <add>, %106, %cst_43 [1] : vector<16x32xf32> to vector<16xf32>
    %108 = vector.shape_cast %107 : vector<16xf32> to vector<16x1xf32>
    %cst_44 = arith.constant 3.200000e+01 : f32
    %109 = vector.broadcast %cst_44 : f32 to vector<16x1xf32>
    %110 = arith.divf %108, %109 : vector<16x1xf32>
    %111 = vector.broadcast %103 : vector<16x1xf32> to vector<16x32xf32>
    %112 = arith.subf %99, %111 : vector<16x32xf32>
    %cst_45 = arith.constant 9.99999974E-6 : f32
    %113 = vector.broadcast %cst_45 : f32 to vector<16x1xf32>
    %114 = arith.addf %110, %113 : vector<16x1xf32>
    %115 = math.rsqrt %114 : vector<16x1xf32>
    %116 = vector.broadcast %115 : vector<16x1xf32> to vector<16x32xf32>
    %117 = arith.mulf %112, %116 : vector<16x32xf32>
    %c0_46 = arith.constant 0 : index
    %c0_47 = arith.constant 0 : index
    %c0_48 = arith.constant 0 : index
    %118 = vector.load %arg11[%c0_46, %c0_47, %c0_48] : memref<1x1x32xf32, #tpu.memory_space<vmem>>, vector<1x1x32xf32>
    %119 = vector.shape_cast %118 : vector<1x1x32xf32> to vector<1x32xf32>
    %120 = vector.broadcast %119 : vector<1x32xf32> to vector<16x32xf32>
    %121 = arith.mulf %117, %120 : vector<16x32xf32>
    %c0_49 = arith.constant 0 : index
    %c0_50 = arith.constant 0 : index
    %c0_51 = arith.constant 0 : index
    %122 = vector.load %arg12[%c0_49, %c0_50, %c0_51] : memref<1x1x32xf32, #tpu.memory_space<vmem>>, vector<1x1x32xf32>
    %123 = vector.shape_cast %122 : vector<1x1x32xf32> to vector<1x32xf32>
    %124 = vector.broadcast %123 : vector<1x32xf32> to vector<16x32xf32>
    %125 = arith.addf %121, %124 : vector<16x32xf32>
    %c0_52 = arith.constant 0 : index
    %c0_53 = arith.constant 0 : index
    %c0_54 = arith.constant 0 : index
    %126 = vector.load %arg7[%c0_52, %c0_53, %c0_54] : memref<1x32x64xf32, #tpu.memory_space<vmem>>, vector<1x32x64xf32>
    %127 = vector.shape_cast %126 : vector<1x32x64xf32> to vector<32x64xf32>
    %cst_55 = arith.constant dense<0.000000e+00> : vector<16x64xf32>
    %128 = tpu.matmul %125, %127, %cst_55 {dimension_numbers = #tpu.dot_dimension_numbers<[1], [0], [0], [1], [0, 0, 1, 1], [], []>} : vector<16x32xf32>, vector<32x64xf32>, vector<16x64xf32> -> vector<16x64xf32>
    %c0_56 = arith.constant 0 : index
    %c0_57 = arith.constant 0 : index
    %c0_58 = arith.constant 0 : index
    %129 = vector.load %arg8[%c0_56, %c0_57, %c0_58] : memref<1x1x64xf32, #tpu.memory_space<vmem>>, vector<1x1x64xf32>
    %130 = vector.shape_cast %129 : vector<1x1x64xf32> to vector<1x64xf32>
    %131 = vector.broadcast %130 : vector<1x64xf32> to vector<16x64xf32>
    %132 = arith.addf %128, %131 : vector<16x64xf32>
    %cst_59 = arith.constant 5.000000e-01 : f32
    %133 = vector.broadcast %cst_59 : f32 to vector<16x64xf32>
    %134 = arith.mulf %133, %132 : vector<16x64xf32>
    %cst_60 = arith.constant 0.707106769 : f32
    %135 = vector.broadcast %cst_60 : f32 to vector<16x64xf32>
    %136 = arith.mulf %132, %135 : vector<16x64xf32>
    %137 = math.erf %136 : vector<16x64xf32>
    %cst_61 = arith.constant 1.000000e+00 : f32
    %138 = vector.broadcast %cst_61 : f32 to vector<16x64xf32>
    %139 = arith.addf %138, %137 : vector<16x64xf32>
    %140 = arith.mulf %134, %139 : vector<16x64xf32>
    %c0_62 = arith.constant 0 : index
    %c0_63 = arith.constant 0 : index
    %c0_64 = arith.constant 0 : index
    %141 = vector.load %arg9[%c0_62, %c0_63, %c0_64] : memref<1x64x32xf32, #tpu.memory_space<vmem>>, vector<1x64x32xf32>
    %142 = vector.shape_cast %141 : vector<1x64x32xf32> to vector<64x32xf32>
    %cst_65 = arith.constant dense<0.000000e+00> : vector<16x32xf32>
    %143 = tpu.matmul %140, %142, %cst_65 {dimension_numbers = #tpu.dot_dimension_numbers<[1], [0], [0], [1], [0, 0, 1, 1], [], []>} : vector<16x64xf32>, vector<64x32xf32>, vector<16x32xf32> -> vector<16x32xf32>
    %c0_66 = arith.constant 0 : index
    %c0_67 = arith.constant 0 : index
    %c0_68 = arith.constant 0 : index
    %144 = vector.load %arg10[%c0_66, %c0_67, %c0_68] : memref<1x1x32xf32, #tpu.memory_space<vmem>>, vector<1x1x32xf32>
    %145 = vector.shape_cast %144 : vector<1x1x32xf32> to vector<1x32xf32>
    %146 = vector.broadcast %145 : vector<1x32xf32> to vector<16x32xf32>
    %147 = arith.addf %143, %146 : vector<16x32xf32>
    %148 = arith.addf %99, %147 : vector<16x32xf32>
    %cst_69 = arith.constant dense<0.000000e+00> : vector<16xf32>
    %149 = vector.multi_reduction <add>, %148, %cst_69 [1] : vector<16x32xf32> to vector<16xf32>
    %150 = vector.shape_cast %149 : vector<16xf32> to vector<16x1xf32>
    %cst_70 = arith.constant 3.200000e+01 : f32
    %151 = vector.broadcast %cst_70 : f32 to vector<16x1xf32>
    %152 = arith.divf %150, %151 : vector<16x1xf32>
    %153 = vector.broadcast %152 : vector<16x1xf32> to vector<16x32xf32>
    %154 = arith.subf %148, %153 : vector<16x32xf32>
    %155 = arith.mulf %154, %154 : vector<16x32xf32>
    %cst_71 = arith.constant dense<0.000000e+00> : vector<16xf32>
    %156 = vector.multi_reduction <add>, %155, %cst_71 [1] : vector<16x32xf32> to vector<16xf32>
    %157 = vector.shape_cast %156 : vector<16xf32> to vector<16x1xf32>
    %cst_72 = arith.constant 3.200000e+01 : f32
    %158 = vector.broadcast %cst_72 : f32 to vector<16x1xf32>
    %159 = arith.divf %157, %158 : vector<16x1xf32>
    %160 = vector.broadcast %152 : vector<16x1xf32> to vector<16x32xf32>
    %161 = arith.subf %148, %160 : vector<16x32xf32>
    %cst_73 = arith.constant 9.99999974E-6 : f32
    %162 = vector.broadcast %cst_73 : f32 to vector<16x1xf32>
    %163 = arith.addf %159, %162 : vector<16x1xf32>
    %164 = math.rsqrt %163 : vector<16x1xf32>
    %165 = vector.broadcast %164 : vector<16x1xf32> to vector<16x32xf32>
    %166 = arith.mulf %161, %165 : vector<16x32xf32>
    %c0_74 = arith.constant 0 : index
    %c0_75 = arith.constant 0 : index
    %c0_76 = arith.constant 0 : index
    %167 = vector.load %arg13[%c0_74, %c0_75, %c0_76] : memref<1x1x32xf32, #tpu.memory_space<vmem>>, vector<1x1x32xf32>
    %168 = vector.shape_cast %167 : vector<1x1x32xf32> to vector<1x32xf32>
    %169 = vector.broadcast %168 : vector<1x32xf32> to vector<16x32xf32>
    %170 = arith.mulf %166, %169 : vector<16x32xf32>
    %c0_77 = arith.constant 0 : index
    %c0_78 = arith.constant 0 : index
    %c0_79 = arith.constant 0 : index
    %171 = vector.load %arg14[%c0_77, %c0_78, %c0_79] : memref<1x1x32xf32, #tpu.memory_space<vmem>>, vector<1x1x32xf32>
    %172 = vector.shape_cast %171 : vector<1x1x32xf32> to vector<1x32xf32>
    %173 = vector.broadcast %172 : vector<1x32xf32> to vector<16x32xf32>
    %174 = arith.addf %170, %173 : vector<16x32xf32>
    %c0_80 = arith.constant 0 : index
    %c0_81 = arith.constant 0 : index
    %175 = vector.load %arg16[%c0_80, %c0_81] : memref<16x32xf32, #tpu.memory_space<vmem>>, vector<16x32xf32>
    tpu.vector_store %arg16[%c0_80, %c0_81], %174 {strides = array<i32>} : memref<16x32xf32, #tpu.memory_space<vmem>>, vector<16x32xf32>,
    %c1_i32 = arith.constant 1 : i32
    %176 = arith.cmpi eq, %arg1, %c1_i32 : i32
    %177 = arith.extui %176 : i1 to i32
    %c0_i32_82 = arith.constant 0 : i32
    %178 = arith.cmpi ne, %177, %c0_i32_82 : i32
    scf.if %178 {
      %179 = vector.shape_cast %174 : vector<16x32xf32> to vector<2x8x32xf32>
      %180 = vector.extract_strided_slice %179 {offsets = [0, 0, 0], sizes = [2, 1, 32], strides = [1, 1, 1]} : vector<2x8x32xf32> to vector<2x1x32xf32>
      %181 = vector.shape_cast %180 : vector<2x1x32xf32> to vector<2x32xf32>
      %c0_83 = arith.constant 0 : index
      %c0_84 = arith.constant 0 : index
      %182 = vector.load %arg15[%c0_83, %c0_84] : memref<2x32xf32, #tpu.memory_space<vmem>>, vector<2x32xf32>
      tpu.vector_store %arg15[%c0_83, %c0_84], %181 {strides = array<i32>} : memref<2x32xf32, #tpu.memory_space<vmem>>, vector<2x32xf32>,
    } else {
    }
    return
  }
  func.func @transform_0(%arg0: i32, %arg1: i32) -> (i32, i32, i32) {
    %c0_i32 = arith.constant 0 : i32
    %c0_i32_0 = arith.constant 0 : i32
    %c0_i32_1 = arith.constant 0 : i32
    return %arg0, %c0_i32, %c0_i32_0 : i32, i32, i32
  }
  func.func @transform_1(%arg0: i32, %arg1: i32) -> (i32, i32, i32) {
    %c0_i32 = arith.constant 0 : i32
    %c0_i32_0 = arith.constant 0 : i32
    %c0_i32_1 = arith.constant 0 : i32
    return %arg1, %c0_i32, %c0_i32_0 : i32, i32, i32
  }
  func.func @transform_2(%arg0: i32, %arg1: i32) -> (i32, i32, i32) {
    %c0_i32 = arith.constant 0 : i32
    %c0_i32_0 = arith.constant 0 : i32
    %c0_i32_1 = arith.constant 0 : i32
    return %arg1, %c0_i32, %c0_i32_0 : i32, i32, i32
  }
  func.func @transform_3(%arg0: i32, %arg1: i32) -> (i32, i32, i32) {
    %c0_i32 = arith.constant 0 : i32
    %c0_i32_0 = arith.constant 0 : i32
    %c0_i32_1 = arith.constant 0 : i32
    return %arg1, %c0_i32, %c0_i32_0 : i32, i32, i32
  }
  func.func @transform_4(%arg0: i32, %arg1: i32) -> (i32, i32, i32) {
    %c0_i32 = arith.constant 0 : i32
    %c0_i32_0 = arith.constant 0 : i32
    %c0_i32_1 = arith.constant 0 : i32
    return %arg1, %c0_i32, %c0_i32_0 : i32, i32, i32
  }
  func.func @transform_5(%arg0: i32, %arg1: i32) -> (i32, i32, i32) {
    %c0_i32 = arith.constant 0 : i32
    %c0_i32_0 = arith.constant 0 : i32
    %c0_i32_1 = arith.constant 0 : i32
    return %arg1, %c0_i32, %c0_i32_0 : i32, i32, i32
  }
  func.func @transform_6(%arg0: i32, %arg1: i32) -> (i32, i32, i32) {
    %c0_i32 = arith.constant 0 : i32
    %c0_i32_0 = arith.constant 0 : i32
    %c0_i32_1 = arith.constant 0 : i32
    return %arg1, %c0_i32, %c0_i32_0 : i32, i32, i32
  }
  func.func @transform_7(%arg0: i32, %arg1: i32) -> (i32, i32, i32) {
    %c0_i32 = arith.constant 0 : i32
    %c0_i32_0 = arith.constant 0 : i32
    %c0_i32_1 = arith.constant 0 : i32
    return %arg1, %c0_i32, %c0_i32_0 : i32, i32, i32
  }
  func.func @transform_8(%arg0: i32, %arg1: i32) -> (i32, i32, i32) {
    %c0_i32 = arith.constant 0 : i32
    %c0_i32_0 = arith.constant 0 : i32
    %c0_i32_1 = arith.constant 0 : i32
    return %arg1, %c0_i32, %c0_i32_0 : i32, i32, i32
  }
  func.func @transform_9(%arg0: i32, %arg1: i32) -> (i32, i32, i32) {
    %c0_i32 = arith.constant 0 : i32
    %c0_i32_0 = arith.constant 0 : i32
    %c0_i32_1 = arith.constant 0 : i32
    return %arg1, %c0_i32, %c0_i32_0 : i32, i32, i32
  }
  func.func @transform_10(%arg0: i32, %arg1: i32) -> (i32, i32, i32) {
    %c0_i32 = arith.constant 0 : i32
    %c0_i32_0 = arith.constant 0 : i32
    %c0_i32_1 = arith.constant 0 : i32
    return %arg1, %c0_i32, %c0_i32_0 : i32, i32, i32
  }
  func.func @transform_11(%arg0: i32, %arg1: i32) -> (i32, i32, i32) {
    %c0_i32 = arith.constant 0 : i32
    %c0_i32_0 = arith.constant 0 : i32
    %c0_i32_1 = arith.constant 0 : i32
    return %arg1, %c0_i32, %c0_i32_0 : i32, i32, i32
  }
  func.func @transform_12(%arg0: i32, %arg1: i32) -> (i32, i32, i32) {
    %c0_i32 = arith.constant 0 : i32
    %c0_i32_0 = arith.constant 0 : i32
    %c0_i32_1 = arith.constant 0 : i32
    return %arg1, %c0_i32, %c0_i32_0 : i32, i32, i32
  }
  func.func @transform_13(%arg0: i32, %arg1: i32) -> (i32, i32) {
    %c0_i32 = arith.constant 0 : i32
    %c0_i32_0 = arith.constant 0 : i32
    return %arg0, %c0_i32 : i32, i32
  }
}

</mosaic_0001>

<llo_original>
// kernel: tpu_custom_call.1
$region0: #{tpu_custom_call.1}
  #allocation0 [shape = 'u32[]', space=smem, size = 0x4, offset = 0x4, fixed_abs, tag = 'smem constant byte address 0x4 - core index']
  #allocation1 [shape = 'u32[144,128]{1,0:T(1,128)}', space=vmem, size = 0x12000, scoped, tag = 'internal scratch']
  #allocation2 [shape = 'f32[16,32]{1,0:T(8,128)}', space=vmem, size = 0x2000, scoped, tag = 'scratch operand']
  %s0 = inlined_call_operand.hbm [shape: f32[2,8,32], index: 0, kind: input, shape index: {}]
  %s1 = inlined_call_operand.vmem [shape: f32[2,32,32], index: 1, kind: input, shape index: {}]
  %s2 = inlined_call_operand.vmem [shape: f32[2,32,32], index: 2, kind: input, shape index: {}]
  %s3 = inlined_call_operand.vmem [shape: f32[2,32,32], index: 3, kind: input, shape index: {}]
  %s4 = inlined_call_operand.hbm [shape: f32[2,32,32], index: 4, kind: input, shape index: {}]
  %s5 = inlined_call_operand.hbm [shape: f32[2,32,64], index: 5, kind: input, shape index: {}]
  %s6 = inlined_call_operand.vmem [shape: f32[2,1,64], index: 6, kind: input, shape index: {}]
  %s7 = inlined_call_operand.vmem [shape: f32[2,64,32], index: 7, kind: input, shape index: {}]
  %s8 = inlined_call_operand.vmem [shape: f32[2,1,32], index: 8, kind: input, shape index: {}]
  %s9 = inlined_call_operand.vmem [shape: f32[2,1,32], index: 9, kind: input, shape index: {}]
  %s10 = inlined_call_operand.vmem [shape: f32[2,1,32], index: 10, kind: input, shape index: {}]
  %s11 = inlined_call_operand.vmem [shape: f32[2,1,32], index: 11, kind: input, shape index: {}]
  %s12 = inlined_call_operand.vmem [shape: f32[2,1,32], index: 12, kind: input, shape index: {}]
  %s13 = inlined_call_operand.hbm [shape: f32[2,32], index: 13, kind: output, shape index: {}]
  %s14 = sld [smem:[#allocation0]]
  $region105: #{tpu_custom_call.1} parent=0
    _
  %s16 = ssub.s32 1, %s14
  %s17 = scalar_select 0, %s16, %s14
  $region1: #{tpu_custom_call.1} parent=0
    #allocation3 [shape = 'u8[8192]{0}', space=vmem, size = 0x2000, scoped, tag = 'input window, operand 0, single buffered']
    #allocation4 [shape = 's32[2]{0}', space=sflag, size = 0x8, scoped, tag = 'scoped memory for tpu_custom_call.1']
    #allocation5 [shape = 's32[2]{0}', space=sflag, size = 0x8, scoped, tag = 'scoped memory for tpu_custom_call.1']
    #allocation6 [shape = 'u8[32768]{0}', space=vmem, size = 0x8000, scoped, tag = 'input window, operand 4']
    #allocation7 [shape = 's32[2]{0}', space=sflag, size = 0x8, scoped, tag = 'scoped memory for tpu_custom_call.1']
    #allocation8 [shape = 'u8[32768]{0}', space=vmem, size = 0x8000, scoped, tag = 'input window, operand 5']
    #allocation9 [shape = 'u8[1024]{0}', space=vmem, size = 0x400, scoped, tag = 'output window, operand 0, single buffered']
    %18 = vsyncpa [#allocation4], 0
    %19 = vsyncpa [#allocation7], 0
    %s20 = scalar_lea.sflag [#allocation7], 1
    %21 = vsyncpa %s20, 0
    %22 = vsyncpa [#allocation5], 0
    loop: start=0, step=1, limit=4
    $region2: #{tpu_custom_call.1} parent=1 // loop_pre_header
      _
    $region3: #{tpu_custom_call.1} parent=1 // loop_header
      %s24 = sphi 0, %s28
      %p25 = scmp.ge.s32.totalorder %s24, 4
      %s31 = sphi 0, %s43
      %s32 = sphi 0, %s39
      %s33 = sphi 0, %s31
      %s34 = sphi 0, %s32
      %s35 = sphi 0, %s33
      %s36 = sphi 0, %s34
      %s46 = sphi 0, %s48
      %s49 = sphi 0, %s46
      %s50 = sphi 0, %s49
      %s66 = sphi 0, %s50
      %s72 = sphi 0, %s74
      %s75 = sphi 0, %s72
      %s76 = sphi 0, %s75
      %s92 = sphi 0, %s76
      %s98 = sphi 0, %s100
      %s101 = sphi 0, %s98
      %s102 = sphi 0, %s101
      %s118 = sphi 0, %s102
      %s124 = sphi 0, %s126
      %s127 = sphi 0, %s124
      %s128 = sphi 0, %s127
      %s144 = sphi 0, %s128
      %s150 = sphi 0, %s152
      %s153 = sphi 0, %s150
      %s154 = sphi 0, %s153
      %s170 = sphi 0, %s154
      %s176 = sphi 0, %s178
      %s179 = sphi 0, %s176
      %s180 = sphi 0, %s179
      %s196 = sphi 0, %s180
      %s202 = sphi 0, %s204
      %s205 = sphi 0, %s202
      %s206 = sphi 0, %s205
      %s222 = sphi 0, %s206
      %s228 = sphi 0, %s230
      %s231 = sphi 0, %s228
      %s232 = sphi 0, %s231
      %s248 = sphi 0, %s232
      %s254 = sphi 0, %s256
      %s257 = sphi 0, %s254
      %s258 = sphi 0, %s257
      %s274 = sphi 0, %s258
      %s280 = sphi 0, %s282
      %s283 = sphi 0, %s280
      %s284 = sphi 0, %s283
      %s300 = sphi 0, %s284
      %s306 = sphi 0, %s308
      %s309 = sphi 0, %s306
      %s310 = sphi 0, %s309
      %s326 = sphi 0, %s310
      %s332 = sphi 0, %s334
      %s335 = sphi 0, %s332
      %s336 = sphi 0, %s335
      %s352 = sphi 0, %s336
      %s358 = sphi 0, %s360
      %s361 = sphi 0, %s358
      %s362 = sphi 0, %s361
      %s378 = sphi 0, %s362
      %s384 = sphi 0, %s386
      %s387 = sphi 0, %s384
      %s388 = sphi 0, %s387
      %s404 = sphi 0, %s388
    $region4: #{tpu_custom_call.1} parent=1 // loop_header_branch
      %27 = sbr.rel (%p25) target = $region8
    $region5: #{tpu_custom_call.1} parent=1 // loop_body
      %s29 = ssub.s32 %s24, 1
      %s30 = ssub.s32 %s24, 2
      %s37 = sadd.s32 1, %s32
      %p38 = scmp.ge.s32.totalorder %s37, 2
      %s39 = scalar_select %p38, 0, %s37
      %s40 = sadd.s32 1, %s31
      %s41 = scalar_select %p38, %s40, %s31
      %p42 = scmp.ge.s32.totalorder %s41, 1
      %s43 = scalar_select %p42, 0, %s41
      %s44 = ssub.s32 %s31, %s43
      %p45 = scmp.eq.s32.totalorder %s44, 0
      %s47 = sadd.s32 %s46, 1
      %s48 = scalar_select %p45, %s46, %s47
      %p51 = pneg %p45
      %p52 = scmp.eq.s32.totalorder %s24, 1
      %p53 = por %p51, %p52
      %p54 = scmp.ne.s32.totalorder %s46, %s49
      %p55 = scmp.eq.s32.totalorder %s24, 0
      %p56 = por %p54, %p55
      %p57 = scmp.ne.s32.totalorder %s46, %s49
      %p58 = scmp.eq.s32.totalorder %s29, 1
      %p59 = por %p57, %p58
      %p60 = scmp.ne.s32.totalorder %s49, %s50
      %p61 = scmp.eq.s32.totalorder %s29, 0
      %p62 = por %p60, %p61
      %p63 = scmp.ne.s32.totalorder %s49, %s50
      %p64 = scmp.eq.s32.totalorder %s30, 1
      %p65 = por %p63, %p64
      %p67 = scmp.ne.s32.totalorder %s50, %s66
      %p68 = scmp.eq.s32.totalorder %s30, 0
      %p69 = por %p67, %p68
      %s70 = ssub.s32 %s32, %s39
      %p71 = scmp.eq.s32.totalorder %s70, 0
      %s73 = sadd.s32 %s72, 1
      %s74 = scalar_select %p71, %s72, %s73
      %p77 = pneg %p71
      %p78 = scmp.eq.s32.totalorder %s24, 1
      %p79 = por %p77, %p78
      %p80 = scmp.ne.s32.totalorder %s72, %s75
      %p81 = scmp.eq.s32.totalorder %s24, 0
      %p82 = por %p80, %p81
      %p83 = scmp.ne.s32.totalorder %s72, %s75
      %p84 = scmp.eq.s32.totalorder %s29, 1
      %p85 = por %p83, %p84
      %p86 = scmp.ne.s32.totalorder %s75, %s76
      %p87 = scmp.eq.s32.totalorder %s29, 0
      %p88 = por %p86, %p87
      %p89 = scmp.ne.s32.totalorder %s75, %s76
      %p90 = scmp.eq.s32.totalorder %s30, 1
      %p91 = por %p89, %p90
      %p93 = scmp.ne.s32.totalorder %s76, %s92
      %p94 = scmp.eq.s32.totalorder %s30, 0
      %p95 = por %p93, %p94
      %s96 = ssub.s32 %s32, %s39
      %p97 = scmp.eq.s32.totalorder %s96, 0
      %s99 = sadd.s32 %s98, 1
      %s100 = scalar_select %p97, %s98, %s99
      %p103 = pneg %p97
      %p104 = scmp.eq.s32.totalorder %s24, 1
      %p105 = por %p103, %p104
      %p106 = scmp.ne.s32.totalorder %s98, %s101
      %p107 = scmp.eq.s32.totalorder %s24, 0
      %p108 = por %p106, %p107
      %p109 = scmp.ne.s32.totalorder %s98, %s101
      %p110 = scmp.eq.s32.totalorder %s29, 1
      %p111 = por %p109, %p110
      %p112 = scmp.ne.s32.totalorder %s101, %s102
      %p113 = scmp.eq.s32.totalorder %s29, 0
      %p114 = por %p112, %p113
      %p115 = scmp.ne.s32.totalorder %s101, %s102
      %p116 = scmp.eq.s32.totalorder %s30, 1
      %p117 = por %p115, %p116
      %p119 = scmp.ne.s32.totalorder %s102, %s118
      %p120 = scmp.eq.s32.totalorder %s30, 0
      %p121 = por %p119, %p120
      %s122 = ssub.s32 %s32, %s39
      %p123 = scmp.eq.s32.totalorder %s122, 0
      %s125 = sadd.s32 %s124, 1
      %s126 = scalar_select %p123, %s124, %s125
      %p129 = pneg %p123
      %p130 = scmp.eq.s32.totalorder %s24, 1
      %p131 = por %p129, %p130
      %p132 = scmp.ne.s32.totalorder %s124, %s127
      %p133 = scmp.eq.s32.totalorder %s24, 0
      %p134 = por %p132, %p133
      %p135 = scmp.ne.s32.totalorder %s124, %s127
      %p136 = scmp.eq.s32.totalorder %s29, 1
      %p137 = por %p135, %p136
      %p138 = scmp.ne.s32.totalorder %s127, %s128
      %p139 = scmp.eq.s32.totalorder %s29, 0
      %p140 = por %p138, %p139
      %p141 = scmp.ne.s32.totalorder %s127, %s128
      %p142 = scmp.eq.s32.totalorder %s30, 1
      %p143 = por %p141, %p142
      %p145 = scmp.ne.s32.totalorder %s128, %s144
      %p146 = scmp.eq.s32.totalorder %s30, 0
      %p147 = por %p145, %p146
      %s148 = ssub.s32 %s32, %s39
      %p149 = scmp.eq.s32.totalorder %s148, 0
      %s151 = sadd.s32 %s150, 1
      %s152 = scalar_select %p149, %s150, %s151
      %p155 = pneg %p149
      %p156 = scmp.eq.s32.totalorder %s24, 1
      %p157 = por %p155, %p156
      %p158 = scmp.ne.s32.totalorder %s150, %s153
      %p159 = scmp.eq.s32.totalorder %s24, 0
      %p160 = por %p158, %p159
      %p161 = scmp.ne.s32.totalorder %s150, %s153
      %p162 = scmp.eq.s32.totalorder %s29, 1
      %p163 = por %p161, %p162
      %p164 = scmp.ne.s32.totalorder %s153, %s154
      %p165 = scmp.eq.s32.totalorder %s29, 0
      %p166 = por %p164, %p165
      %p167 = scmp.ne.s32.totalorder %s153, %s154
      %p168 = scmp.eq.s32.totalorder %s30, 1
      %p169 = por %p167, %p168
      %p171 = scmp.ne.s32.totalorder %s154, %s170
      %p172 = scmp.eq.s32.totalorder %s30, 0
      %p173 = por %p171, %p172
      %s174 = ssub.s32 %s32, %s39
      %p175 = scmp.eq.s32.totalorder %s174, 0
      %s177 = sadd.s32 %s176, 1
      %s178 = scalar_select %p175, %s176, %s177
      %p181 = pneg %p175
      %p182 = scmp.eq.s32.totalorder %s24, 1
      %p183 = por %p181, %p182
      %p184 = scmp.ne.s32.totalorder %s176, %s179
      %p185 = scmp.eq.s32.totalorder %s24, 0
      %p186 = por %p184, %p185
      %p187 = scmp.ne.s32.totalorder %s176, %s179
      %p188 = scmp.eq.s32.totalorder %s29, 1
      %p189 = por %p187, %p188
      %p190 = scmp.ne.s32.totalorder %s179, %s180
      %p191 = scmp.eq.s32.totalorder %s29, 0
      %p192 = por %p190, %p191
      %p193 = scmp.ne.s32.totalorder %s179, %s180
      %p194 = scmp.eq.s32.totalorder %s30, 1
      %p195 = por %p193, %p194
      %p197 = scmp.ne.s32.totalorder %s180, %s196
      %p198 = scmp.eq.s32.totalorder %s30, 0
      %p199 = por %p197, %p198
      %s200 = ssub.s32 %s32, %s39
      %p201 = scmp.eq.s32.totalorder %s200, 0
      %s203 = sadd.s32 %s202, 1
      %s204 = scalar_select %p201, %s202, %s203
      %p207 = pneg %p201
      %p208 = scmp.eq.s32.totalorder %s24, 1
      %p209 = por %p207, %p208
      %p210 = scmp.ne.s32.totalorder %s202, %s205
      %p211 = scmp.eq.s32.totalorder %s24, 0
      %p212 = por %p210, %p211
      %p213 = scmp.ne.s32.totalorder %s202, %s205
      %p214 = scmp.eq.s32.totalorder %s29, 1
      %p215 = por %p213, %p214
      %p216 = scmp.ne.s32.totalorder %s205, %s206
      %p217 = scmp.eq.s32.totalorder %s29, 0
      %p218 = por %p216, %p217
      %p219 = scmp.ne.s32.totalorder %s205, %s206
      %p220 = scmp.eq.s32.totalorder %s30, 1
      %p221 = por %p219, %p220
      %p223 = scmp.ne.s32.totalorder %s206, %s222
      %p224 = scmp.eq.s32.totalorder %s30, 0
      %p225 = por %p223, %p224
      %s226 = ssub.s32 %s32, %s39
      %p227 = scmp.eq.s32.totalorder %s226, 0
      %s229 = sadd.s32 %s228, 1
      %s230 = scalar_select %p227, %s228, %s229
      %p233 = pneg %p227
      %p234 = scmp.eq.s32.totalorder %s24, 1
      %p235 = por %p233, %p234
      %p236 = scmp.ne.s32.totalorder %s228, %s231
      %p237 = scmp.eq.s32.totalorder %s24, 0
      %p238 = por %p236, %p237
      %p239 = scmp.ne.s32.totalorder %s228, %s231
      %p240 = scmp.eq.s32.totalorder %s29, 1
      %p241 = por %p239, %p240
      %p242 = scmp.ne.s32.totalorder %s231, %s232
      %p243 = scmp.eq.s32.totalorder %s29, 0
      %p244 = por %p242, %p243
      %p245 = scmp.ne.s32.totalorder %s231, %s232
      %p246 = scmp.eq.s32.totalorder %s30, 1
      %p247 = por %p245, %p246
      %p249 = scmp.ne.s32.totalorder %s232, %s248
      %p250 = scmp.eq.s32.totalorder %s30, 0
      %p251 = por %p249, %p250
      %s252 = ssub.s32 %s32, %s39
      %p253 = scmp.eq.s32.totalorder %s252, 0
      %s255 = sadd.s32 %s254, 1
      %s256 = scalar_select %p253, %s254, %s255
      %p259 = pneg %p253
      %p260 = scmp.eq.s32.totalorder %s24, 1
      %p261 = por %p259, %p260
      %p262 = scmp.ne.s32.totalorder %s254, %s257
      %p263 = scmp.eq.s32.totalorder %s24, 0
      %p264 = por %p262, %p263
      %p265 = scmp.ne.s32.totalorder %s254, %s257
      %p266 = scmp.eq.s32.totalorder %s29, 1
      %p267 = por %p265, %p266
      %p268 = scmp.ne.s32.totalorder %s257, %s258
      %p269 = scmp.eq.s32.totalorder %s29, 0
      %p270 = por %p268, %p269
      %p271 = scmp.ne.s32.totalorder %s257, %s258
      %p272 = scmp.eq.s32.totalorder %s30, 1
      %p273 = por %p271, %p272
      %p275 = scmp.ne.s32.totalorder %s258, %s274
      %p276 = scmp.eq.s32.totalorder %s30, 0
      %p277 = por %p275, %p276
      %s278 = ssub.s32 %s32, %s39
      %p279 = scmp.eq.s32.totalorder %s278, 0
      %s281 = sadd.s32 %s280, 1
      %s282 = scalar_select %p279, %s280, %s281
      %p285 = pneg %p279
      %p286 = scmp.eq.s32.totalorder %s24, 1
      %p287 = por %p285, %p286
      %p288 = scmp.ne.s32.totalorder %s280, %s283
      %p289 = scmp.eq.s32.totalorder %s24, 0
      %p290 = por %p288, %p289
      %p291 = scmp.ne.s32.totalorder %s280, %s283
      %p292 = scmp.eq.s32.totalorder %s29, 1
      %p293 = por %p291, %p292
      %p294 = scmp.ne.s32.totalorder %s283, %s284
      %p295 = scmp.eq.s32.totalorder %s29, 0
      %p296 = por %p294, %p295
      %p297 = scmp.ne.s32.totalorder %s283, %s284
      %p298 = scmp.eq.s32.totalorder %s30, 1
      %p299 = por %p297, %p298
      %p301 = scmp.ne.s32.totalorder %s284, %s300
      %p302 = scmp.eq.s32.totalorder %s30, 0
      %p303 = por %p301, %p302
      %s304 = ssub.s32 %s32, %s39
      %p305 = scmp.eq.s32.totalorder %s304, 0
      %s307 = sadd.s32 %s306, 1
      %s308 = scalar_select %p305, %s306, %s307
      %p311 = pneg %p305
      %p312 = scmp.eq.s32.totalorder %s24, 1
      %p313 = por %p311, %p312
      %p314 = scmp.ne.s32.totalorder %s306, %s309
      %p315 = scmp.eq.s32.totalorder %s24, 0
      %p316 = por %p314, %p315
      %p317 = scmp.ne.s32.totalorder %s306, %s309
      %p318 = scmp.eq.s32.totalorder %s29, 1
      %p319 = por %p317, %p318
      %p320 = scmp.ne.s32.totalorder %s309, %s310
      %p321 = scmp.eq.s32.totalorder %s29, 0
      %p322 = por %p320, %p321
      %p323 = scmp.ne.s32.totalorder %s309, %s310
      %p324 = scmp.eq.s32.totalorder %s30, 1
      %p325 = por %p323, %p324
      %p327 = scmp.ne.s32.totalorder %s310, %s326
      %p328 = scmp.eq.s32.totalorder %s30, 0
      %p329 = por %p327, %p328
      %s330 = ssub.s32 %s32, %s39
      %p331 = scmp.eq.s32.totalorder %s330, 0
      %s333 = sadd.s32 %s332, 1
      %s334 = scalar_select %p331, %s332, %s333
      %p337 = pneg %p331
      %p338 = scmp.eq.s32.totalorder %s24, 1
      %p339 = por %p337, %p338
      %p340 = scmp.ne.s32.totalorder %s332, %s335
      %p341 = scmp.eq.s32.totalorder %s24, 0
      %p342 = por %p340, %p341
      %p343 = scmp.ne.s32.totalorder %s332, %s335
      %p344 = scmp.eq.s32.totalorder %s29, 1
      %p345 = por %p343, %p344
      %p346 = scmp.ne.s32.totalorder %s335, %s336
      %p347 = scmp.eq.s32.totalorder %s29, 0
      %p348 = por %p346, %p347
      %p349 = scmp.ne.s32.totalorder %s335, %s336
      %p350 = scmp.eq.s32.totalorder %s30, 1
      %p351 = por %p349, %p350
      %p353 = scmp.ne.s32.totalorder %s336, %s352
      %p354 = scmp.eq.s32.totalorder %s30, 0
      %p355 = por %p353, %p354
      %s356 = ssub.s32 %s32, %s39
      %p357 = scmp.eq.s32.totalorder %s356, 0
      %s359 = sadd.s32 %s358, 1
      %s360 = scalar_select %p357, %s358, %s359
      %p363 = pneg %p357
      %p364 = scmp.eq.s32.totalorder %s24, 1
      %p365 = por %p363, %p364
      %p366 = scmp.ne.s32.totalorder %s358, %s361
      %p367 = scmp.eq.s32.totalorder %s24, 0
      %p368 = por %p366, %p367
      %p369 = scmp.ne.s32.totalorder %s358, %s361
      %p370 = scmp.eq.s32.totalorder %s29, 1
      %p371 = por %p369, %p370
      %p372 = scmp.ne.s32.totalorder %s361, %s362
      %p373 = scmp.eq.s32.totalorder %s29, 0
      %p374 = por %p372, %p373
      %p375 = scmp.ne.s32.totalorder %s361, %s362
      %p376 = scmp.eq.s32.totalorder %s30, 1
      %p377 = por %p375, %p376
      %p379 = scmp.ne.s32.totalorder %s362, %s378
      %p380 = scmp.eq.s32.totalorder %s30, 0
      %p381 = por %p379, %p380
      %s382 = ssub.s32 %s31, %s43
      %p383 = scmp.eq.s32.totalorder %s382, 0
      %s385 = sadd.s32 %s384, 1
      %s386 = scalar_select %p383, %s384, %s385
      %p389 = pneg %p383
      %p390 = scmp.eq.s32.totalorder %s24, 1
      %p391 = por %p389, %p390
      %p392 = scmp.ne.s32.totalorder %s384, %s387
      %p393 = scmp.eq.s32.totalorder %s24, 0
      %p394 = por %p392, %p393
      %p395 = scmp.ne.s32.totalorder %s384, %s387
      %p396 = scmp.eq.s32.totalorder %s29, 1
      %p397 = por %p395, %p396
      %p398 = scmp.ne.s32.totalorder %s387, %s388
      %p399 = scmp.eq.s32.totalorder %s29, 0
      %p400 = por %p398, %p399
      %p401 = scmp.ne.s32.totalorder %s387, %s388
      %p402 = scmp.eq.s32.totalorder %s30, 1
      %p403 = por %p401, %p402
      %p405 = scmp.ne.s32.totalorder %s388, %s404
      %p406 = scmp.eq.s32.totalorder %s30, 0
      %p407 = por %p405, %p406
      %p408 = scmp.le.s32.totalorder 1, %s24
      %p409 = scmp.lt.s32.totalorder %s24, 3
      %p410 = pnand %p408, %p409
      %p411 = pneg %p410
      // Predicated region
      $region9: #{tpu_custom_call.1} parent=5 // pred_check
        _
      $region10: #{tpu_custom_call.1} parent=5 // pred_check_branch
        %413 = sbr.rel (%p410) target = $region12
      $region11: #{tpu_custom_call.1} parent=5 // pred_region
        %s414 = ssub.s32 %s24, 1
        // Predicated region
        $region13: #{tpu_custom_call.1} parent=11 // pred_check
          %p415 = pneg %p62
        $region14: #{tpu_custom_call.1} parent=11 // pred_check_branch
          %417 = sbr.rel (%p415) target = $region16
        $region15: #{tpu_custom_call.1} parent=11 // pred_region
          %s418 = smul.u32 2, %s33
          %s420 = ssub.s32 256, 256
          %421 = vsyncadd [#allocation4], %s420
          %s422 = smul.addr %s418, 128
          %s423 = scalar_lea.hbm %s0, %s422
          %s424 = sshll.u32 [#allocation3], 4
          %s425 = int_to_ptr.vmem [resolvable:$true] %s424
          %430 = dma.hbm_to_vmem [thread:$0]  %s423, 256, %s425, [#allocation4], 128, 128, 8
        $region16: #{tpu_custom_call.1} parent=11 // pred_fallthru
          _
      $region12: #{tpu_custom_call.1} parent=5 // pred_fallthru
        _
      %p431 = scmp.lt.s32.totalorder %s24, 2
      // Predicated region
      $region17: #{tpu_custom_call.1} parent=5 // pred_check
        %p432 = pneg %p431
      $region18: #{tpu_custom_call.1} parent=5 // pred_check_branch
        %434 = sbr.rel (%p432) target = $region20
      $region19: #{tpu_custom_call.1} parent=5 // pred_region
        // Predicated region
        $region21: #{tpu_custom_call.1} parent=19 // pred_check
          %p435 = pneg %p82
        $region22: #{tpu_custom_call.1} parent=19 // pred_check_branch
          %437 = sbr.rel (%p435) target = $region24
        $region23: #{tpu_custom_call.1} parent=19 // pred_region
          %p438 = scmp.lt.s32.totalorder %s32, 1
          %s439 = scalar_select %p438, %s32, 1
          %s440 = smul.addr %s439, 4
          %s441 = smul.addr %s440, 8
          %s442 = scalar_lea.vmem %s1, %s441
        $region24: #{tpu_custom_call.1} parent=19 // pred_fallthru
          _
        // Predicated region
        $region25: #{tpu_custom_call.1} parent=19 // pred_check
          %p443 = pneg %p108
        $region26: #{tpu_custom_call.1} parent=19 // pred_check_branch
          %445 = sbr.rel (%p443) target = $region28
        $region27: #{tpu_custom_call.1} parent=19 // pred_region
          %p446 = scmp.lt.s32.totalorder %s32, 1
          %s447 = scalar_select %p446, %s32, 1
          %s448 = smul.addr %s447, 4
          %s449 = smul.addr %s448, 8
          %s450 = scalar_lea.vmem %s2, %s449
        $region28: #{tpu_custom_call.1} parent=19 // pred_fallthru
          _
        // Predicated region
        $region29: #{tpu_custom_call.1} parent=19 // pred_check
          %p451 = pneg %p134
        $region30: #{tpu_custom_call.1} parent=19 // pred_check_branch
          %453 = sbr.rel (%p451) target = $region32
        $region31: #{tpu_custom_call.1} parent=19 // pred_region
          %p454 = scmp.lt.s32.totalorder %s32, 1
          %s455 = scalar_select %p454, %s32, 1
          %s456 = smul.addr %s455, 4
          %s457 = smul.addr %s456, 8
          %s458 = scalar_lea.vmem %s3, %s457
        $region32: #{tpu_custom_call.1} parent=19 // pred_fallthru
          _
        // Predicated region
        $region33: #{tpu_custom_call.1} parent=19 // pred_check
          %p459 = pneg %p160
        $region34: #{tpu_custom_call.1} parent=19 // pred_check_branch
          %461 = sbr.rel (%p459) target = $region36
        $region35: #{tpu_custom_call.1} parent=19 // pred_region
          %s462 = sand.u32 %s24, 1
          %s463 = scalar_lea.sflag [#allocation7], %s462
          %s464 = sand.u32 %s150, 1
          %s465 = smul.addr %s464, 32
          %s466 = scalar_lea.vmem [#allocation6], %s465
          %s468 = ssub.s32 512, 512
          %469 = vsyncadd %s463, %s468
          %s470 = smul.addr %s32, 4
          %s471 = smul.addr %s470, 128
          %s472 = scalar_lea.hbm %s4, %s471
          %s473 = sshll.u32 %s466, 4
          %s474 = int_to_ptr.vmem [resolvable:$true] %s473
          %479 = dma.hbm_to_vmem [thread:$0]  %s472, 512, %s474, %s463, 128, 128, 8
        $region36: #{tpu_custom_call.1} parent=19 // pred_fallthru
          _
        // Predicated region
        $region37: #{tpu_custom_call.1} parent=19 // pred_check
          %p480 = pneg %p186
        $region38: #{tpu_custom_call.1} parent=19 // pred_check_branch
          %482 = sbr.rel (%p480) target = $region40
        $region39: #{tpu_custom_call.1} parent=19 // pred_region
          %s483 = sand.u32 %s24, 1
          %s484 = scalar_lea.sflag [#allocation7], %s483
          %s485 = sand.u32 %s176, 1
          %s486 = smul.addr %s485, 32
          %s487 = scalar_lea.vmem [#allocation8], %s486
          %s489 = ssub.s32 512, 512
          %490 = vsyncadd %s484, %s489
          %s491 = smul.addr %s32, 4
          %s492 = smul.addr %s491, 128
          %s493 = scalar_lea.hbm %s5, %s492
          %s494 = sshll.u32 %s487, 4
          %s495 = int_to_ptr.vmem [resolvable:$true] %s494
          %500 = dma.hbm_to_vmem [thread:$0]  %s493, 512, %s495, %s484, 128, 128, 8
        $region40: #{tpu_custom_call.1} parent=19 // pred_fallthru
          _
        // Predicated region
        $region41: #{tpu_custom_call.1} parent=19 // pred_check
          %p501 = pneg %p212
        $region42: #{tpu_custom_call.1} parent=19 // pred_check_branch
          %503 = sbr.rel (%p501) target = $region44
        $region43: #{tpu_custom_call.1} parent=19 // pred_region
          %p504 = scmp.lt.s32.totalorder %s32, 1
          %s505 = scalar_select %p504, %s32, 1
          %s506 = scalar_lea.vmem %s6, %s505
        $region44: #{tpu_custom_call.1} parent=19 // pred_fallthru
          _
        // Predicated region
        $region45: #{tpu_custom_call.1} parent=19 // pred_check
          %p507 = pneg %p238
        $region46: #{tpu_custom_call.1} parent=19 // pred_check_branch
          %509 = sbr.rel (%p507) target = $region48
        $region47: #{tpu_custom_call.1} parent=19 // pred_region
          %p510 = scmp.lt.s32.totalorder %s32, 1
          %s511 = scalar_select %p510, %s32, 1
          %s512 = smul.addr %s511, 8
          %s513 = smul.addr %s512, 8
          %s514 = scalar_lea.vmem %s7, %s513
        $region48: #{tpu_custom_call.1} parent=19 // pred_fallthru
          _
        // Predicated region
        $region49: #{tpu_custom_call.1} parent=19 // pred_check
          %p515 = pneg %p264
        $region50: #{tpu_custom_call.1} parent=19 // pred_check_branch
          %517 = sbr.rel (%p515) target = $region52
        $region51: #{tpu_custom_call.1} parent=19 // pred_region
          %p518 = scmp.lt.s32.totalorder %s32, 1
          %s519 = scalar_select %p518, %s32, 1
          %s520 = scalar_lea.vmem %s8, %s519
        $region52: #{tpu_custom_call.1} parent=19 // pred_fallthru
          _
        // Predicated region
        $region53: #{tpu_custom_call.1} parent=19 // pred_check
          %p521 = pneg %p290
        $region54: #{tpu_custom_call.1} parent=19 // pred_check_branch
          %523 = sbr.rel (%p521) target = $region56
        $region55: #{tpu_custom_call.1} parent=19 // pred_region
          %p524 = scmp.lt.s32.totalorder %s32, 1
          %s525 = scalar_select %p524, %s32, 1
          %s526 = scalar_lea.vmem %s9, %s525
        $region56: #{tpu_custom_call.1} parent=19 // pred_fallthru
          _
        // Predicated region
        $region57: #{tpu_custom_call.1} parent=19 // pred_check
          %p527 = pneg %p316
        $region58: #{tpu_custom_call.1} parent=19 // pred_check_branch
          %529 = sbr.rel (%p527) target = $region60
        $region59: #{tpu_custom_call.1} parent=19 // pred_region
          %p530 = scmp.lt.s32.totalorder %s32, 1
          %s531 = scalar_select %p530, %s32, 1
          %s532 = scalar_lea.vmem %s10, %s531
        $region60: #{tpu_custom_call.1} parent=19 // pred_fallthru
          _
        // Predicated region
        $region61: #{tpu_custom_call.1} parent=19 // pred_check
          %p533 = pneg %p342
        $region62: #{tpu_custom_call.1} parent=19 // pred_check_branch
          %535 = sbr.rel (%p533) target = $region64
        $region63: #{tpu_custom_call.1} parent=19 // pred_region
          %p536 = scmp.lt.s32.totalorder %s32, 1
          %s537 = scalar_select %p536, %s32, 1
          %s538 = scalar_lea.vmem %s11, %s537
        $region64: #{tpu_custom_call.1} parent=19 // pred_fallthru
          _
        // Predicated region
        $region65: #{tpu_custom_call.1} parent=19 // pred_check
          %p539 = pneg %p368
        $region66: #{tpu_custom_call.1} parent=19 // pred_check_branch
          %541 = sbr.rel (%p539) target = $region68
        $region67: #{tpu_custom_call.1} parent=19 // pred_region
          %p542 = scmp.lt.s32.totalorder %s32, 1
          %s543 = scalar_select %p542, %s32, 1
          %s544 = scalar_lea.vmem %s12, %s543
        $region68: #{tpu_custom_call.1} parent=19 // pred_fallthru
          _
      $region20: #{tpu_custom_call.1} parent=5 // pred_fallthru
        _
      %p545 = scmp.le.s32.totalorder 1, %s24
      %p546 = scmp.lt.s32.totalorder %s24, 3
      %p547 = pnand %p545, %p546
      %p548 = pneg %p547
      // Predicated region
      $region69: #{tpu_custom_call.1} parent=5 // pred_check
        _
      $region70: #{tpu_custom_call.1} parent=5 // pred_check_branch
        %550 = sbr.rel (%p547) target = $region72
      $region71: #{tpu_custom_call.1} parent=5 // pred_region
        %s551 = ssub.s32 %s24, 1
        // Predicated region
        $region73: #{tpu_custom_call.1} parent=71 // pred_check
          %p552 = pneg %p62
        $region74: #{tpu_custom_call.1} parent=71 // pred_check_branch
          %554 = sbr.rel (%p552) target = $region76
        $region75: #{tpu_custom_call.1} parent=71 // pred_region
          %555 = dma.done [#allocation4], 256
        $region76: #{tpu_custom_call.1} parent=71 // pred_fallthru
          _
        %s556 = sand.u32 %s29, 1
        %s557 = scalar_lea.sflag [#allocation7], %s556
        %s558 = sand.u32 %s153, 1
        %s559 = smul.addr %s558, 32
        %s560 = scalar_lea.vmem [#allocation6], %s559
        // Predicated region
        $region77: #{tpu_custom_call.1} parent=71 // pred_check
          %p561 = pneg %p166
        $region78: #{tpu_custom_call.1} parent=71 // pred_check_branch
          %563 = sbr.rel (%p561) target = $region80
        $region79: #{tpu_custom_call.1} parent=71 // pred_region
          %564 = dma.done %s557, 512
        $region80: #{tpu_custom_call.1} parent=71 // pred_fallthru
          _
        %s565 = sand.u32 %s29, 1
        %s566 = scalar_lea.sflag [#allocation7], %s565
        %s567 = sand.u32 %s179, 1
        %s568 = smul.addr %s567, 32
        %s569 = scalar_lea.vmem [#allocation8], %s568
        // Predicated region
        $region81: #{tpu_custom_call.1} parent=71 // pred_check
          %p570 = pneg %p192
        $region82: #{tpu_custom_call.1} parent=71 // pred_check_branch
          %572 = sbr.rel (%p570) target = $region84
        $region83: #{tpu_custom_call.1} parent=71 // pred_region
          %573 = dma.done %s566, 512
        $region84: #{tpu_custom_call.1} parent=71 // pred_fallthru
          _
        %p574 = pneg %p62
        %p575 = pneg %p59
        %p576 = scmp.lt.s32.totalorder %s34, 1
        %s577 = scalar_select %p576, %s34, 1
        %s578 = smul.addr %s577, 4
        %s579 = smul.addr %s578, 8
        %s580 = scalar_lea.vmem %s1, %s579
        %p581 = pneg %p88
        %p582 = pneg %p85
        %p583 = scmp.lt.s32.totalorder %s34, 1
        %s584 = scalar_select %p583, %s34, 1
        %s585 = smul.addr %s584, 4
        %s586 = smul.addr %s585, 8
        %s587 = scalar_lea.vmem %s2, %s586
        %p588 = pneg %p114
        %p589 = pneg %p111
        %p590 = scmp.lt.s32.totalorder %s34, 1
        %s591 = scalar_select %p590, %s34, 1
        %s592 = smul.addr %s591, 4
        %s593 = smul.addr %s592, 8
        %s594 = scalar_lea.vmem %s3, %s593
        %p595 = pneg %p140
        %p596 = pneg %p137
        %s597 = sand.u32 %s29, 1
        %s598 = scalar_lea.sflag [#allocation7], %s597
        %s599 = sand.u32 %s153, 1
        %s600 = smul.addr %s599, 32
        %s601 = scalar_lea.vmem [#allocation6], %s600
        %p602 = pneg %p166
        %p603 = pneg %p163
        %s604 = sand.u32 %s29, 1
        %s605 = scalar_lea.sflag [#allocation7], %s604
        %s606 = sand.u32 %s179, 1
        %s607 = smul.addr %s606, 32
        %s608 = scalar_lea.vmem [#allocation8], %s607
        %p609 = pneg %p192
        %p610 = pneg %p189
        %p611 = scmp.lt.s32.totalorder %s34, 1
        %s612 = scalar_select %p611, %s34, 1
        %s613 = scalar_lea.vmem %s6, %s612
        %p614 = pneg %p218
        %p615 = pneg %p215
        %p616 = scmp.lt.s32.totalorder %s34, 1
        %s617 = scalar_select %p616, %s34, 1
        %s618 = smul.addr %s617, 8
        %s619 = smul.addr %s618, 8
        %s620 = scalar_lea.vmem %s7, %s619
        %p621 = pneg %p244
        %p622 = pneg %p241
        %p623 = scmp.lt.s32.totalorder %s34, 1
        %s624 = scalar_select %p623, %s34, 1
        %s625 = scalar_lea.vmem %s8, %s624
        %p626 = pneg %p270
        %p627 = pneg %p267
        %p628 = scmp.lt.s32.totalorder %s34, 1
        %s629 = scalar_select %p628, %s34, 1
        %s630 = scalar_lea.vmem %s9, %s629
        %p631 = pneg %p296
        %p632 = pneg %p293
        %p633 = scmp.lt.s32.totalorder %s34, 1
        %s634 = scalar_select %p633, %s34, 1
        %s635 = scalar_lea.vmem %s10, %s634
        %p636 = pneg %p322
        %p637 = pneg %p319
        %p638 = scmp.lt.s32.totalorder %s34, 1
        %s639 = scalar_select %p638, %s34, 1
        %s640 = scalar_lea.vmem %s11, %s639
        %p641 = pneg %p348
        %p642 = pneg %p345
        %p643 = scmp.lt.s32.totalorder %s34, 1
        %s644 = scalar_select %p643, %s34, 1
        %s645 = scalar_lea.vmem %s12, %s644
        %p646 = pneg %p374
        %p647 = pneg %p371
        %p648 = pneg %p400
        %p649 = pneg %p397
        %s650 = smul.u32 2, %s33
        %p651 = scmp.lt.s32.totalorder %s34, 1
        %s652 = scalar_select %p651, %s34, 1
        %s653 = smul.addr %s652, 4
        %s654 = smul.addr %s653, 8
        %s655 = scalar_lea.vmem %s1, %s654
        %p656 = scmp.lt.s32.totalorder %s34, 1
        %s657 = scalar_select %p656, %s34, 1
        %s658 = smul.addr %s657, 4
        %s659 = smul.addr %s658, 8
        %s660 = scalar_lea.vmem %s2, %s659
        %p661 = scmp.lt.s32.totalorder %s34, 1
        %s662 = scalar_select %p661, %s34, 1
        %s663 = smul.addr %s662, 4
        %s664 = smul.addr %s663, 8
        %s665 = scalar_lea.vmem %s3, %s664
        %p666 = scmp.lt.s32.totalorder %s34, 1
        %s667 = scalar_select %p666, %s34, 1
        %s668 = scalar_lea.vmem %s6, %s667
        %p669 = scmp.lt.s32.totalorder %s34, 1
        %s670 = scalar_select %p669, %s34, 1
        %s671 = smul.addr %s670, 8
        %s672 = smul.addr %s671, 8
        %s673 = scalar_lea.vmem %s7, %s672
        %p674 = scmp.lt.s32.totalorder %s34, 1
        %s675 = scalar_select %p674, %s34, 1
        %s676 = scalar_lea.vmem %s8, %s675
        %p677 = scmp.lt.s32.totalorder %s34, 1
        %s678 = scalar_select %p677, %s34, 1
        %s679 = scalar_lea.vmem %s9, %s678
        %p680 = scmp.lt.s32.totalorder %s34, 1
        %s681 = scalar_select %p680, %s34, 1
        %s682 = scalar_lea.vmem %s10, %s681
        %p683 = scmp.lt.s32.totalorder %s34, 1
        %s684 = scalar_select %p683, %s34, 1
        %s685 = scalar_lea.vmem %s11, %s684
        %p686 = scmp.lt.s32.totalorder %s34, 1
        %s687 = scalar_select %p686, %s34, 1
        %s688 = scalar_lea.vmem %s12, %s687
        %p689 = scmp.eq.s32.totalorder %s34, 0
        // Predicated region
        $region85: #{tpu_custom_call.1} parent=71 // pred_check
          %p690 = pneg %p689
        $region86: #{tpu_custom_call.1} parent=71 // pred_check_branch
          %692 = sbr.rel (%p690) target = $region88
        $region87: #{tpu_custom_call.1} parent=71 // pred_region
          %v693 = vld [vmem:[#allocation3] sm:$0xff]
          %v694 = vld [vmem:[#allocation3 + $0x8] sm:$0xff]
          %vm695 = vcmask 261120
          %696 = vst.msk [vmem:[#allocation2] sm:$0xff] %vm695, %v693
          %697 = vst.msk [vmem:[#allocation2 + $0x8] sm:$0xff] %vm695, %v694
        $region88: #{tpu_custom_call.1} parent=71 // pred_fallthru
          _
        %v698 = vld [vmem:[#allocation2] sm:$0xff]
        %v699 = vld [vmem:[#allocation2 + $0x8] sm:$0xff]
        %v700 = vld [vmem:[%s655] sm:$0xff]
        %v701 = vld [vmem:[%s655 + $0x8] sm:$0xff]
        %v702 = vld [vmem:[%s655 + $0x10] sm:$0xff]
        %v703 = vld [vmem:[%s655 + $0x18] sm:$0xff]
        %v704 = vld [vmem:[%s660] sm:$0xff]
        %v705 = vld [vmem:[%s660 + $0x8] sm:$0xff]
        %v706 = vld [vmem:[%s660 + $0x10] sm:$0xff]
        %v707 = vld [vmem:[%s660 + $0x18] sm:$0xff]
        %v708 = vld [vmem:[%s665] sm:$0xff]
        %v709 = vld [vmem:[%s665 + $0x8] sm:$0xff]
        %v710 = vld [vmem:[%s665 + $0x10] sm:$0xff]
        %v711 = vld [vmem:[%s665 + $0x18] sm:$0xff]
        %v712 = vld [vmem:[%s560] sm:$0xff]
        %v713 = vld [vmem:[%s560 + $0x8] sm:$0xff]
        %v714 = vld [vmem:[%s560 + $0x10] sm:$0xff]
        %v715 = vld [vmem:[%s560 + $0x18] sm:$0xff]
        %vm716 = vcmask 261120
        %v718 = vsel %vm716, %v698, 0
        %v721 = vsel %vm716, %v699, 0
        %723 = vmatprep.subr.mxu0 0.0
        %724 = vmatpush1.msra.mxu0 %v700
        %725 = vmatprep.subr.mxu0 0.0
        %726 = vmatpush1.msra.mxu0 %v701
        %727 = vmatprep.subr.mxu0 0.0
        %728 = vmatpush1.msra.mxu0 %v702
        %729 = vmatprep.subr.mxu0 0.0
        %730 = vmatpush1.msra.mxu0 %v703
        %731 = vmatprep.subr.mxu0 0.0
        %732 = vmatpush1.msra.mxu0 0.0
        %733 = vmatprep.subr.mxu0 0.0
        %734 = vmatpush1.msra.mxu0 0.0
        %735 = vmatprep.subr.mxu0 0.0
        %736 = vmatpush1.msra.mxu0 0.0
        %737 = vmatprep.subr.mxu0 0.0
        %738 = vmatpush1.msra.mxu0 0.0
        %739 = vmatprep.subr.mxu0 0.0
        %740 = vmatpush1.msra.mxu0 0.0
        %741 = vmatprep.subr.mxu0 0.0
        %742 = vmatpush1.msra.mxu0 0.0
        %743 = vmatprep.subr.mxu0 0.0
        %744 = vmatpush1.msra.mxu0 0.0
        %745 = vmatprep.subr.mxu0 0.0
        %746 = vmatpush1.msra.mxu0 0.0
        %747 = vmatprep.subr.mxu0 0.0
        %748 = vmatpush1.msra.mxu0 0.0
        %749 = vmatprep.subr.mxu0 0.0
        %750 = vmatpush1.msra.mxu0 0.0
        %751 = vmatprep.subr.mxu0 0.0
        %752 = vmatpush1.msra.mxu0 0.0
        %753 = vmatprep.subr.mxu0 0.0
        %754 = vmatpush1.msra.mxu0 0.0
        %755 = vmatprep.subr.mxu0 0.0
        %756 = vmatpush1.msra.mxu0 0.0
        %757 = vmatprep.subr.mxu0 0.0
        %758 = vmatpush1.msra.mxu0 0.0
        %759 = vmatprep.subr.mxu0 0.0
        %760 = vmatpush1.msra.mxu0 0.0
        %761 = vmatprep.subr.mxu0 0.0
        %762 = vmatpush1.msra.mxu0 0.0
        %763 = vmatprep.subr.mxu0 0.0
        %764 = vmatpush1.msra.mxu0 0.0
        %765 = vmatprep.subr.mxu0 0.0
        %766 = vmatpush1.msra.mxu0 0.0
        %767 = vmatprep.subr.mxu0 0.0
        %768 = vmatpush1.msra.mxu0 0.0
        %769 = vmatprep.subr.mxu0 0.0
        %770 = vmatpush1.msra.mxu0 0.0
        %771 = vmatprep.subr.mxu0 0.0
        %772 = vmatpush1.msra.mxu0 0.0
        %773 = vmatprep.subr.mxu0 0.0
        %774 = vmatpush1.msra.mxu0 0.0
        %775 = vmatprep.subr.mxu0 0.0
        %776 = vmatpush1.msra.mxu0 0.0
        %777 = vmatprep.subr.mxu0 0.0
        %778 = vmatpush1.msra.mxu0 0.0
        %779 = vmatprep.subr.mxu0 0.0
        %780 = vmatpush1.msra.mxu0 0.0
        %781 = vmatprep.subr.mxu0 0.0
        %782 = vmatpush1.msra.mxu0 0.0
        %783 = vmatprep.subr.mxu0 0.0
        %784 = vmatpush1.msra.mxu0 0.0
        %785 = vmatprep.subr.mxu0 0.0
        %786 = vmatpush1.msra.mxu0 0.0
        %787 = vmatprep.mubr.f32.mxu0 0.0
        %788 = vmatmul.mubr.f32.gmra.mrb[0].mxu0 %v718
        %v789 = vpop.f32.mrb[0].mxu0
        %v790 = vadd.f32 0.0, %v789
        %v791 = vpop.f32.mrb[0].mxu0
        %792 = vmatprep.mubr.f32.mxu0 0.0
        %793 = vmatmul.mubr.f32.gmra.mrb[0].mxu0 %v721
        %v794 = vpop.f32.mrb[0].mxu0
        %v795 = vadd.f32 0.0, %v794
        %v796 = vpop.f32.mrb[0].mxu0
        %797 = vdwg.mxu0
        %798 = vmatprep.subr.mxu0 0.0
        %799 = vmatpush1.msra.mxu0 %v704
        %800 = vmatprep.subr.mxu0 0.0
        %801 = vmatpush1.msra.mxu0 %v705
        %802 = vmatprep.subr.mxu0 0.0
        %803 = vmatpush1.msra.mxu0 %v706
        %804 = vmatprep.subr.mxu0 0.0
        %805 = vmatpush1.msra.mxu0 %v707
        %806 = vmatprep.subr.mxu0 0.0
        %807 = vmatpush1.msra.mxu0 0.0
        %808 = vmatprep.subr.mxu0 0.0
        %809 = vmatpush1.msra.mxu0 0.0
        %810 = vmatprep.subr.mxu0 0.0
        %811 = vmatpush1.msra.mxu0 0.0
        %812 = vmatprep.subr.mxu0 0.0
        %813 = vmatpush1.msra.mxu0 0.0
        %814 = vmatprep.subr.mxu0 0.0
        %815 = vmatpush1.msra.mxu0 0.0
        %816 = vmatprep.subr.mxu0 0.0
        %817 = vmatpush1.msra.mxu0 0.0
        %818 = vmatprep.subr.mxu0 0.0
        %819 = vmatpush1.msra.mxu0 0.0
        %820 = vmatprep.subr.mxu0 0.0
        %821 = vmatpush1.msra.mxu0 0.0
        %822 = vmatprep.subr.mxu0 0.0
        %823 = vmatpush1.msra.mxu0 0.0
        %824 = vmatprep.subr.mxu0 0.0
        %825 = vmatpush1.msra.mxu0 0.0
        %826 = vmatprep.subr.mxu0 0.0
        %827 = vmatpush1.msra.mxu0 0.0
        %828 = vmatprep.subr.mxu0 0.0
        %829 = vmatpush1.msra.mxu0 0.0
        %830 = vmatprep.subr.mxu0 0.0
        %831 = vmatpush1.msra.mxu0 0.0
        %832 = vmatprep.subr.mxu0 0.0
        %833 = vmatpush1.msra.mxu0 0.0
        %834 = vmatprep.subr.mxu0 0.0
        %835 = vmatpush1.msra.mxu0 0.0
        %836 = vmatprep.subr.mxu0 0.0
        %837 = vmatpush1.msra.mxu0 0.0
        %838 = vmatprep.subr.mxu0 0.0
        %839 = vmatpush1.msra.mxu0 0.0
        %840 = vmatprep.subr.mxu0 0.0
        %841 = vmatpush1.msra.mxu0 0.0
        %842 = vmatprep.subr.mxu0 0.0
        %843 = vmatpush1.msra.mxu0 0.0
        %844 = vmatprep.subr.mxu0 0.0
        %845 = vmatpush1.msra.mxu0 0.0
        %846 = vmatprep.subr.mxu0 0.0
        %847 = vmatpush1.msra.mxu0 0.0
        %848 = vmatprep.subr.mxu0 0.0
        %849 = vmatpush1.msra.mxu0 0.0
        %850 = vmatprep.subr.mxu0 0.0
        %851 = vmatpush1.msra.mxu0 0.0
        %852 = vmatprep.subr.mxu0 0.0
        %853 = vmatpush1.msra.mxu0 0.0
        %854 = vmatprep.subr.mxu0 0.0
        %855 = vmatpush1.msra.mxu0 0.0
        %856 = vmatprep.subr.mxu0 0.0
        %857 = vmatpush1.msra.mxu0 0.0
        %858 = vmatprep.subr.mxu0 0.0
        %859 = vmatpush1.msra.mxu0 0.0
        %860 = vmatprep.subr.mxu0 0.0
        %861 = vmatpush1.msra.mxu0 0.0
        %862 = vmatprep.mubr.f32.mxu0 0.0
        %863 = vmatmul.mubr.f32.gmra.mrb[0].mxu0 %v718
        %v864 = vpop.f32.mrb[0].mxu0
        %v865 = vadd.f32 0.0, %v864
        %v866 = vpop.f32.mrb[0].mxu0
        %867 = vmatprep.mubr.f32.mxu0 0.0
        %868 = vmatmul.mubr.f32.gmra.mrb[0].mxu0 %v721
        %v869 = vpop.f32.mrb[0].mxu0
        %v870 = vadd.f32 0.0, %v869
        %v871 = vpop.f32.mrb[0].mxu0
        %872 = vdwg.mxu0
        %873 = vmatprep.subr.mxu0 0.0
        %874 = vmatpush1.msra.mxu0 %v708
        %875 = vmatprep.subr.mxu0 0.0
        %876 = vmatpush1.msra.mxu0 %v709
        %877 = vmatprep.subr.mxu0 0.0
        %878 = vmatpush1.msra.mxu0 %v710
        %879 = vmatprep.subr.mxu0 0.0
        %880 = vmatpush1.msra.mxu0 %v711
        %881 = vmatprep.subr.mxu0 0.0
        %882 = vmatpush1.msra.mxu0 0.0
        %883 = vmatprep.subr.mxu0 0.0
        %884 = vmatpush1.msra.mxu0 0.0
        %885 = vmatprep.subr.mxu0 0.0
        %886 = vmatpush1.msra.mxu0 0.0
        %887 = vmatprep.subr.mxu0 0.0
        %888 = vmatpush1.msra.mxu0 0.0
        %889 = vmatprep.subr.mxu0 0.0
        %890 = vmatpush1.msra.mxu0 0.0
        %891 = vmatprep.subr.mxu0 0.0
        %892 = vmatpush1.msra.mxu0 0.0
        %893 = vmatprep.subr.mxu0 0.0
        %894 = vmatpush1.msra.mxu0 0.0
        %895 = vmatprep.subr.mxu0 0.0
        %896 = vmatpush1.msra.mxu0 0.0
        %897 = vmatprep.subr.mxu0 0.0
        %898 = vmatpush1.msra.mxu0 0.0
        %899 = vmatprep.subr.mxu0 0.0
        %900 = vmatpush1.msra.mxu0 0.0
        %901 = vmatprep.subr.mxu0 0.0
        %902 = vmatpush1.msra.mxu0 0.0
        %903 = vmatprep.subr.mxu0 0.0
        %904 = vmatpush1.msra.mxu0 0.0
        %905 = vmatprep.subr.mxu0 0.0
        %906 = vmatpush1.msra.mxu0 0.0
        %907 = vmatprep.subr.mxu0 0.0
        %908 = vmatpush1.msra.mxu0 0.0
        %909 = vmatprep.subr.mxu0 0.0
        %910 = vmatpush1.msra.mxu0 0.0
        %911 = vmatprep.subr.mxu0 0.0
        %912 = vmatpush1.msra.mxu0 0.0
        %913 = vmatprep.subr.mxu0 0.0
        %914 = vmatpush1.msra.mxu0 0.0
        %915 = vmatprep.subr.mxu0 0.0
        %916 = vmatpush1.msra.mxu0 0.0
        %917 = vmatprep.subr.mxu0 0.0
        %918 = vmatpush1.msra.mxu0 0.0
        %919 = vmatprep.subr.mxu0 0.0
        %920 = vmatpush1.msra.mxu0 0.0
        %921 = vmatprep.subr.mxu0 0.0
        %922 = vmatpush1.msra.mxu0 0.0
        %923 = vmatprep.subr.mxu0 0.0
        %924 = vmatpush1.msra.mxu0 0.0
        %925 = vmatprep.subr.mxu0 0.0
        %926 = vmatpush1.msra.mxu0 0.0
        %927 = vmatprep.subr.mxu0 0.0
        %928 = vmatpush1.msra.mxu0 0.0
        %929 = vmatprep.subr.mxu0 0.0
        %930 = vmatpush1.msra.mxu0 0.0
        %931 = vmatprep.subr.mxu0 0.0
        %932 = vmatpush1.msra.mxu0 0.0
        %933 = vmatprep.subr.mxu0 0.0
        %934 = vmatpush1.msra.mxu0 0.0
        %935 = vmatprep.subr.mxu0 0.0
        %936 = vmatpush1.msra.mxu0 0.0
        %937 = vmatprep.mubr.f32.mxu0 0.0
        %938 = vmatmul.mubr.f32.gmra.mrb[0].mxu0 %v718
        %v939 = vpop.f32.mrb[0].mxu0
        %v940 = vadd.f32 0.0, %v939
        %v941 = vpop.f32.mrb[0].mxu0
        %942 = vmatprep.mubr.f32.mxu0 0.0
        %943 = vmatmul.mubr.f32.gmra.mrb[0].mxu0 %v721
        %v944 = vpop.f32.mrb[0].mxu0
        %v945 = vadd.f32 0.0, %v944
        %v946 = vpop.f32.mrb[0].mxu0
        %947 = vdwg.mxu0
        %vm948 = vcmask 64512
        %v950 = vsel %vm948, %v790, 0
        %v953 = vsel %vm948, %v865, 0
        %955 = vmatprep.subr.mxu0 0.0
        %956 = vmatpush1.xpose.msra.mxu0 %v953
        %957 = vmatprep.subr.mxu0 0.0
        %958 = vmatpush1.xpose.msra.mxu0 0.0
        %959 = vmatprep.subr.mxu0 0.0
        %960 = vmatpush1.xpose.msra.mxu0 0.0
        %961 = vmatprep.subr.mxu0 0.0
        %962 = vmatpush1.xpose.msra.mxu0 0.0
        %963 = vmatprep.subr.mxu0 0.0
        %964 = vmatpush1.xpose.msra.mxu0 0.0
        %965 = vmatprep.subr.mxu0 0.0
        %966 = vmatpush1.xpose.msra.mxu0 0.0
        %967 = vmatprep.subr.mxu0 0.0
        %968 = vmatpush1.xpose.msra.mxu0 0.0
        %969 = vmatprep.subr.mxu0 0.0
        %970 = vmatpush1.xpose.msra.mxu0 0.0
        %971 = vmatprep.subr.mxu0 0.0
        %972 = vmatpush1.xpose.msra.mxu0 0.0
        %973 = vmatprep.subr.mxu0 0.0
        %974 = vmatpush1.xpose.msra.mxu0 0.0
        %975 = vmatprep.subr.mxu0 0.0
        %976 = vmatpush1.xpose.msra.mxu0 0.0
        %977 = vmatprep.subr.mxu0 0.0
        %978 = vmatpush1.xpose.msra.mxu0 0.0
        %979 = vmatprep.subr.mxu0 0.0
        %980 = vmatpush1.xpose.msra.mxu0 0.0
        %981 = vmatprep.subr.mxu0 0.0
        %982 = vmatpush1.xpose.msra.mxu0 0.0
        %983 = vmatprep.subr.mxu0 0.0
        %984 = vmatpush1.xpose.msra.mxu0 0.0
        %985 = vmatprep.subr.mxu0 0.0
        %986 = vmatpush1.xpose.msra.mxu0 0.0
        %987 = vmatprep.subr.mxu0 0.0
        %988 = vmatpush1.xpose.msra.mxu0 0.0
        %989 = vmatprep.subr.mxu0 0.0
        %990 = vmatpush1.xpose.msra.mxu0 0.0
        %991 = vmatprep.subr.mxu0 0.0
        %992 = vmatpush1.xpose.msra.mxu0 0.0
        %993 = vmatprep.subr.mxu0 0.0
        %994 = vmatpush1.xpose.msra.mxu0 0.0
        %995 = vmatprep.subr.mxu0 0.0
        %996 = vmatpush1.xpose.msra.mxu0 0.0
        %997 = vmatprep.subr.mxu0 0.0
        %998 = vmatpush1.xpose.msra.mxu0 0.0
        %999 = vmatprep.subr.mxu0 0.0
        %1000 = vmatpush1.xpose.msra.mxu0 0.0
        %1001 = vmatprep.subr.mxu0 0.0
        %1002 = vmatpush1.xpose.msra.mxu0 0.0
        %1003 = vmatprep.subr.mxu0 0.0
        %1004 = vmatpush1.xpose.msra.mxu0 0.0
        %1005 = vmatprep.subr.mxu0 0.0
        %1006 = vmatpush1.xpose.msra.mxu0 0.0
        %1007 = vmatprep.subr.mxu0 0.0
        %1008 = vmatpush1.xpose.msra.mxu0 0.0
        %1009 = vmatprep.subr.mxu0 0.0
        %1010 = vmatpush1.xpose.msra.mxu0 0.0
        %1011 = vmatprep.subr.mxu0 0.0
        %1012 = vmatpush1.xpose.msra.mxu0 0.0
        %1013 = vmatprep.subr.mxu0 0.0
        %1014 = vmatpush1.xpose.msra.mxu0 0.0
        %1015 = vmatprep.subr.mxu0 0.0
        %1016 = vmatpush1.xpose.msra.mxu0 0.0
        %1017 = vmatprep.subr.mxu0 0.0
        %1018 = vmatpush1.xpose.msra.mxu0 0.0
        %1019 = vmatprep.mubr.f32.mxu0 0.0
        %1020 = vmatmul.mubr.f32.gmra.mrb[0].mxu0 %v950
        %v1021 = vpop.f32.mrb[0].mxu0
        %v1022 = vadd.f32 0.0, %v1021
        %v1023 = vpop.f32.mrb[0].mxu0
        %1024 = vdwg.mxu0
        %v1026 = vsel %vm948, %v795, 0
        %v1029 = vsel %vm948, %v870, 0
        %1031 = vmatprep.subr.mxu0 0.0
        %1032 = vmatpush1.xpose.msra.mxu0 %v1029
        %1033 = vmatprep.subr.mxu0 0.0
        %1034 = vmatpush1.xpose.msra.mxu0 0.0
        %1035 = vmatprep.subr.mxu0 0.0
        %1036 = vmatpush1.xpose.msra.mxu0 0.0
        %1037 = vmatprep.subr.mxu0 0.0
        %1038 = vmatpush1.xpose.msra.mxu0 0.0
        %1039 = vmatprep.subr.mxu0 0.0
        %1040 = vmatpush1.xpose.msra.mxu0 0.0
        %1041 = vmatprep.subr.mxu0 0.0
        %1042 = vmatpush1.xpose.msra.mxu0 0.0
        %1043 = vmatprep.subr.mxu0 0.0
        %1044 = vmatpush1.xpose.msra.mxu0 0.0
        %1045 = vmatprep.subr.mxu0 0.0
        %1046 = vmatpush1.xpose.msra.mxu0 0.0
        %1047 = vmatprep.subr.mxu0 0.0
        %1048 = vmatpush1.xpose.msra.mxu0 0.0
        %1049 = vmatprep.subr.mxu0 0.0
        %1050 = vmatpush1.xpose.msra.mxu0 0.0
        %1051 = vmatprep.subr.mxu0 0.0
        %1052 = vmatpush1.xpose.msra.mxu0 0.0
        %1053 = vmatprep.subr.mxu0 0.0
        %1054 = vmatpush1.xpose.msra.mxu0 0.0
        %1055 = vmatprep.subr.mxu0 0.0
        %1056 = vmatpush1.xpose.msra.mxu0 0.0
        %1057 = vmatprep.subr.mxu0 0.0
        %1058 = vmatpush1.xpose.msra.mxu0 0.0
        %1059 = vmatprep.subr.mxu0 0.0
        %1060 = vmatpush1.xpose.msra.mxu0 0.0
        %1061 = vmatprep.subr.mxu0 0.0
        %1062 = vmatpush1.xpose.msra.mxu0 0.0
        %1063 = vmatprep.subr.mxu0 0.0
        %1064 = vmatpush1.xpose.msra.mxu0 0.0
        %1065 = vmatprep.subr.mxu0 0.0
        %1066 = vmatpush1.xpose.msra.mxu0 0.0
        %1067 = vmatprep.subr.mxu0 0.0
        %1068 = vmatpush1.xpose.msra.mxu0 0.0
        %1069 = vmatprep.subr.mxu0 0.0
        %1070 = vmatpush1.xpose.msra.mxu0 0.0
        %1071 = vmatprep.subr.mxu0 0.0
        %1072 = vmatpush1.xpose.msra.mxu0 0.0
        %1073 = vmatprep.subr.mxu0 0.0
        %1074 = vmatpush1.xpose.msra.mxu0 0.0
        %1075 = vmatprep.subr.mxu0 0.0
        %1076 = vmatpush1.xpose.msra.mxu0 0.0
        %1077 = vmatprep.subr.mxu0 0.0
        %1078 = vmatpush1.xpose.msra.mxu0 0.0
        %1079 = vmatprep.subr.mxu0 0.0
        %1080 = vmatpush1.xpose.msra.mxu0 0.0
        %1081 = vmatprep.subr.mxu0 0.0
        %1082 = vmatpush1.xpose.msra.mxu0 0.0
        %1083 = vmatprep.subr.mxu0 0.0
        %1084 = vmatpush1.xpose.msra.mxu0 0.0
        %1085 = vmatprep.subr.mxu0 0.0
        %1086 = vmatpush1.xpose.msra.mxu0 0.0
        %1087 = vmatprep.subr.mxu0 0.0
        %1088 = vmatpush1.xpose.msra.mxu0 0.0
        %1089 = vmatprep.subr.mxu0 0.0
        %1090 = vmatpush1.xpose.msra.mxu0 0.0
        %1091 = vmatprep.subr.mxu0 0.0
        %1092 = vmatpush1.xpose.msra.mxu0 0.0
        %1093 = vmatprep.subr.mxu0 0.0
        %1094 = vmatpush1.xpose.msra.mxu0 0.0
        %1095 = vmatprep.mubr.f32.mxu0 0.0
        %1096 = vmatmul.mubr.f32.gmra.mrb[0].mxu0 %v1026
        %v1097 = vpop.f32.mrb[0].mxu0
        %v1098 = vadd.f32 0.0, %v1097
        %v1099 = vpop.f32.mrb[0].mxu0
        %1100 = vdwg.mxu0
        %v1101 = vmul.f32 %v1022, 0.35355338
        %v1102 = vmul.f32 %v1098, 0.35355338
        %v1103 = vsel %vm948, %v1101, -inf
        %1104 = vmax.xlane.f32.xlu0 %v1103
        %v1105 = vpop.xlane.xlu0 %1104
        %v1106 = vsel %vm948, %v1102, -inf
        %1107 = vmax.xlane.f32.xlu0 %v1106
        %v1108 = vpop.xlane.xlu0 %1107
        %v1109 = vsub.f32 %v1101, %v1105
        %v1110 = vsub.f32 %v1102, %v1108
        %v1111 = vmul.f32 %v1109, 1.442695
        %v1112 = vpow.pop %v1111
        %v1113 = vmul.f32 %v1110, 1.442695
        %v1114 = vpow.pop %v1113
        %v1115 = vsel %vm948, %v1112, 0.0
        %1116 = vadd.xlane.f32.xlu0 %v1115
        %v1117 = vpop.xlane.xlu0 %1116
        %v1118 = vsel %vm948, %v1114, 0.0
        %1119 = vadd.xlane.f32.xlu0 %v1118
        %v1120 = vpop.xlane.xlu0 %1119
        %v1121 = vrcp.pop %v1117
        %v1122 = vmul.f32 %v1112, %v1121
        %v1123 = vrcp.pop %v1120
        %v1124 = vmul.f32 %v1114, %v1123
        %v1126 = vsel %vm948, %v1122, 0
        %1128 = vmatprep.subr.mxu0 0.0
        %1129 = vmatpush1.msra.mxu0 %v940
        %1130 = vmatprep.subr.mxu0 0.0
        %1131 = vmatpush1.msra.mxu0 0.0
        %1132 = vmatprep.subr.mxu0 0.0
        %1133 = vmatpush1.msra.mxu0 0.0
        %1134 = vmatprep.subr.mxu0 0.0
        %1135 = vmatpush1.msra.mxu0 0.0
        %1136 = vmatprep.subr.mxu0 0.0
        %1137 = vmatpush1.msra.mxu0 0.0
        %1138 = vmatprep.subr.mxu0 0.0
        %1139 = vmatpush1.msra.mxu0 0.0
        %1140 = vmatprep.subr.mxu0 0.0
        %1141 = vmatpush1.msra.mxu0 0.0
        %1142 = vmatprep.subr.mxu0 0.0
        %1143 = vmatpush1.msra.mxu0 0.0
        %1144 = vmatprep.subr.mxu0 0.0
        %1145 = vmatpush1.msra.mxu0 0.0
        %1146 = vmatprep.subr.mxu0 0.0
        %1147 = vmatpush1.msra.mxu0 0.0
        %1148 = vmatprep.subr.mxu0 0.0
        %1149 = vmatpush1.msra.mxu0 0.0
        %1150 = vmatprep.subr.mxu0 0.0
        %1151 = vmatpush1.msra.mxu0 0.0
        %1152 = vmatprep.subr.mxu0 0.0
        %1153 = vmatpush1.msra.mxu0 0.0
        %1154 = vmatprep.subr.mxu0 0.0
        %1155 = vmatpush1.msra.mxu0 0.0
        %1156 = vmatprep.subr.mxu0 0.0
        %1157 = vmatpush1.msra.mxu0 0.0
        %1158 = vmatprep.subr.mxu0 0.0
        %1159 = vmatpush1.msra.mxu0 0.0
        %1160 = vmatprep.subr.mxu0 0.0
        %1161 = vmatpush1.msra.mxu0 0.0
        %1162 = vmatprep.subr.mxu0 0.0
        %1163 = vmatpush1.msra.mxu0 0.0
        %1164 = vmatprep.subr.mxu0 0.0
        %1165 = vmatpush1.msra.mxu0 0.0
        %1166 = vmatprep.subr.mxu0 0.0
        %1167 = vmatpush1.msra.mxu0 0.0
        %1168 = vmatprep.subr.mxu0 0.0
        %1169 = vmatpush1.msra.mxu0 0.0
        %1170 = vmatprep.subr.mxu0 0.0
        %1171 = vmatpush1.msra.mxu0 0.0
        %1172 = vmatprep.subr.mxu0 0.0
        %1173 = vmatpush1.msra.mxu0 0.0
        %1174 = vmatprep.subr.mxu0 0.0
        %1175 = vmatpush1.msra.mxu0 0.0
        %1176 = vmatprep.subr.mxu0 0.0
        %1177 = vmatpush1.msra.mxu0 0.0
        %1178 = vmatprep.subr.mxu0 0.0
        %1179 = vmatpush1.msra.mxu0 0.0
        %1180 = vmatprep.subr.mxu0 0.0
        %1181 = vmatpush1.msra.mxu0 0.0
        %1182 = vmatprep.subr.mxu0 0.0
        %1183 = vmatpush1.msra.mxu0 0.0
        %1184 = vmatprep.subr.mxu0 0.0
        %1185 = vmatpush1.msra.mxu0 0.0
        %1186 = vmatprep.subr.mxu0 0.0
        %1187 = vmatpush1.msra.mxu0 0.0
        %1188 = vmatprep.subr.mxu0 0.0
        %1189 = vmatpush1.msra.mxu0 0.0
        %1190 = vmatprep.subr.mxu0 0.0
        %1191 = vmatpush1.msra.mxu0 0.0
        %1192 = vmatprep.mubr.f32.mxu0 0.0
        %1193 = vmatmul.mubr.f32.gmra.mrb[0].mxu0 %v1126
        %v1194 = vpop.f32.mrb[0].mxu0
        %v1195 = vadd.f32 0.0, %v1194
        %v1196 = vpop.f32.mrb[0].mxu0
        %1197 = vdwg.mxu0
        %v1199 = vsel %vm948, %v1124, 0
        %1201 = vmatprep.subr.mxu0 0.0
        %1202 = vmatpush1.msra.mxu0 %v945
        %1203 = vmatprep.subr.mxu0 0.0
        %1204 = vmatpush1.msra.mxu0 0.0
        %1205 = vmatprep.subr.mxu0 0.0
        %1206 = vmatpush1.msra.mxu0 0.0
        %1207 = vmatprep.subr.mxu0 0.0
        %1208 = vmatpush1.msra.mxu0 0.0
        %1209 = vmatprep.subr.mxu0 0.0
        %1210 = vmatpush1.msra.mxu0 0.0
        %1211 = vmatprep.subr.mxu0 0.0
        %1212 = vmatpush1.msra.mxu0 0.0
        %1213 = vmatprep.subr.mxu0 0.0
        %1214 = vmatpush1.msra.mxu0 0.0
        %1215 = vmatprep.subr.mxu0 0.0
        %1216 = vmatpush1.msra.mxu0 0.0
        %1217 = vmatprep.subr.mxu0 0.0
        %1218 = vmatpush1.msra.mxu0 0.0
        %1219 = vmatprep.subr.mxu0 0.0
        %1220 = vmatpush1.msra.mxu0 0.0
        %1221 = vmatprep.subr.mxu0 0.0
        %1222 = vmatpush1.msra.mxu0 0.0
        %1223 = vmatprep.subr.mxu0 0.0
        %1224 = vmatpush1.msra.mxu0 0.0
        %1225 = vmatprep.subr.mxu0 0.0
        %1226 = vmatpush1.msra.mxu0 0.0
        %1227 = vmatprep.subr.mxu0 0.0
        %1228 = vmatpush1.msra.mxu0 0.0
        %1229 = vmatprep.subr.mxu0 0.0
        %1230 = vmatpush1.msra.mxu0 0.0
        %1231 = vmatprep.subr.mxu0 0.0
        %1232 = vmatpush1.msra.mxu0 0.0
        %1233 = vmatprep.subr.mxu0 0.0
        %1234 = vmatpush1.msra.mxu0 0.0
        %1235 = vmatprep.subr.mxu0 0.0
        %1236 = vmatpush1.msra.mxu0 0.0
        %1237 = vmatprep.subr.mxu0 0.0
        %1238 = vmatpush1.msra.mxu0 0.0
        %1239 = vmatprep.subr.mxu0 0.0
        %1240 = vmatpush1.msra.mxu0 0.0
        %1241 = vmatprep.subr.mxu0 0.0
        %1242 = vmatpush1.msra.mxu0 0.0
        %1243 = vmatprep.subr.mxu0 0.0
        %1244 = vmatpush1.msra.mxu0 0.0
        %1245 = vmatprep.subr.mxu0 0.0
        %1246 = vmatpush1.msra.mxu0 0.0
        %1247 = vmatprep.subr.mxu0 0.0
        %1248 = vmatpush1.msra.mxu0 0.0
        %1249 = vmatprep.subr.mxu0 0.0
        %1250 = vmatpush1.msra.mxu0 0.0
        %1251 = vmatprep.subr.mxu0 0.0
        %1252 = vmatpush1.msra.mxu0 0.0
        %1253 = vmatprep.subr.mxu0 0.0
        %1254 = vmatpush1.msra.mxu0 0.0
        %1255 = vmatprep.subr.mxu0 0.0
        %1256 = vmatpush1.msra.mxu0 0.0
        %1257 = vmatprep.subr.mxu0 0.0
        %1258 = vmatpush1.msra.mxu0 0.0
        %1259 = vmatprep.subr.mxu0 0.0
        %1260 = vmatpush1.msra.mxu0 0.0
        %1261 = vmatprep.subr.mxu0 0.0
        %1262 = vmatpush1.msra.mxu0 0.0
        %1263 = vmatprep.subr.mxu0 0.0
        %1264 = vmatpush1.msra.mxu0 0.0
        %1265 = vmatprep.mubr.f32.mxu0 0.0
        %1266 = vmatmul.mubr.f32.gmra.mrb[0].mxu0 %v1199
        %v1267 = vpop.f32.mrb[0].mxu0
        %v1268 = vadd.f32 0.0, %v1267
        %v1269 = vpop.f32.mrb[0].mxu0
        %1270 = vdwg.mxu0
        %1271 = vrot.lane.b32.xlu0 %v790, 120
        %v1272 = vpop.permute.xlu0 %1271
        %1273 = vrot.lane.b32.xlu0 %v865, 120
        %v1274 = vpop.permute.xlu0 %1273
        %v1275 = vsel %vm948, %v1272, 0
        %v1277 = vsel %vm948, %v1274, 0
        %1279 = vmatprep.subr.mxu0 0.0
        %1280 = vmatpush1.xpose.msra.mxu0 %v1277
        %1281 = vmatprep.subr.mxu0 0.0
        %1282 = vmatpush1.xpose.msra.mxu0 0.0
        %1283 = vmatprep.subr.mxu0 0.0
        %1284 = vmatpush1.xpose.msra.mxu0 0.0
        %1285 = vmatprep.subr.mxu0 0.0
        %1286 = vmatpush1.xpose.msra.mxu0 0.0
        %1287 = vmatprep.subr.mxu0 0.0
        %1288 = vmatpush1.xpose.msra.mxu0 0.0
        %1289 = vmatprep.subr.mxu0 0.0
        %1290 = vmatpush1.xpose.msra.mxu0 0.0
        %1291 = vmatprep.subr.mxu0 0.0
        %1292 = vmatpush1.xpose.msra.mxu0 0.0
        %1293 = vmatprep.subr.mxu0 0.0
        %1294 = vmatpush1.xpose.msra.mxu0 0.0
        %1295 = vmatprep.subr.mxu0 0.0
        %1296 = vmatpush1.xpose.msra.mxu0 0.0
        %1297 = vmatprep.subr.mxu0 0.0
        %1298 = vmatpush1.xpose.msra.mxu0 0.0
        %1299 = vmatprep.subr.mxu0 0.0
        %1300 = vmatpush1.xpose.msra.mxu0 0.0
        %1301 = vmatprep.subr.mxu0 0.0
        %1302 = vmatpush1.xpose.msra.mxu0 0.0
        %1303 = vmatprep.subr.mxu0 0.0
        %1304 = vmatpush1.xpose.msra.mxu0 0.0
        %1305 = vmatprep.subr.mxu0 0.0
        %1306 = vmatpush1.xpose.msra.mxu0 0.0
        %1307 = vmatprep.subr.mxu0 0.0
        %1308 = vmatpush1.xpose.msra.mxu0 0.0
        %1309 = vmatprep.subr.mxu0 0.0
        %1310 = vmatpush1.xpose.msra.mxu0 0.0
        %1311 = vmatprep.subr.mxu0 0.0
        %1312 = vmatpush1.xpose.msra.mxu0 0.0
        %1313 = vmatprep.subr.mxu0 0.0
        %1314 = vmatpush1.xpose.msra.mxu0 0.0
        %1315 = vmatprep.subr.mxu0 0.0
        %1316 = vmatpush1.xpose.msra.mxu0 0.0
        %1317 = vmatprep.subr.mxu0 0.0
        %1318 = vmatpush1.xpose.msra.mxu0 0.0
        %1319 = vmatprep.subr.mxu0 0.0
        %1320 = vmatpush1.xpose.msra.mxu0 0.0
        %1321 = vmatprep.subr.mxu0 0.0
        %1322 = vmatpush1.xpose.msra.mxu0 0.0
        %1323 = vmatprep.subr.mxu0 0.0
        %1324 = vmatpush1.xpose.msra.mxu0 0.0
        %1325 = vmatprep.subr.mxu0 0.0
        %1326 = vmatpush1.xpose.msra.mxu0 0.0
        %1327 = vmatprep.subr.mxu0 0.0
        %1328 = vmatpush1.xpose.msra.mxu0 0.0
        %1329 = vmatprep.subr.mxu0 0.0
        %1330 = vmatpush1.xpose.msra.mxu0 0.0
        %1331 = vmatprep.subr.mxu0 0.0
        %1332 = vmatpush1.xpose.msra.mxu0 0.0
        %1333 = vmatprep.subr.mxu0 0.0
        %1334 = vmatpush1.xpose.msra.mxu0 0.0
        %1335 = vmatprep.subr.mxu0 0.0
        %1336 = vmatpush1.xpose.msra.mxu0 0.0
        %1337 = vmatprep.subr.mxu0 0.0
        %1338 = vmatpush1.xpose.msra.mxu0 0.0
        %1339 = vmatprep.subr.mxu0 0.0
        %1340 = vmatpush1.xpose.msra.mxu0 0.0
        %1341 = vmatprep.subr.mxu0 0.0
        %1342 = vmatpush1.xpose.msra.mxu0 0.0
        %1343 = vmatprep.mubr.f32.mxu0 0.0
        %1344 = vmatmul.mubr.f32.gmra.mrb[0].mxu0 %v1275
        %v1345 = vpop.f32.mrb[0].mxu0
        %v1346 = vadd.f32 0.0, %v1345
        %v1347 = vpop.f32.mrb[0].mxu0
        %1348 = vdwg.mxu0
        %1349 = vrot.lane.b32.xlu0 %v795, 120
        %v1350 = vpop.permute.xlu0 %1349
        %1351 = vrot.lane.b32.xlu0 %v870, 120
        %v1352 = vpop.permute.xlu0 %1351
        %v1353 = vsel %vm948, %v1350, 0
        %v1355 = vsel %vm948, %v1352, 0
        %1357 = vmatprep.subr.mxu0 0.0
        %1358 = vmatpush1.xpose.msra.mxu0 %v1355
        %1359 = vmatprep.subr.mxu0 0.0
        %1360 = vmatpush1.xpose.msra.mxu0 0.0
        %1361 = vmatprep.subr.mxu0 0.0
        %1362 = vmatpush1.xpose.msra.mxu0 0.0
        %1363 = vmatprep.subr.mxu0 0.0
        %1364 = vmatpush1.xpose.msra.mxu0 0.0
        %1365 = vmatprep.subr.mxu0 0.0
        %1366 = vmatpush1.xpose.msra.mxu0 0.0
        %1367 = vmatprep.subr.mxu0 0.0
        %1368 = vmatpush1.xpose.msra.mxu0 0.0
        %1369 = vmatprep.subr.mxu0 0.0
        %1370 = vmatpush1.xpose.msra.mxu0 0.0
        %1371 = vmatprep.subr.mxu0 0.0
        %1372 = vmatpush1.xpose.msra.mxu0 0.0
        %1373 = vmatprep.subr.mxu0 0.0
        %1374 = vmatpush1.xpose.msra.mxu0 0.0
        %1375 = vmatprep.subr.mxu0 0.0
        %1376 = vmatpush1.xpose.msra.mxu0 0.0
        %1377 = vmatprep.subr.mxu0 0.0
        %1378 = vmatpush1.xpose.msra.mxu0 0.0
        %1379 = vmatprep.subr.mxu0 0.0
        %1380 = vmatpush1.xpose.msra.mxu0 0.0
        %1381 = vmatprep.subr.mxu0 0.0
        %1382 = vmatpush1.xpose.msra.mxu0 0.0
        %1383 = vmatprep.subr.mxu0 0.0
        %1384 = vmatpush1.xpose.msra.mxu0 0.0
        %1385 = vmatprep.subr.mxu0 0.0
        %1386 = vmatpush1.xpose.msra.mxu0 0.0
        %1387 = vmatprep.subr.mxu0 0.0
        %1388 = vmatpush1.xpose.msra.mxu0 0.0
        %1389 = vmatprep.subr.mxu0 0.0
        %1390 = vmatpush1.xpose.msra.mxu0 0.0
        %1391 = vmatprep.subr.mxu0 0.0
        %1392 = vmatpush1.xpose.msra.mxu0 0.0
        %1393 = vmatprep.subr.mxu0 0.0
        %1394 = vmatpush1.xpose.msra.mxu0 0.0
        %1395 = vmatprep.subr.mxu0 0.0
        %1396 = vmatpush1.xpose.msra.mxu0 0.0
        %1397 = vmatprep.subr.mxu0 0.0
        %1398 = vmatpush1.xpose.msra.mxu0 0.0
        %1399 = vmatprep.subr.mxu0 0.0
        %1400 = vmatpush1.xpose.msra.mxu0 0.0
        %1401 = vmatprep.subr.mxu0 0.0
        %1402 = vmatpush1.xpose.msra.mxu0 0.0
        %1403 = vmatprep.subr.mxu0 0.0
        %1404 = vmatpush1.xpose.msra.mxu0 0.0
        %1405 = vmatprep.subr.mxu0 0.0
        %1406 = vmatpush1.xpose.msra.mxu0 0.0
        %1407 = vmatprep.subr.mxu0 0.0
        %1408 = vmatpush1.xpose.msra.mxu0 0.0
        %1409 = vmatprep.subr.mxu0 0.0
        %1410 = vmatpush1.xpose.msra.mxu0 0.0
        %1411 = vmatprep.subr.mxu0 0.0
        %1412 = vmatpush1.xpose.msra.mxu0 0.0
        %1413 = vmatprep.subr.mxu0 0.0
        %1414 = vmatpush1.xpose.msra.mxu0 0.0
        %1415 = vmatprep.subr.mxu0 0.0
        %1416 = vmatpush1.xpose.msra.mxu0 0.0
        %1417 = vmatprep.subr.mxu0 0.0
        %1418 = vmatpush1.xpose.msra.mxu0 0.0
        %1419 = vmatprep.subr.mxu0 0.0
        %1420 = vmatpush1.xpose.msra.mxu0 0.0
        %1421 = vmatprep.mubr.f32.mxu0 0.0
        %1422 = vmatmul.mubr.f32.gmra.mrb[0].mxu0 %v1353
        %v1423 = vpop.f32.mrb[0].mxu0
        %v1424 = vadd.f32 0.0, %v1423
        %v1425 = vpop.f32.mrb[0].mxu0
        %1426 = vdwg.mxu0
        %v1427 = vmul.f32 %v1346, 0.35355338
        %v1428 = vmul.f32 %v1424, 0.35355338
        %v1429 = vsel %vm948, %v1427, -inf
        %1430 = vmax.xlane.f32.xlu0 %v1429
        %v1431 = vpop.xlane.xlu0 %1430
        %v1432 = vsel %vm948, %v1428, -inf
        %1433 = vmax.xlane.f32.xlu0 %v1432
        %v1434 = vpop.xlane.xlu0 %1433
        %v1435 = vsub.f32 %v1427, %v1431
        %v1436 = vsub.f32 %v1428, %v1434
        %v1437 = vmul.f32 %v1435, 1.442695
        %v1438 = vpow.pop %v1437
        %v1439 = vmul.f32 %v1436, 1.442695
        %v1440 = vpow.pop %v1439
        %v1441 = vsel %vm948, %v1438, 0.0
        %1442 = vadd.xlane.f32.xlu0 %v1441
        %v1443 = vpop.xlane.xlu0 %1442
        %v1444 = vsel %vm948, %v1440, 0.0
        %1445 = vadd.xlane.f32.xlu0 %v1444
        %v1446 = vpop.xlane.xlu0 %1445
        %v1447 = vrcp.pop %v1443
        %v1448 = vmul.f32 %v1438, %v1447
        %v1449 = vrcp.pop %v1446
        %v1450 = vmul.f32 %v1440, %v1449
        %1452 = vrot.lane.b32.xlu0 %v940, 120
        %v1453 = vpop.permute.xlu0 %1452
        %v1456 = vsel %vm948, %v1448, 0
        %1458 = vmatprep.subr.mxu0 0.0
        %1459 = vmatpush1.msra.mxu0 %v1453
        %1460 = vmatprep.subr.mxu0 0.0
        %1461 = vmatpush1.msra.mxu0 0.0
        %1462 = vmatprep.subr.mxu0 0.0
        %1463 = vmatpush1.msra.mxu0 0.0
        %1464 = vmatprep.subr.mxu0 0.0
        %1465 = vmatpush1.msra.mxu0 0.0
        %1466 = vmatprep.subr.mxu0 0.0
        %1467 = vmatpush1.msra.mxu0 0.0
        %1468 = vmatprep.subr.mxu0 0.0
        %1469 = vmatpush1.msra.mxu0 0.0
        %1470 = vmatprep.subr.mxu0 0.0
        %1471 = vmatpush1.msra.mxu0 0.0
        %1472 = vmatprep.subr.mxu0 0.0
        %1473 = vmatpush1.msra.mxu0 0.0
        %1474 = vmatprep.subr.mxu0 0.0
        %1475 = vmatpush1.msra.mxu0 0.0
        %1476 = vmatprep.subr.mxu0 0.0
        %1477 = vmatpush1.msra.mxu0 0.0
        %1478 = vmatprep.subr.mxu0 0.0
        %1479 = vmatpush1.msra.mxu0 0.0
        %1480 = vmatprep.subr.mxu0 0.0
        %1481 = vmatpush1.msra.mxu0 0.0
        %1482 = vmatprep.subr.mxu0 0.0
        %1483 = vmatpush1.msra.mxu0 0.0
        %1484 = vmatprep.subr.mxu0 0.0
        %1485 = vmatpush1.msra.mxu0 0.0
        %1486 = vmatprep.subr.mxu0 0.0
        %1487 = vmatpush1.msra.mxu0 0.0
        %1488 = vmatprep.subr.mxu0 0.0
        %1489 = vmatpush1.msra.mxu0 0.0
        %1490 = vmatprep.subr.mxu0 0.0
        %1491 = vmatpush1.msra.mxu0 0.0
        %1492 = vmatprep.subr.mxu0 0.0
        %1493 = vmatpush1.msra.mxu0 0.0
        %1494 = vmatprep.subr.mxu0 0.0
        %1495 = vmatpush1.msra.mxu0 0.0
        %1496 = vmatprep.subr.mxu0 0.0
        %1497 = vmatpush1.msra.mxu0 0.0
        %1498 = vmatprep.subr.mxu0 0.0
        %1499 = vmatpush1.msra.mxu0 0.0
        %1500 = vmatprep.subr.mxu0 0.0
        %1501 = vmatpush1.msra.mxu0 0.0
        %1502 = vmatprep.subr.mxu0 0.0
        %1503 = vmatpush1.msra.mxu0 0.0
        %1504 = vmatprep.subr.mxu0 0.0
        %1505 = vmatpush1.msra.mxu0 0.0
        %1506 = vmatprep.subr.mxu0 0.0
        %1507 = vmatpush1.msra.mxu0 0.0
        %1508 = vmatprep.subr.mxu0 0.0
        %1509 = vmatpush1.msra.mxu0 0.0
        %1510 = vmatprep.subr.mxu0 0.0
        %1511 = vmatpush1.msra.mxu0 0.0
        %1512 = vmatprep.subr.mxu0 0.0
        %1513 = vmatpush1.msra.mxu0 0.0
        %1514 = vmatprep.subr.mxu0 0.0
        %1515 = vmatpush1.msra.mxu0 0.0
        %1516 = vmatprep.subr.mxu0 0.0
        %1517 = vmatpush1.msra.mxu0 0.0
        %1518 = vmatprep.subr.mxu0 0.0
        %1519 = vmatpush1.msra.mxu0 0.0
        %1520 = vmatprep.subr.mxu0 0.0
        %1521 = vmatpush1.msra.mxu0 0.0
        %1522 = vmatprep.mubr.f32.mxu0 0.0
        %1523 = vmatmul.mubr.f32.gmra.mrb[0].mxu0 %v1456
        %v1524 = vpop.f32.mrb[0].mxu0
        %v1525 = vadd.f32 0.0, %v1524
        %v1526 = vpop.f32.mrb[0].mxu0
        %1527 = vdwg.mxu0
        %1529 = vrot.lane.b32.xlu0 %v945, 120
        %v1530 = vpop.permute.xlu0 %1529
        %v1533 = vsel %vm948, %v1450, 0
        %1535 = vmatprep.subr.mxu0 0.0
        %1536 = vmatpush1.msra.mxu0 %v1530
        %1537 = vmatprep.subr.mxu0 0.0
        %1538 = vmatpush1.msra.mxu0 0.0
        %1539 = vmatprep.subr.mxu0 0.0
        %1540 = vmatpush1.msra.mxu0 0.0
        %1541 = vmatprep.subr.mxu0 0.0
        %1542 = vmatpush1.msra.mxu0 0.0
        %1543 = vmatprep.subr.mxu0 0.0
        %1544 = vmatpush1.msra.mxu0 0.0
        %1545 = vmatprep.subr.mxu0 0.0
        %1546 = vmatpush1.msra.mxu0 0.0
        %1547 = vmatprep.subr.mxu0 0.0
        %1548 = vmatpush1.msra.mxu0 0.0
        %1549 = vmatprep.subr.mxu0 0.0
        %1550 = vmatpush1.msra.mxu0 0.0
        %1551 = vmatprep.subr.mxu0 0.0
        %1552 = vmatpush1.msra.mxu0 0.0
        %1553 = vmatprep.subr.mxu0 0.0
        %1554 = vmatpush1.msra.mxu0 0.0
        %1555 = vmatprep.subr.mxu0 0.0
        %1556 = vmatpush1.msra.mxu0 0.0
        %1557 = vmatprep.subr.mxu0 0.0
        %1558 = vmatpush1.msra.mxu0 0.0
        %1559 = vmatprep.subr.mxu0 0.0
        %1560 = vmatpush1.msra.mxu0 0.0
        %1561 = vmatprep.subr.mxu0 0.0
        %1562 = vmatpush1.msra.mxu0 0.0
        %1563 = vmatprep.subr.mxu0 0.0
        %1564 = vmatpush1.msra.mxu0 0.0
        %1565 = vmatprep.subr.mxu0 0.0
        %1566 = vmatpush1.msra.mxu0 0.0
        %1567 = vmatprep.subr.mxu0 0.0
        %1568 = vmatpush1.msra.mxu0 0.0
        %1569 = vmatprep.subr.mxu0 0.0
        %1570 = vmatpush1.msra.mxu0 0.0
        %1571 = vmatprep.subr.mxu0 0.0
        %1572 = vmatpush1.msra.mxu0 0.0
        %1573 = vmatprep.subr.mxu0 0.0
        %1574 = vmatpush1.msra.mxu0 0.0
        %1575 = vmatprep.subr.mxu0 0.0
        %1576 = vmatpush1.msra.mxu0 0.0
        %1577 = vmatprep.subr.mxu0 0.0
        %1578 = vmatpush1.msra.mxu0 0.0
        %1579 = vmatprep.subr.mxu0 0.0
        %1580 = vmatpush1.msra.mxu0 0.0
        %1581 = vmatprep.subr.mxu0 0.0
        %1582 = vmatpush1.msra.mxu0 0.0
        %1583 = vmatprep.subr.mxu0 0.0
        %1584 = vmatpush1.msra.mxu0 0.0
        %1585 = vmatprep.subr.mxu0 0.0
        %1586 = vmatpush1.msra.mxu0 0.0
        %1587 = vmatprep.subr.mxu0 0.0
        %1588 = vmatpush1.msra.mxu0 0.0
        %1589 = vmatprep.subr.mxu0 0.0
        %1590 = vmatpush1.msra.mxu0 0.0
        %1591 = vmatprep.subr.mxu0 0.0
        %1592 = vmatpush1.msra.mxu0 0.0
        %1593 = vmatprep.subr.mxu0 0.0
        %1594 = vmatpush1.msra.mxu0 0.0
        %1595 = vmatprep.subr.mxu0 0.0
        %1596 = vmatpush1.msra.mxu0 0.0
        %1597 = vmatprep.subr.mxu0 0.0
        %1598 = vmatpush1.msra.mxu0 0.0
        %1599 = vmatprep.mubr.f32.mxu0 0.0
        %1600 = vmatmul.mubr.f32.gmra.mrb[0].mxu0 %v1533
        %v1601 = vpop.f32.mrb[0].mxu0
        %v1602 = vadd.f32 0.0, %v1601
        %v1603 = vpop.f32.mrb[0].mxu0
        %1604 = vdwg.mxu0
        %v1606 = vsel %vm948, %v1525, 0
        %v1609 = vsel %vm948, %v1602, 0
        %1611 = vmatprep.subr.mxu0 0.0
        %1612 = vmatpush1.msra.mxu0 %v713
        %1613 = vmatprep.subr.mxu0 0.0
        %1614 = vmatpush1.msra.mxu0 0.0
        %1615 = vmatprep.subr.mxu0 0.0
        %1616 = vmatpush1.msra.mxu0 0.0
        %1617 = vmatprep.subr.mxu0 0.0
        %1618 = vmatpush1.msra.mxu0 0.0
        %1619 = vmatprep.subr.mxu0 0.0
        %1620 = vmatpush1.msra.mxu0 0.0
        %1621 = vmatprep.subr.mxu0 0.0
        %1622 = vmatpush1.msra.mxu0 0.0
        %1623 = vmatprep.subr.mxu0 0.0
        %1624 = vmatpush1.msra.mxu0 0.0
        %1625 = vmatprep.subr.mxu0 0.0
        %1626 = vmatpush1.msra.mxu0 0.0
        %1627 = vmatprep.subr.mxu0 0.0
        %1628 = vmatpush1.msra.mxu0 0.0
        %1629 = vmatprep.subr.mxu0 0.0
        %1630 = vmatpush1.msra.mxu0 0.0
        %1631 = vmatprep.subr.mxu0 0.0
        %1632 = vmatpush1.msra.mxu0 0.0
        %1633 = vmatprep.subr.mxu0 0.0
        %1634 = vmatpush1.msra.mxu0 0.0
        %1635 = vmatprep.subr.mxu0 0.0
        %1636 = vmatpush1.msra.mxu0 0.0
        %1637 = vmatprep.subr.mxu0 0.0
        %1638 = vmatpush1.msra.mxu0 0.0
        %1639 = vmatprep.subr.mxu0 0.0
        %1640 = vmatpush1.msra.mxu0 0.0
        %1641 = vmatprep.subr.mxu0 0.0
        %1642 = vmatpush1.msra.mxu0 0.0
        %1643 = vmatprep.subr.mxu0 0.0
        %1644 = vmatpush1.msra.mxu0 0.0
        %1645 = vmatprep.subr.mxu0 0.0
        %1646 = vmatpush1.msra.mxu0 0.0
        %1647 = vmatprep.subr.mxu0 0.0
        %1648 = vmatpush1.msra.mxu0 0.0
        %1649 = vmatprep.subr.mxu0 0.0
        %1650 = vmatpush1.msra.mxu0 0.0
        %1651 = vmatprep.subr.mxu0 0.0
        %1652 = vmatpush1.msra.mxu0 0.0
        %1653 = vmatprep.subr.mxu0 0.0
        %1654 = vmatpush1.msra.mxu0 0.0
        %1655 = vmatprep.subr.mxu0 0.0
        %1656 = vmatpush1.msra.mxu0 0.0
        %1657 = vmatprep.subr.mxu0 0.0
        %1658 = vmatpush1.msra.mxu0 0.0
        %1659 = vmatprep.subr.mxu0 0.0
        %1660 = vmatpush1.msra.mxu0 0.0
        %1661 = vmatprep.subr.mxu0 0.0
        %1662 = vmatpush1.msra.mxu0 0.0
        %1663 = vmatprep.subr.mxu0 0.0
        %1664 = vmatpush1.msra.mxu0 0.0
        %1665 = vmatprep.subr.mxu0 0.0
        %1666 = vmatpush1.msra.mxu0 0.0
        %1667 = vmatprep.subr.mxu0 0.0
        %1668 = vmatpush1.msra.mxu0 0.0
        %1669 = vmatprep.subr.mxu0 0.0
        %1670 = vmatpush1.msra.mxu0 0.0
        %1671 = vmatprep.subr.mxu0 0.0
        %1672 = vmatpush1.msra.mxu0 0.0
        %1673 = vmatprep.subr.mxu0 0.0
        %1674 = vmatpush1.msra.mxu0 0.0
        %1675 = vmatprep.mubr.f32.mxu0 0.0
        %1676 = vmatmul.mubr.f32.gmra.mrb[0].mxu0 %v1606
        %v1677 = vpop.f32.mrb[0].mxu0
        %v1678 = vadd.f32 0.0, %v1677
        %v1679 = vpop.f32.mrb[0].mxu0
        %1680 = vmatprep.mubr.f32.mxu0 0.0
        %1681 = vmatmul.mubr.f32.gmra.mrb[0].mxu0 %v1609
        %v1682 = vpop.f32.mrb[0].mxu0
        %v1683 = vadd.f32 0.0, %v1682
        %v1684 = vpop.f32.mrb[0].mxu0
        %1685 = vdwg.mxu0
        %v1687 = vsel %vm948, %v1195, 0
        %v1690 = vsel %vm948, %v1268, 0
        %1692 = vmatprep.subr.mxu0 0.0
        %1693 = vmatpush1.msra.mxu0 %v712
        %1694 = vmatprep.subr.mxu0 0.0
        %1695 = vmatpush1.msra.mxu0 0.0
        %1696 = vmatprep.subr.mxu0 0.0
        %1697 = vmatpush1.msra.mxu0 0.0
        %1698 = vmatprep.subr.mxu0 0.0
        %1699 = vmatpush1.msra.mxu0 0.0
        %1700 = vmatprep.subr.mxu0 0.0
        %1701 = vmatpush1.msra.mxu0 0.0
        %1702 = vmatprep.subr.mxu0 0.0
        %1703 = vmatpush1.msra.mxu0 0.0
        %1704 = vmatprep.subr.mxu0 0.0
        %1705 = vmatpush1.msra.mxu0 0.0
        %1706 = vmatprep.subr.mxu0 0.0
        %1707 = vmatpush1.msra.mxu0 0.0
        %1708 = vmatprep.subr.mxu0 0.0
        %1709 = vmatpush1.msra.mxu0 0.0
        %1710 = vmatprep.subr.mxu0 0.0
        %1711 = vmatpush1.msra.mxu0 0.0
        %1712 = vmatprep.subr.mxu0 0.0
        %1713 = vmatpush1.msra.mxu0 0.0
        %1714 = vmatprep.subr.mxu0 0.0
        %1715 = vmatpush1.msra.mxu0 0.0
        %1716 = vmatprep.subr.mxu0 0.0
        %1717 = vmatpush1.msra.mxu0 0.0
        %1718 = vmatprep.subr.mxu0 0.0
        %1719 = vmatpush1.msra.mxu0 0.0
        %1720 = vmatprep.subr.mxu0 0.0
        %1721 = vmatpush1.msra.mxu0 0.0
        %1722 = vmatprep.subr.mxu0 0.0
        %1723 = vmatpush1.msra.mxu0 0.0
        %1724 = vmatprep.subr.mxu0 0.0
        %1725 = vmatpush1.msra.mxu0 0.0
        %1726 = vmatprep.subr.mxu0 0.0
        %1727 = vmatpush1.msra.mxu0 0.0
        %1728 = vmatprep.subr.mxu0 0.0
        %1729 = vmatpush1.msra.mxu0 0.0
        %1730 = vmatprep.subr.mxu0 0.0
        %1731 = vmatpush1.msra.mxu0 0.0
        %1732 = vmatprep.subr.mxu0 0.0
        %1733 = vmatpush1.msra.mxu0 0.0
        %1734 = vmatprep.subr.mxu0 0.0
        %1735 = vmatpush1.msra.mxu0 0.0
        %1736 = vmatprep.subr.mxu0 0.0
        %1737 = vmatpush1.msra.mxu0 0.0
        %1738 = vmatprep.subr.mxu0 0.0
        %1739 = vmatpush1.msra.mxu0 0.0
        %1740 = vmatprep.subr.mxu0 0.0
        %1741 = vmatpush1.msra.mxu0 0.0
        %1742 = vmatprep.subr.mxu0 0.0
        %1743 = vmatpush1.msra.mxu0 0.0
        %1744 = vmatprep.subr.mxu0 0.0
        %1745 = vmatpush1.msra.mxu0 0.0
        %1746 = vmatprep.subr.mxu0 0.0
        %1747 = vmatpush1.msra.mxu0 0.0
        %1748 = vmatprep.subr.mxu0 0.0
        %1749 = vmatpush1.msra.mxu0 0.0
        %1750 = vmatprep.subr.mxu0 0.0
        %1751 = vmatpush1.msra.mxu0 0.0
        %1752 = vmatprep.subr.mxu0 0.0
        %1753 = vmatpush1.msra.mxu0 0.0
        %1754 = vmatprep.subr.mxu0 0.0
        %1755 = vmatpush1.msra.mxu0 0.0
        %1756 = vmatprep.mubr.f32.mxu0 0.0
        %1757 = vmatmul.mubr.f32.gmra.mrb[0].mxu0 %v1687
        %v1758 = vpop.f32.mrb[0].mxu0
        %v1759 = vadd.f32 %v1678, %v1758
        %v1760 = vpop.f32.mrb[0].mxu0
        %1761 = vmatprep.mubr.f32.mxu0 0.0
        %1762 = vmatmul.mubr.f32.gmra.mrb[0].mxu0 %v1690
        %v1763 = vpop.f32.mrb[0].mxu0
        %v1764 = vadd.f32 %v1683, %v1763
        %v1765 = vpop.f32.mrb[0].mxu0
        %1766 = vdwg.mxu0
        %1767 = vrot.lane.b32.xlu0 %v790, 112
        %v1768 = vpop.permute.xlu0 %1767
        %1769 = vrot.lane.b32.xlu0 %v865, 112
        %v1770 = vpop.permute.xlu0 %1769
        %v1771 = vsel %vm948, %v1768, 0
        %v1773 = vsel %vm948, %v1770, 0
        %1775 = vmatprep.subr.mxu0 0.0
        %1776 = vmatpush1.xpose.msra.mxu0 %v1773
        %1777 = vmatprep.subr.mxu0 0.0
        %1778 = vmatpush1.xpose.msra.mxu0 0.0
        %1779 = vmatprep.subr.mxu0 0.0
        %1780 = vmatpush1.xpose.msra.mxu0 0.0
        %1781 = vmatprep.subr.mxu0 0.0
        %1782 = vmatpush1.xpose.msra.mxu0 0.0
        %1783 = vmatprep.subr.mxu0 0.0
        %1784 = vmatpush1.xpose.msra.mxu0 0.0
        %1785 = vmatprep.subr.mxu0 0.0
        %1786 = vmatpush1.xpose.msra.mxu0 0.0
        %1787 = vmatprep.subr.mxu0 0.0
        %1788 = vmatpush1.xpose.msra.mxu0 0.0
        %1789 = vmatprep.subr.mxu0 0.0
        %1790 = vmatpush1.xpose.msra.mxu0 0.0
        %1791 = vmatprep.subr.mxu0 0.0
        %1792 = vmatpush1.xpose.msra.mxu0 0.0
        %1793 = vmatprep.subr.mxu0 0.0
        %1794 = vmatpush1.xpose.msra.mxu0 0.0
        %1795 = vmatprep.subr.mxu0 0.0
        %1796 = vmatpush1.xpose.msra.mxu0 0.0
        %1797 = vmatprep.subr.mxu0 0.0
        %1798 = vmatpush1.xpose.msra.mxu0 0.0
        %1799 = vmatprep.subr.mxu0 0.0
        %1800 = vmatpush1.xpose.msra.mxu0 0.0
        %1801 = vmatprep.subr.mxu0 0.0
        %1802 = vmatpush1.xpose.msra.mxu0 0.0
        %1803 = vmatprep.subr.mxu0 0.0
        %1804 = vmatpush1.xpose.msra.mxu0 0.0
        %1805 = vmatprep.subr.mxu0 0.0
        %1806 = vmatpush1.xpose.msra.mxu0 0.0
        %1807 = vmatprep.subr.mxu0 0.0
        %1808 = vmatpush1.xpose.msra.mxu0 0.0
        %1809 = vmatprep.subr.mxu0 0.0
        %1810 = vmatpush1.xpose.msra.mxu0 0.0
        %1811 = vmatprep.subr.mxu0 0.0
        %1812 = vmatpush1.xpose.msra.mxu0 0.0
        %1813 = vmatprep.subr.mxu0 0.0
        %1814 = vmatpush1.xpose.msra.mxu0 0.0
        %1815 = vmatprep.subr.mxu0 0.0
        %1816 = vmatpush1.xpose.msra.mxu0 0.0
        %1817 = vmatprep.subr.mxu0 0.0
        %1818 = vmatpush1.xpose.msra.mxu0 0.0
        %1819 = vmatprep.subr.mxu0 0.0
        %1820 = vmatpush1.xpose.msra.mxu0 0.0
        %1821 = vmatprep.subr.mxu0 0.0
        %1822 = vmatpush1.xpose.msra.mxu0 0.0
        %1823 = vmatprep.subr.mxu0 0.0
        %1824 = vmatpush1.xpose.msra.mxu0 0.0
        %1825 = vmatprep.subr.mxu0 0.0
        %1826 = vmatpush1.xpose.msra.mxu0 0.0
        %1827 = vmatprep.subr.mxu0 0.0
        %1828 = vmatpush1.xpose.msra.mxu0 0.0
        %1829 = vmatprep.subr.mxu0 0.0
        %1830 = vmatpush1.xpose.msra.mxu0 0.0
        %1831 = vmatprep.subr.mxu0 0.0
        %1832 = vmatpush1.xpose.msra.mxu0 0.0
        %1833 = vmatprep.subr.mxu0 0.0
        %1834 = vmatpush1.xpose.msra.mxu0 0.0
        %1835 = vmatprep.subr.mxu0 0.0
        %1836 = vmatpush1.xpose.msra.mxu0 0.0
        %1837 = vmatprep.subr.mxu0 0.0
        %1838 = vmatpush1.xpose.msra.mxu0 0.0
        %1839 = vmatprep.mubr.f32.mxu0 0.0
        %1840 = vmatmul.mubr.f32.gmra.mrb[0].mxu0 %v1771
        %v1841 = vpop.f32.mrb[0].mxu0
        %v1842 = vadd.f32 0.0, %v1841
        %v1843 = vpop.f32.mrb[0].mxu0
        %1844 = vdwg.mxu0
        %1845 = vrot.lane.b32.xlu0 %v795, 112
        %v1846 = vpop.permute.xlu0 %1845
        %1847 = vrot.lane.b32.xlu0 %v870, 112
        %v1848 = vpop.permute.xlu0 %1847
        %v1849 = vsel %vm948, %v1846, 0
        %v1851 = vsel %vm948, %v1848, 0
        %1853 = vmatprep.subr.mxu0 0.0
        %1854 = vmatpush1.xpose.msra.mxu0 %v1851
        %1855 = vmatprep.subr.mxu0 0.0
        %1856 = vmatpush1.xpose.msra.mxu0 0.0
        %1857 = vmatprep.subr.mxu0 0.0
        %1858 = vmatpush1.xpose.msra.mxu0 0.0
        %1859 = vmatprep.subr.mxu0 0.0
        %1860 = vmatpush1.xpose.msra.mxu0 0.0
        %1861 = vmatprep.subr.mxu0 0.0
        %1862 = vmatpush1.xpose.msra.mxu0 0.0
        %1863 = vmatprep.subr.mxu0 0.0
        %1864 = vmatpush1.xpose.msra.mxu0 0.0
        %1865 = vmatprep.subr.mxu0 0.0
        %1866 = vmatpush1.xpose.msra.mxu0 0.0
        %1867 = vmatprep.subr.mxu0 0.0
        %1868 = vmatpush1.xpose.msra.mxu0 0.0
        %1869 = vmatprep.subr.mxu0 0.0
        %1870 = vmatpush1.xpose.msra.mxu0 0.0
        %1871 = vmatprep.subr.mxu0 0.0
        %1872 = vmatpush1.xpose.msra.mxu0 0.0
        %1873 = vmatprep.subr.mxu0 0.0
        %1874 = vmatpush1.xpose.msra.mxu0 0.0
        %1875 = vmatprep.subr.mxu0 0.0
        %1876 = vmatpush1.xpose.msra.mxu0 0.0
        %1877 = vmatprep.subr.mxu0 0.0
        %1878 = vmatpush1.xpose.msra.mxu0 0.0
        %1879 = vmatprep.subr.mxu0 0.0
        %1880 = vmatpush1.xpose.msra.mxu0 0.0
        %1881 = vmatprep.subr.mxu0 0.0
        %1882 = vmatpush1.xpose.msra.mxu0 0.0
        %1883 = vmatprep.subr.mxu0 0.0
        %1884 = vmatpush1.xpose.msra.mxu0 0.0
        %1885 = vmatprep.subr.mxu0 0.0
        %1886 = vmatpush1.xpose.msra.mxu0 0.0
        %1887 = vmatprep.subr.mxu0 0.0
        %1888 = vmatpush1.xpose.msra.mxu0 0.0
        %1889 = vmatprep.subr.mxu0 0.0
        %1890 = vmatpush1.xpose.msra.mxu0 0.0
        %1891 = vmatprep.subr.mxu0 0.0
        %1892 = vmatpush1.xpose.msra.mxu0 0.0
        %1893 = vmatprep.subr.mxu0 0.0
        %1894 = vmatpush1.xpose.msra.mxu0 0.0
        %1895 = vmatprep.subr.mxu0 0.0
        %1896 = vmatpush1.xpose.msra.mxu0 0.0
        %1897 = vmatprep.subr.mxu0 0.0
        %1898 = vmatpush1.xpose.msra.mxu0 0.0
        %1899 = vmatprep.subr.mxu0 0.0
        %1900 = vmatpush1.xpose.msra.mxu0 0.0
        %1901 = vmatprep.subr.mxu0 0.0
        %1902 = vmatpush1.xpose.msra.mxu0 0.0
        %1903 = vmatprep.subr.mxu0 0.0
        %1904 = vmatpush1.xpose.msra.mxu0 0.0
        %1905 = vmatprep.subr.mxu0 0.0
        %1906 = vmatpush1.xpose.msra.mxu0 0.0
        %1907 = vmatprep.subr.mxu0 0.0
        %1908 = vmatpush1.xpose.msra.mxu0 0.0
        %1909 = vmatprep.subr.mxu0 0.0
        %1910 = vmatpush1.xpose.msra.mxu0 0.0
        %1911 = vmatprep.subr.mxu0 0.0
        %1912 = vmatpush1.xpose.msra.mxu0 0.0
        %1913 = vmatprep.subr.mxu0 0.0
        %1914 = vmatpush1.xpose.msra.mxu0 0.0
        %1915 = vmatprep.subr.mxu0 0.0
        %1916 = vmatpush1.xpose.msra.mxu0 0.0
        %1917 = vmatprep.mubr.f32.mxu0 0.0
        %1918 = vmatmul.mubr.f32.gmra.mrb[0].mxu0 %v1849
        %v1919 = vpop.f32.mrb[0].mxu0
        %v1920 = vadd.f32 0.0, %v1919
        %v1921 = vpop.f32.mrb[0].mxu0
        %1922 = vdwg.mxu0
        %v1923 = vmul.f32 %v1842, 0.35355338
        %v1924 = vmul.f32 %v1920, 0.35355338
        %v1925 = vsel %vm948, %v1923, -inf
        %1926 = vmax.xlane.f32.xlu0 %v1925
        %v1927 = vpop.xlane.xlu0 %1926
        %v1928 = vsel %vm948, %v1924, -inf
        %1929 = vmax.xlane.f32.xlu0 %v1928
        %v1930 = vpop.xlane.xlu0 %1929
        %v1931 = vsub.f32 %v1923, %v1927
        %v1932 = vsub.f32 %v1924, %v1930
        %v1933 = vmul.f32 %v1931, 1.442695
        %v1934 = vpow.pop %v1933
        %v1935 = vmul.f32 %v1932, 1.442695
        %v1936 = vpow.pop %v1935
        %v1937 = vsel %vm948, %v1934, 0.0
        %1938 = vadd.xlane.f32.xlu0 %v1937
        %v1939 = vpop.xlane.xlu0 %1938
        %v1940 = vsel %vm948, %v1936, 0.0
        %1941 = vadd.xlane.f32.xlu0 %v1940
        %v1942 = vpop.xlane.xlu0 %1941
        %v1943 = vrcp.pop %v1939
        %v1944 = vmul.f32 %v1934, %v1943
        %v1945 = vrcp.pop %v1942
        %v1946 = vmul.f32 %v1936, %v1945
        %1947 = vrot.lane.b32.xlu0 %v940, 112
        %v1948 = vpop.permute.xlu0 %1947
        %v1951 = vsel %vm948, %v1944, 0
        %1953 = vmatprep.subr.mxu0 0.0
        %1954 = vmatpush1.msra.mxu0 %v1948
        %1955 = vmatprep.subr.mxu0 0.0
        %1956 = vmatpush1.msra.mxu0 0.0
        %1957 = vmatprep.subr.mxu0 0.0
        %1958 = vmatpush1.msra.mxu0 0.0
        %1959 = vmatprep.subr.mxu0 0.0
        %1960 = vmatpush1.msra.mxu0 0.0
        %1961 = vmatprep.subr.mxu0 0.0
        %1962 = vmatpush1.msra.mxu0 0.0
        %1963 = vmatprep.subr.mxu0 0.0
        %1964 = vmatpush1.msra.mxu0 0.0
        %1965 = vmatprep.subr.mxu0 0.0
        %1966 = vmatpush1.msra.mxu0 0.0
        %1967 = vmatprep.subr.mxu0 0.0
        %1968 = vmatpush1.msra.mxu0 0.0
        %1969 = vmatprep.subr.mxu0 0.0
        %1970 = vmatpush1.msra.mxu0 0.0
        %1971 = vmatprep.subr.mxu0 0.0
        %1972 = vmatpush1.msra.mxu0 0.0
        %1973 = vmatprep.subr.mxu0 0.0
        %1974 = vmatpush1.msra.mxu0 0.0
        %1975 = vmatprep.subr.mxu0 0.0
        %1976 = vmatpush1.msra.mxu0 0.0
        %1977 = vmatprep.subr.mxu0 0.0
        %1978 = vmatpush1.msra.mxu0 0.0
        %1979 = vmatprep.subr.mxu0 0.0
        %1980 = vmatpush1.msra.mxu0 0.0
        %1981 = vmatprep.subr.mxu0 0.0
        %1982 = vmatpush1.msra.mxu0 0.0
        %1983 = vmatprep.subr.mxu0 0.0
        %1984 = vmatpush1.msra.mxu0 0.0
        %1985 = vmatprep.subr.mxu0 0.0
        %1986 = vmatpush1.msra.mxu0 0.0
        %1987 = vmatprep.subr.mxu0 0.0
        %1988 = vmatpush1.msra.mxu0 0.0
        %1989 = vmatprep.subr.mxu0 0.0
        %1990 = vmatpush1.msra.mxu0 0.0
        %1991 = vmatprep.subr.mxu0 0.0
        %1992 = vmatpush1.msra.mxu0 0.0
        %1993 = vmatprep.subr.mxu0 0.0
        %1994 = vmatpush1.msra.mxu0 0.0
        %1995 = vmatprep.subr.mxu0 0.0
        %1996 = vmatpush1.msra.mxu0 0.0
        %1997 = vmatprep.subr.mxu0 0.0
        %1998 = vmatpush1.msra.mxu0 0.0
        %1999 = vmatprep.subr.mxu0 0.0
        %2000 = vmatpush1.msra.mxu0 0.0
        %2001 = vmatprep.subr.mxu0 0.0
        %2002 = vmatpush1.msra.mxu0 0.0
        %2003 = vmatprep.subr.mxu0 0.0
        %2004 = vmatpush1.msra.mxu0 0.0
        %2005 = vmatprep.subr.mxu0 0.0
        %2006 = vmatpush1.msra.mxu0 0.0
        %2007 = vmatprep.subr.mxu0 0.0
        %2008 = vmatpush1.msra.mxu0 0.0
        %2009 = vmatprep.subr.mxu0 0.0
        %2010 = vmatpush1.msra.mxu0 0.0
        %2011 = vmatprep.subr.mxu0 0.0
        %2012 = vmatpush1.msra.mxu0 0.0
        %2013 = vmatprep.subr.mxu0 0.0
        %2014 = vmatpush1.msra.mxu0 0.0
        %2015 = vmatprep.subr.mxu0 0.0
        %2016 = vmatpush1.msra.mxu0 0.0
        %2017 = vmatprep.mubr.f32.mxu0 0.0
        %2018 = vmatmul.mubr.f32.gmra.mrb[0].mxu0 %v1951
        %v2019 = vpop.f32.mrb[0].mxu0
        %v2020 = vadd.f32 0.0, %v2019
        %v2021 = vpop.f32.mrb[0].mxu0
        %2022 = vdwg.mxu0
        %2023 = vrot.lane.b32.xlu0 %v945, 112
        %v2024 = vpop.permute.xlu0 %2023
        %v2027 = vsel %vm948, %v1946, 0
        %2029 = vmatprep.subr.mxu0 0.0
        %2030 = vmatpush1.msra.mxu0 %v2024
        %2031 = vmatprep.subr.mxu0 0.0
        %2032 = vmatpush1.msra.mxu0 0.0
        %2033 = vmatprep.subr.mxu0 0.0
        %2034 = vmatpush1.msra.mxu0 0.0
        %2035 = vmatprep.subr.mxu0 0.0
        %2036 = vmatpush1.msra.mxu0 0.0
        %2037 = vmatprep.subr.mxu0 0.0
        %2038 = vmatpush1.msra.mxu0 0.0
        %2039 = vmatprep.subr.mxu0 0.0
        %2040 = vmatpush1.msra.mxu0 0.0
        %2041 = vmatprep.subr.mxu0 0.0
        %2042 = vmatpush1.msra.mxu0 0.0
        %2043 = vmatprep.subr.mxu0 0.0
        %2044 = vmatpush1.msra.mxu0 0.0
        %2045 = vmatprep.subr.mxu0 0.0
        %2046 = vmatpush1.msra.mxu0 0.0
        %2047 = vmatprep.subr.mxu0 0.0
        %2048 = vmatpush1.msra.mxu0 0.0
        %2049 = vmatprep.subr.mxu0 0.0
        %2050 = vmatpush1.msra.mxu0 0.0
        %2051 = vmatprep.subr.mxu0 0.0
        %2052 = vmatpush1.msra.mxu0 0.0
        %2053 = vmatprep.subr.mxu0 0.0
        %2054 = vmatpush1.msra.mxu0 0.0
        %2055 = vmatprep.subr.mxu0 0.0
        %2056 = vmatpush1.msra.mxu0 0.0
        %2057 = vmatprep.subr.mxu0 0.0
        %2058 = vmatpush1.msra.mxu0 0.0
        %2059 = vmatprep.subr.mxu0 0.0
        %2060 = vmatpush1.msra.mxu0 0.0
        %2061 = vmatprep.subr.mxu0 0.0
        %2062 = vmatpush1.msra.mxu0 0.0
        %2063 = vmatprep.subr.mxu0 0.0
        %2064 = vmatpush1.msra.mxu0 0.0
        %2065 = vmatprep.subr.mxu0 0.0
        %2066 = vmatpush1.msra.mxu0 0.0
        %2067 = vmatprep.subr.mxu0 0.0
        %2068 = vmatpush1.msra.mxu0 0.0
        %2069 = vmatprep.subr.mxu0 0.0
        %2070 = vmatpush1.msra.mxu0 0.0
        %2071 = vmatprep.subr.mxu0 0.0
        %2072 = vmatpush1.msra.mxu0 0.0
        %2073 = vmatprep.subr.mxu0 0.0
        %2074 = vmatpush1.msra.mxu0 0.0
        %2075 = vmatprep.subr.mxu0 0.0
        %2076 = vmatpush1.msra.mxu0 0.0
        %2077 = vmatprep.subr.mxu0 0.0
        %2078 = vmatpush1.msra.mxu0 0.0
        %2079 = vmatprep.subr.mxu0 0.0
        %2080 = vmatpush1.msra.mxu0 0.0
        %2081 = vmatprep.subr.mxu0 0.0
        %2082 = vmatpush1.msra.mxu0 0.0
        %2083 = vmatprep.subr.mxu0 0.0
        %2084 = vmatpush1.msra.mxu0 0.0
        %2085 = vmatprep.subr.mxu0 0.0
        %2086 = vmatpush1.msra.mxu0 0.0
        %2087 = vmatprep.subr.mxu0 0.0
        %2088 = vmatpush1.msra.mxu0 0.0
        %2089 = vmatprep.subr.mxu0 0.0
        %2090 = vmatpush1.msra.mxu0 0.0
        %2091 = vmatprep.subr.mxu0 0.0
        %2092 = vmatpush1.msra.mxu0 0.0
        %2093 = vmatprep.mubr.f32.mxu0 0.0
        %2094 = vmatmul.mubr.f32.gmra.mrb[0].mxu0 %v2027
        %v2095 = vpop.f32.mrb[0].mxu0
        %v2096 = vadd.f32 0.0, %v2095
        %v2097 = vpop.f32.mrb[0].mxu0
        %2098 = vdwg.mxu0
        %v2100 = vsel %vm948, %v2020, 0
        %v2103 = vsel %vm948, %v2096, 0
        %2105 = vmatprep.subr.mxu0 0.0
        %2106 = vmatpush1.msra.mxu0 %v714
        %2107 = vmatprep.subr.mxu0 0.0
        %2108 = vmatpush1.msra.mxu0 0.0
        %2109 = vmatprep.subr.mxu0 0.0
        %2110 = vmatpush1.msra.mxu0 0.0
        %2111 = vmatprep.subr.mxu0 0.0
        %2112 = vmatpush1.msra.mxu0 0.0
        %2113 = vmatprep.subr.mxu0 0.0
        %2114 = vmatpush1.msra.mxu0 0.0
        %2115 = vmatprep.subr.mxu0 0.0
        %2116 = vmatpush1.msra.mxu0 0.0
        %2117 = vmatprep.subr.mxu0 0.0
        %2118 = vmatpush1.msra.mxu0 0.0
        %2119 = vmatprep.subr.mxu0 0.0
        %2120 = vmatpush1.msra.mxu0 0.0
        %2121 = vmatprep.subr.mxu0 0.0
        %2122 = vmatpush1.msra.mxu0 0.0
        %2123 = vmatprep.subr.mxu0 0.0
        %2124 = vmatpush1.msra.mxu0 0.0
        %2125 = vmatprep.subr.mxu0 0.0
        %2126 = vmatpush1.msra.mxu0 0.0
        %2127 = vmatprep.subr.mxu0 0.0
        %2128 = vmatpush1.msra.mxu0 0.0
        %2129 = vmatprep.subr.mxu0 0.0
        %2130 = vmatpush1.msra.mxu0 0.0
        %2131 = vmatprep.subr.mxu0 0.0
        %2132 = vmatpush1.msra.mxu0 0.0
        %2133 = vmatprep.subr.mxu0 0.0
        %2134 = vmatpush1.msra.mxu0 0.0
        %2135 = vmatprep.subr.mxu0 0.0
        %2136 = vmatpush1.msra.mxu0 0.0
        %2137 = vmatprep.subr.mxu0 0.0
        %2138 = vmatpush1.msra.mxu0 0.0
        %2139 = vmatprep.subr.mxu0 0.0
        %2140 = vmatpush1.msra.mxu0 0.0
        %2141 = vmatprep.subr.mxu0 0.0
        %2142 = vmatpush1.msra.mxu0 0.0
        %2143 = vmatprep.subr.mxu0 0.0
        %2144 = vmatpush1.msra.mxu0 0.0
        %2145 = vmatprep.subr.mxu0 0.0
        %2146 = vmatpush1.msra.mxu0 0.0
        %2147 = vmatprep.subr.mxu0 0.0
        %2148 = vmatpush1.msra.mxu0 0.0
        %2149 = vmatprep.subr.mxu0 0.0
        %2150 = vmatpush1.msra.mxu0 0.0
        %2151 = vmatprep.subr.mxu0 0.0
        %2152 = vmatpush1.msra.mxu0 0.0
        %2153 = vmatprep.subr.mxu0 0.0
        %2154 = vmatpush1.msra.mxu0 0.0
        %2155 = vmatprep.subr.mxu0 0.0
        %2156 = vmatpush1.msra.mxu0 0.0
        %2157 = vmatprep.subr.mxu0 0.0
        %2158 = vmatpush1.msra.mxu0 0.0
        %2159 = vmatprep.subr.mxu0 0.0
        %2160 = vmatpush1.msra.mxu0 0.0
        %2161 = vmatprep.subr.mxu0 0.0
        %2162 = vmatpush1.msra.mxu0 0.0
        %2163 = vmatprep.subr.mxu0 0.0
        %2164 = vmatpush1.msra.mxu0 0.0
        %2165 = vmatprep.subr.mxu0 0.0
        %2166 = vmatpush1.msra.mxu0 0.0
        %2167 = vmatprep.subr.mxu0 0.0
        %2168 = vmatpush1.msra.mxu0 0.0
        %2169 = vmatprep.mubr.f32.mxu0 0.0
        %2170 = vmatmul.mubr.f32.gmra.mrb[0].mxu0 %v2100
        %v2171 = vpop.f32.mrb[0].mxu0
        %v2172 = vadd.f32 0.0, %v2171
        %v2173 = vpop.f32.mrb[0].mxu0
        %2174 = vmatprep.mubr.f32.mxu0 0.0
        %2175 = vmatmul.mubr.f32.gmra.mrb[0].mxu0 %v2103
        %v2176 = vpop.f32.mrb[0].mxu0
        %v2177 = vadd.f32 0.0, %v2176
        %v2178 = vpop.f32.mrb[0].mxu0
        %2179 = vdwg.mxu0
        %v2180 = vadd.f32 %v1759, %v2172
        %v2181 = vadd.f32 %v1764, %v2177
        %2182 = vrot.lane.b32.xlu0 %v790, 104
        %v2183 = vpop.permute.xlu0 %2182
        %2184 = vrot.lane.b32.xlu0 %v865, 104
        %v2185 = vpop.permute.xlu0 %2184
        %v2186 = vsel %vm948, %v2183, 0
        %v2188 = vsel %vm948, %v2185, 0
        %2190 = vmatprep.subr.mxu0 0.0
        %2191 = vmatpush1.xpose.msra.mxu0 %v2188
        %2192 = vmatprep.subr.mxu0 0.0
        %2193 = vmatpush1.xpose.msra.mxu0 0.0
        %2194 = vmatprep.subr.mxu0 0.0
        %2195 = vmatpush1.xpose.msra.mxu0 0.0
        %2196 = vmatprep.subr.mxu0 0.0
        %2197 = vmatpush1.xpose.msra.mxu0 0.0
        %2198 = vmatprep.subr.mxu0 0.0
        %2199 = vmatpush1.xpose.msra.mxu0 0.0
        %2200 = vmatprep.subr.mxu0 0.0
        %2201 = vmatpush1.xpose.msra.mxu0 0.0
        %2202 = vmatprep.subr.mxu0 0.0
        %2203 = vmatpush1.xpose.msra.mxu0 0.0
        %2204 = vmatprep.subr.mxu0 0.0
        %2205 = vmatpush1.xpose.msra.mxu0 0.0
        %2206 = vmatprep.subr.mxu0 0.0
        %2207 = vmatpush1.xpose.msra.mxu0 0.0
        %2208 = vmatprep.subr.mxu0 0.0
        %2209 = vmatpush1.xpose.msra.mxu0 0.0
        %2210 = vmatprep.subr.mxu0 0.0
        %2211 = vmatpush1.xpose.msra.mxu0 0.0
        %2212 = vmatprep.subr.mxu0 0.0
        %2213 = vmatpush1.xpose.msra.mxu0 0.0
        %2214 = vmatprep.subr.mxu0 0.0
        %2215 = vmatpush1.xpose.msra.mxu0 0.0
        %2216 = vmatprep.subr.mxu0 0.0
        %2217 = vmatpush1.xpose.msra.mxu0 0.0
        %2218 = vmatprep.subr.mxu0 0.0
        %2219 = vmatpush1.xpose.msra.mxu0 0.0
        %2220 = vmatprep.subr.mxu0 0.0
        %2221 = vmatpush1.xpose.msra.mxu0 0.0
        %2222 = vmatprep.subr.mxu0 0.0
        %2223 = vmatpush1.xpose.msra.mxu0 0.0
        %2224 = vmatprep.subr.mxu0 0.0
        %2225 = vmatpush1.xpose.msra.mxu0 0.0
        %2226 = vmatprep.subr.mxu0 0.0
        %2227 = vmatpush1.xpose.msra.mxu0 0.0
        %2228 = vmatprep.subr.mxu0 0.0
        %2229 = vmatpush1.xpose.msra.mxu0 0.0
        %2230 = vmatprep.subr.mxu0 0.0
        %2231 = vmatpush1.xpose.msra.mxu0 0.0
        %2232 = vmatprep.subr.mxu0 0.0
        %2233 = vmatpush1.xpose.msra.mxu0 0.0
        %2234 = vmatprep.subr.mxu0 0.0
        %2235 = vmatpush1.xpose.msra.mxu0 0.0
        %2236 = vmatprep.subr.mxu0 0.0
        %2237 = vmatpush1.xpose.msra.mxu0 0.0
        %2238 = vmatprep.subr.mxu0 0.0
        %2239 = vmatpush1.xpose.msra.mxu0 0.0
        %2240 = vmatprep.subr.mxu0 0.0
        %2241 = vmatpush1.xpose.msra.mxu0 0.0
        %2242 = vmatprep.subr.mxu0 0.0
        %2243 = vmatpush1.xpose.msra.mxu0 0.0
        %2244 = vmatprep.subr.mxu0 0.0
        %2245 = vmatpush1.xpose.msra.mxu0 0.0
        %2246 = vmatprep.subr.mxu0 0.0
        %2247 = vmatpush1.xpose.msra.mxu0 0.0
        %2248 = vmatprep.subr.mxu0 0.0
        %2249 = vmatpush1.xpose.msra.mxu0 0.0
        %2250 = vmatprep.subr.mxu0 0.0
        %2251 = vmatpush1.xpose.msra.mxu0 0.0
        %2252 = vmatprep.subr.mxu0 0.0
        %2253 = vmatpush1.xpose.msra.mxu0 0.0
        %2254 = vmatprep.mubr.f32.mxu0 0.0
        %2255 = vmatmul.mubr.f32.gmra.mrb[0].mxu0 %v2186
        %v2256 = vpop.f32.mrb[0].mxu0
        %v2257 = vadd.f32 0.0, %v2256
        %v2258 = vpop.f32.mrb[0].mxu0
        %2259 = vdwg.mxu0
        %2260 = vrot.lane.b32.xlu0 %v795, 104
        %v2261 = vpop.permute.xlu0 %2260
        %2262 = vrot.lane.b32.xlu0 %v870, 104
        %v2263 = vpop.permute.xlu0 %2262
        %v2264 = vsel %vm948, %v2261, 0
        %v2266 = vsel %vm948, %v2263, 0
        %2268 = vmatprep.subr.mxu0 0.0
        %2269 = vmatpush1.xpose.msra.mxu0 %v2266
        %2270 = vmatprep.subr.mxu0 0.0
        %2271 = vmatpush1.xpose.msra.mxu0 0.0
        %2272 = vmatprep.subr.mxu0 0.0
        %2273 = vmatpush1.xpose.msra.mxu0 0.0
        %2274 = vmatprep.subr.mxu0 0.0
        %2275 = vmatpush1.xpose.msra.mxu0 0.0
        %2276 = vmatprep.subr.mxu0 0.0
        %2277 = vmatpush1.xpose.msra.mxu0 0.0
        %2278 = vmatprep.subr.mxu0 0.0
        %2279 = vmatpush1.xpose.msra.mxu0 0.0
        %2280 = vmatprep.subr.mxu0 0.0
        %2281 = vmatpush1.xpose.msra.mxu0 0.0
        %2282 = vmatprep.subr.mxu0 0.0
        %2283 = vmatpush1.xpose.msra.mxu0 0.0
        %2284 = vmatprep.subr.mxu0 0.0
        %2285 = vmatpush1.xpose.msra.mxu0 0.0
        %2286 = vmatprep.subr.mxu0 0.0
        %2287 = vmatpush1.xpose.msra.mxu0 0.0
        %2288 = vmatprep.subr.mxu0 0.0
        %2289 = vmatpush1.xpose.msra.mxu0 0.0
        %2290 = vmatprep.subr.mxu0 0.0
        %2291 = vmatpush1.xpose.msra.mxu0 0.0
        %2292 = vmatprep.subr.mxu0 0.0
        %2293 = vmatpush1.xpose.msra.mxu0 0.0
        %2294 = vmatprep.subr.mxu0 0.0
        %2295 = vmatpush1.xpose.msra.mxu0 0.0
        %2296 = vmatprep.subr.mxu0 0.0
        %2297 = vmatpush1.xpose.msra.mxu0 0.0
        %2298 = vmatprep.subr.mxu0 0.0
        %2299 = vmatpush1.xpose.msra.mxu0 0.0
        %2300 = vmatprep.subr.mxu0 0.0
        %2301 = vmatpush1.xpose.msra.mxu0 0.0
        %2302 = vmatprep.subr.mxu0 0.0
        %2303 = vmatpush1.xpose.msra.mxu0 0.0
        %2304 = vmatprep.subr.mxu0 0.0
        %2305 = vmatpush1.xpose.msra.mxu0 0.0
        %2306 = vmatprep.subr.mxu0 0.0
        %2307 = vmatpush1.xpose.msra.mxu0 0.0
        %2308 = vmatprep.subr.mxu0 0.0
        %2309 = vmatpush1.xpose.msra.mxu0 0.0
        %2310 = vmatprep.subr.mxu0 0.0
        %2311 = vmatpush1.xpose.msra.mxu0 0.0
        %2312 = vmatprep.subr.mxu0 0.0
        %2313 = vmatpush1.xpose.msra.mxu0 0.0
        %2314 = vmatprep.subr.mxu0 0.0
        %2315 = vmatpush1.xpose.msra.mxu0 0.0
        %2316 = vmatprep.subr.mxu0 0.0
        %2317 = vmatpush1.xpose.msra.mxu0 0.0
        %2318 = vmatprep.subr.mxu0 0.0
        %2319 = vmatpush1.xpose.msra.mxu0 0.0
        %2320 = vmatprep.subr.mxu0 0.0
        %2321 = vmatpush1.xpose.msra.mxu0 0.0
        %2322 = vmatprep.subr.mxu0 0.0
        %2323 = vmatpush1.xpose.msra.mxu0 0.0
        %2324 = vmatprep.subr.mxu0 0.0
        %2325 = vmatpush1.xpose.msra.mxu0 0.0
        %2326 = vmatprep.subr.mxu0 0.0
        %2327 = vmatpush1.xpose.msra.mxu0 0.0
        %2328 = vmatprep.subr.mxu0 0.0
        %2329 = vmatpush1.xpose.msra.mxu0 0.0
        %2330 = vmatprep.subr.mxu0 0.0
        %2331 = vmatpush1.xpose.msra.mxu0 0.0
        %2332 = vmatprep.mubr.f32.mxu0 0.0
        %2333 = vmatmul.mubr.f32.gmra.mrb[0].mxu0 %v2264
        %v2334 = vpop.f32.mrb[0].mxu0
        %v2335 = vadd.f32 0.0, %v2334
        %v2336 = vpop.f32.mrb[0].mxu0
        %2337 = vdwg.mxu0
        %v2338 = vmul.f32 %v2257, 0.35355338
        %v2339 = vmul.f32 %v2335, 0.35355338
        %v2340 = vsel %vm948, %v2338, -inf
        %2341 = vmax.xlane.f32.xlu0 %v2340
        %v2342 = vpop.xlane.xlu0 %2341
        %v2343 = vsel %vm948, %v2339, -inf
        %2344 = vmax.xlane.f32.xlu0 %v2343
        %v2345 = vpop.xlane.xlu0 %2344
        %v2346 = vsub.f32 %v2338, %v2342
        %v2347 = vsub.f32 %v2339, %v2345
        %v2348 = vmul.f32 %v2346, 1.442695
        %v2349 = vpow.pop %v2348
        %v2350 = vmul.f32 %v2347, 1.442695
        %v2351 = vpow.pop %v2350
        %v2352 = vsel %vm948, %v2349, 0.0
        %2353 = vadd.xlane.f32.xlu0 %v2352
        %v2354 = vpop.xlane.xlu0 %2353
        %v2355 = vsel %vm948, %v2351, 0.0
        %2356 = vadd.xlane.f32.xlu0 %v2355
        %v2357 = vpop.xlane.xlu0 %2356
        %v2358 = vrcp.pop %v2354
        %v2359 = vmul.f32 %v2349, %v2358
        %v2360 = vrcp.pop %v2357
        %v2361 = vmul.f32 %v2351, %v2360
        %2362 = vrot.lane.b32.xlu0 %v940, 104
        %v2363 = vpop.permute.xlu0 %2362
        %v2366 = vsel %vm948, %v2359, 0
        %2368 = vmatprep.subr.mxu0 0.0
        %2369 = vmatpush1.msra.mxu0 %v2363
        %2370 = vmatprep.subr.mxu0 0.0
        %2371 = vmatpush1.msra.mxu0 0.0
        %2372 = vmatprep.subr.mxu0 0.0
        %2373 = vmatpush1.msra.mxu0 0.0
        %2374 = vmatprep.subr.mxu0 0.0
        %2375 = vmatpush1.msra.mxu0 0.0
        %2376 = vmatprep.subr.mxu0 0.0
        %2377 = vmatpush1.msra.mxu0 0.0
        %2378 = vmatprep.subr.mxu0 0.0
        %2379 = vmatpush1.msra.mxu0 0.0
        %2380 = vmatprep.subr.mxu0 0.0
        %2381 = vmatpush1.msra.mxu0 0.0
        %2382 = vmatprep.subr.mxu0 0.0
        %2383 = vmatpush1.msra.mxu0 0.0
        %2384 = vmatprep.subr.mxu0 0.0
        %2385 = vmatpush1.msra.mxu0 0.0
        %2386 = vmatprep.subr.mxu0 0.0
        %2387 = vmatpush1.msra.mxu0 0.0
        %2388 = vmatprep.subr.mxu0 0.0
        %2389 = vmatpush1.msra.mxu0 0.0
        %2390 = vmatprep.subr.mxu0 0.0
        %2391 = vmatpush1.msra.mxu0 0.0
        %2392 = vmatprep.subr.mxu0 0.0
        %2393 = vmatpush1.msra.mxu0 0.0
        %2394 = vmatprep.subr.mxu0 0.0
        %2395 = vmatpush1.msra.mxu0 0.0
        %2396 = vmatprep.subr.mxu0 0.0
        %2397 = vmatpush1.msra.mxu0 0.0
        %2398 = vmatprep.subr.mxu0 0.0
        %2399 = vmatpush1.msra.mxu0 0.0
        %2400 = vmatprep.subr.mxu0 0.0
        %2401 = vmatpush1.msra.mxu0 0.0
        %2402 = vmatprep.subr.mxu0 0.0
        %2403 = vmatpush1.msra.mxu0 0.0
        %2404 = vmatprep.subr.mxu0 0.0
        %2405 = vmatpush1.msra.mxu0 0.0
        %2406 = vmatprep.subr.mxu0 0.0
        %2407 = vmatpush1.msra.mxu0 0.0
        %2408 = vmatprep.subr.mxu0 0.0
        %2409 = vmatpush1.msra.mxu0 0.0
        %2410 = vmatprep.subr.mxu0 0.0
        %2411 = vmatpush1.msra.mxu0 0.0
        %2412 = vmatprep.subr.mxu0 0.0
        %2413 = vmatpush1.msra.mxu0 0.0
        %2414 = vmatprep.subr.mxu0 0.0
        %2415 = vmatpush1.msra.mxu0 0.0
        %2416 = vmatprep.subr.mxu0 0.0
        %2417 = vmatpush1.msra.mxu0 0.0
        %2418 = vmatprep.subr.mxu0 0.0
        %2419 = vmatpush1.msra.mxu0 0.0
        %2420 = vmatprep.subr.mxu0 0.0
        %2421 = vmatpush1.msra.mxu0 0.0
        %2422 = vmatprep.subr.mxu0 0.0
        %2423 = vmatpush1.msra.mxu0 0.0
        %2424 = vmatprep.subr.mxu0 0.0
        %2425 = vmatpush1.msra.mxu0 0.0
        %2426 = vmatprep.subr.mxu0 0.0
        %2427 = vmatpush1.msra.mxu0 0.0
        %2428 = vmatprep.subr.mxu0 0.0
        %2429 = vmatpush1.msra.mxu0 0.0
        %2430 = vmatprep.subr.mxu0 0.0
        %2431 = vmatpush1.msra.mxu0 0.0
        %2432 = vmatprep.mubr.f32.mxu0 0.0
        %2433 = vmatmul.mubr.f32.gmra.mrb[0].mxu0 %v2366
        %v2434 = vpop.f32.mrb[0].mxu0
        %v2435 = vadd.f32 0.0, %v2434
        %v2436 = vpop.f32.mrb[0].mxu0
        %2437 = vdwg.mxu0
        %2438 = vrot.lane.b32.xlu0 %v945, 104
        %v2439 = vpop.permute.xlu0 %2438
        %v2442 = vsel %vm948, %v2361, 0
        %2444 = vmatprep.subr.mxu0 0.0
        %2445 = vmatpush1.msra.mxu0 %v2439
        %2446 = vmatprep.subr.mxu0 0.0
        %2447 = vmatpush1.msra.mxu0 0.0
        %2448 = vmatprep.subr.mxu0 0.0
        %2449 = vmatpush1.msra.mxu0 0.0
        %2450 = vmatprep.subr.mxu0 0.0
        %2451 = vmatpush1.msra.mxu0 0.0
        %2452 = vmatprep.subr.mxu0 0.0
        %2453 = vmatpush1.msra.mxu0 0.0
        %2454 = vmatprep.subr.mxu0 0.0
        %2455 = vmatpush1.msra.mxu0 0.0
        %2456 = vmatprep.subr.mxu0 0.0
        %2457 = vmatpush1.msra.mxu0 0.0
        %2458 = vmatprep.subr.mxu0 0.0
        %2459 = vmatpush1.msra.mxu0 0.0
        %2460 = vmatprep.subr.mxu0 0.0
        %2461 = vmatpush1.msra.mxu0 0.0
        %2462 = vmatprep.subr.mxu0 0.0
        %2463 = vmatpush1.msra.mxu0 0.0
        %2464 = vmatprep.subr.mxu0 0.0
        %2465 = vmatpush1.msra.mxu0 0.0
        %2466 = vmatprep.subr.mxu0 0.0
        %2467 = vmatpush1.msra.mxu0 0.0
        %2468 = vmatprep.subr.mxu0 0.0
        %2469 = vmatpush1.msra.mxu0 0.0
        %2470 = vmatprep.subr.mxu0 0.0
        %2471 = vmatpush1.msra.mxu0 0.0
        %2472 = vmatprep.subr.mxu0 0.0
        %2473 = vmatpush1.msra.mxu0 0.0
        %2474 = vmatprep.subr.mxu0 0.0
        %2475 = vmatpush1.msra.mxu0 0.0
        %2476 = vmatprep.subr.mxu0 0.0
        %2477 = vmatpush1.msra.mxu0 0.0
        %2478 = vmatprep.subr.mxu0 0.0
        %2479 = vmatpush1.msra.mxu0 0.0
        %2480 = vmatprep.subr.mxu0 0.0
        %2481 = vmatpush1.msra.mxu0 0.0
        %2482 = vmatprep.subr.mxu0 0.0
        %2483 = vmatpush1.msra.mxu0 0.0
        %2484 = vmatprep.subr.mxu0 0.0
        %2485 = vmatpush1.msra.mxu0 0.0
        %2486 = vmatprep.subr.mxu0 0.0
        %2487 = vmatpush1.msra.mxu0 0.0
        %2488 = vmatprep.subr.mxu0 0.0
        %2489 = vmatpush1.msra.mxu0 0.0
        %2490 = vmatprep.subr.mxu0 0.0
        %2491 = vmatpush1.msra.mxu0 0.0
        %2492 = vmatprep.subr.mxu0 0.0
        %2493 = vmatpush1.msra.mxu0 0.0
        %2494 = vmatprep.subr.mxu0 0.0
        %2495 = vmatpush1.msra.mxu0 0.0
        %2496 = vmatprep.subr.mxu0 0.0
        %2497 = vmatpush1.msra.mxu0 0.0
        %2498 = vmatprep.subr.mxu0 0.0
        %2499 = vmatpush1.msra.mxu0 0.0
        %2500 = vmatprep.subr.mxu0 0.0
        %2501 = vmatpush1.msra.mxu0 0.0
        %2502 = vmatprep.subr.mxu0 0.0
        %2503 = vmatpush1.msra.mxu0 0.0
        %2504 = vmatprep.subr.mxu0 0.0
        %2505 = vmatpush1.msra.mxu0 0.0
        %2506 = vmatprep.subr.mxu0 0.0
        %2507 = vmatpush1.msra.mxu0 0.0
        %2508 = vmatprep.mubr.f32.mxu0 0.0
        %2509 = vmatmul.mubr.f32.gmra.mrb[0].mxu0 %v2442
        %v2510 = vpop.f32.mrb[0].mxu0
        %v2511 = vadd.f32 0.0, %v2510
        %v2512 = vpop.f32.mrb[0].mxu0
        %2513 = vdwg.mxu0
        %v2515 = vsel %vm948, %v2435, 0
        %v2518 = vsel %vm948, %v2511, 0
        %2520 = vmatprep.subr.mxu0 0.0
        %2521 = vmatpush1.msra.mxu0 %v715
        %2522 = vmatprep.subr.mxu0 0.0
        %2523 = vmatpush1.msra.mxu0 0.0
        %2524 = vmatprep.subr.mxu0 0.0
        %2525 = vmatpush1.msra.mxu0 0.0
        %2526 = vmatprep.subr.mxu0 0.0
        %2527 = vmatpush1.msra.mxu0 0.0
        %2528 = vmatprep.subr.mxu0 0.0
        %2529 = vmatpush1.msra.mxu0 0.0
        %2530 = vmatprep.subr.mxu0 0.0
        %2531 = vmatpush1.msra.mxu0 0.0
        %2532 = vmatprep.subr.mxu0 0.0
        %2533 = vmatpush1.msra.mxu0 0.0
        %2534 = vmatprep.subr.mxu0 0.0
        %2535 = vmatpush1.msra.mxu0 0.0
        %2536 = vmatprep.subr.mxu0 0.0
        %2537 = vmatpush1.msra.mxu0 0.0
        %2538 = vmatprep.subr.mxu0 0.0
        %2539 = vmatpush1.msra.mxu0 0.0
        %2540 = vmatprep.subr.mxu0 0.0
        %2541 = vmatpush1.msra.mxu0 0.0
        %2542 = vmatprep.subr.mxu0 0.0
        %2543 = vmatpush1.msra.mxu0 0.0
        %2544 = vmatprep.subr.mxu0 0.0
        %2545 = vmatpush1.msra.mxu0 0.0
        %2546 = vmatprep.subr.mxu0 0.0
        %2547 = vmatpush1.msra.mxu0 0.0
        %2548 = vmatprep.subr.mxu0 0.0
        %2549 = vmatpush1.msra.mxu0 0.0
        %2550 = vmatprep.subr.mxu0 0.0
        %2551 = vmatpush1.msra.mxu0 0.0
        %2552 = vmatprep.subr.mxu0 0.0
        %2553 = vmatpush1.msra.mxu0 0.0
        %2554 = vmatprep.subr.mxu0 0.0
        %2555 = vmatpush1.msra.mxu0 0.0
        %2556 = vmatprep.subr.mxu0 0.0
        %2557 = vmatpush1.msra.mxu0 0.0
        %2558 = vmatprep.subr.mxu0 0.0
        %2559 = vmatpush1.msra.mxu0 0.0
        %2560 = vmatprep.subr.mxu0 0.0
        %2561 = vmatpush1.msra.mxu0 0.0
        %2562 = vmatprep.subr.mxu0 0.0
        %2563 = vmatpush1.msra.mxu0 0.0
        %2564 = vmatprep.subr.mxu0 0.0
        %2565 = vmatpush1.msra.mxu0 0.0
        %2566 = vmatprep.subr.mxu0 0.0
        %2567 = vmatpush1.msra.mxu0 0.0
        %2568 = vmatprep.subr.mxu0 0.0
        %2569 = vmatpush1.msra.mxu0 0.0
        %2570 = vmatprep.subr.mxu0 0.0
        %2571 = vmatpush1.msra.mxu0 0.0
        %2572 = vmatprep.subr.mxu0 0.0
        %2573 = vmatpush1.msra.mxu0 0.0
        %2574 = vmatprep.subr.mxu0 0.0
        %2575 = vmatpush1.msra.mxu0 0.0
        %2576 = vmatprep.subr.mxu0 0.0
        %2577 = vmatpush1.msra.mxu0 0.0
        %2578 = vmatprep.subr.mxu0 0.0
        %2579 = vmatpush1.msra.mxu0 0.0
        %2580 = vmatprep.subr.mxu0 0.0
        %2581 = vmatpush1.msra.mxu0 0.0
        %2582 = vmatprep.subr.mxu0 0.0
        %2583 = vmatpush1.msra.mxu0 0.0
        %2584 = vmatprep.mubr.f32.mxu0 0.0
        %2585 = vmatmul.mubr.f32.gmra.mrb[0].mxu0 %v2515
        %v2586 = vpop.f32.mrb[0].mxu0
        %v2587 = vadd.f32 0.0, %v2586
        %v2588 = vpop.f32.mrb[0].mxu0
        %2589 = vmatprep.mubr.f32.mxu0 0.0
        %2590 = vmatmul.mubr.f32.gmra.mrb[0].mxu0 %v2518
        %v2591 = vpop.f32.mrb[0].mxu0
        %v2592 = vadd.f32 0.0, %v2591
        %v2593 = vpop.f32.mrb[0].mxu0
        %2594 = vdwg.mxu0
        %v2595 = vadd.f32 %v2180, %v2587
        %v2596 = vadd.f32 %v2181, %v2592
        %v2597 = vadd.f32 %v698, %v2595
        %v2598 = vadd.f32 %v699, %v2596
        %v2599 = vsel %vm716, %v2597, 0.0
        %2600 = vadd.xlane.f32.xlu0 %v2599
        %v2601 = vpop.xlane.xlu0 %2600
        %v2602 = vsel %vm716, %v2598, 0.0
        %2603 = vadd.xlane.f32.xlu0 %v2602
        %v2604 = vpop.xlane.xlu0 %2603
        %v2605 = vrcp.pop 32.0
        %v2606 = vmul.f32 %v2601, %v2605
        %v2607 = vmul.f32 %v2604, %v2605
        %v2608 = vsub.f32 %v2597, %v2606
        %v2609 = vsub.f32 %v2598, %v2607
        %v2610 = vmul.f32 %v2608, %v2608
        %v2611 = vmul.f32 %v2609, %v2609
        %v2612 = vsel %vm716, %v2610, 0.0
        %2613 = vadd.xlane.f32.xlu0 %v2612
        %v2614 = vpop.xlane.xlu0 %2613
        %v2615 = vsel %vm716, %v2611, 0.0
        %2616 = vadd.xlane.f32.xlu0 %v2615
        %v2617 = vpop.xlane.xlu0 %2616
        %v2618 = vmul.f32 %v2614, %v2605
        %v2619 = vmul.f32 %v2617, %v2605
        %v2620 = vadd.f32 %v2618, 1e-05
        %v2621 = vadd.f32 %v2619, 1e-05
        %v2622 = vrsqrt.pop %v2620
        %v2623 = vrsqrt.pop %v2621
        %v2624 = vmul.f32 %v2608, %v2622
        %v2625 = vmul.f32 %v2609, %v2623
        %v2626 = vld [vmem:[%s679] sm:$0x1]
        %v2628 = vlaneseq
        %v2629 = vshrl.u32 %v2628, 7
        %v2630 = vsub.s32 0, %v2629
        %v2631 = vrot.slane %v2626, %v2630
        %v2633 = vmul.f32 %v2624, %v2631
        %v2634 = vmul.f32 %v2625, %v2631
        %v2635 = vld [vmem:[%s682] sm:$0x1]
        %v2637 = vlaneseq
        %v2638 = vshrl.u32 %v2637, 7
        %v2639 = vsub.s32 0, %v2638
        %v2640 = vrot.slane %v2635, %v2639
        %v2642 = vadd.f32 %v2633, %v2640
        %v2643 = vadd.f32 %v2634, %v2640
        %v2644 = vld [vmem:[%s569] sm:$0xff]
        %v2645 = vld [vmem:[%s569 + $0x8] sm:$0xff]
        %v2646 = vld [vmem:[%s569 + $0x10] sm:$0xff]
        %v2647 = vld [vmem:[%s569 + $0x18] sm:$0xff]
        %v2648 = vld [vmem:[%s668] sm:$0x1]
        %v2650 = vlaneseq
        %v2651 = vshrl.u32 %v2650, 7
        %v2652 = vsub.s32 0, %v2651
        %v2653 = vrot.slane %v2648, %v2652
        %v2656 = vsel %vm716, %v2642, 0
        %v2659 = vsel %vm716, %v2643, 0
        %2661 = vmatprep.subr.mxu0 0.0
        %2662 = vmatpush1.msra.mxu0 %v2644
        %2663 = vmatprep.subr.mxu0 0.0
        %2664 = vmatpush1.msra.mxu0 %v2645
        %2665 = vmatprep.subr.mxu0 0.0
        %2666 = vmatpush1.msra.mxu0 %v2646
        %2667 = vmatprep.subr.mxu0 0.0
        %2668 = vmatpush1.msra.mxu0 %v2647
        %2669 = vmatprep.subr.mxu0 0.0
        %2670 = vmatpush1.msra.mxu0 0.0
        %2671 = vmatprep.subr.mxu0 0.0
        %2672 = vmatpush1.msra.mxu0 0.0
        %2673 = vmatprep.subr.mxu0 0.0
        %2674 = vmatpush1.msra.mxu0 0.0
        %2675 = vmatprep.subr.mxu0 0.0
        %2676 = vmatpush1.msra.mxu0 0.0
        %2677 = vmatprep.subr.mxu0 0.0
        %2678 = vmatpush1.msra.mxu0 0.0
        %2679 = vmatprep.subr.mxu0 0.0
        %2680 = vmatpush1.msra.mxu0 0.0
        %2681 = vmatprep.subr.mxu0 0.0
        %2682 = vmatpush1.msra.mxu0 0.0
        %2683 = vmatprep.subr.mxu0 0.0
        %2684 = vmatpush1.msra.mxu0 0.0
        %2685 = vmatprep.subr.mxu0 0.0
        %2686 = vmatpush1.msra.mxu0 0.0
        %2687 = vmatprep.subr.mxu0 0.0
        %2688 = vmatpush1.msra.mxu0 0.0
        %2689 = vmatprep.subr.mxu0 0.0
        %2690 = vmatpush1.msra.mxu0 0.0
        %2691 = vmatprep.subr.mxu0 0.0
        %2692 = vmatpush1.msra.mxu0 0.0
        %2693 = vmatprep.subr.mxu0 0.0
        %2694 = vmatpush1.msra.mxu0 0.0
        %2695 = vmatprep.subr.mxu0 0.0
        %2696 = vmatpush1.msra.mxu0 0.0
        %2697 = vmatprep.subr.mxu0 0.0
        %2698 = vmatpush1.msra.mxu0 0.0
        %2699 = vmatprep.subr.mxu0 0.0
        %2700 = vmatpush1.msra.mxu0 0.0
        %2701 = vmatprep.subr.mxu0 0.0
        %2702 = vmatpush1.msra.mxu0 0.0
        %2703 = vmatprep.subr.mxu0 0.0
        %2704 = vmatpush1.msra.mxu0 0.0
        %2705 = vmatprep.subr.mxu0 0.0
        %2706 = vmatpush1.msra.mxu0 0.0
        %2707 = vmatprep.subr.mxu0 0.0
        %2708 = vmatpush1.msra.mxu0 0.0
        %2709 = vmatprep.subr.mxu0 0.0
        %2710 = vmatpush1.msra.mxu0 0.0
        %2711 = vmatprep.subr.mxu0 0.0
        %2712 = vmatpush1.msra.mxu0 0.0
        %2713 = vmatprep.subr.mxu0 0.0
        %2714 = vmatpush1.msra.mxu0 0.0
        %2715 = vmatprep.subr.mxu0 0.0
        %2716 = vmatpush1.msra.mxu0 0.0
        %2717 = vmatprep.subr.mxu0 0.0
        %2718 = vmatpush1.msra.mxu0 0.0
        %2719 = vmatprep.subr.mxu0 0.0
        %2720 = vmatpush1.msra.mxu0 0.0
        %2721 = vmatprep.subr.mxu0 0.0
        %2722 = vmatpush1.msra.mxu0 0.0
        %2723 = vmatprep.subr.mxu0 0.0
        %2724 = vmatpush1.msra.mxu0 0.0
        %2725 = vmatprep.mubr.f32.mxu0 0.0
        %2726 = vmatmul.mubr.f32.gmra.mrb[0].mxu0 %v2656
        %v2727 = vpop.f32.mrb[0].mxu0
        %v2728 = vadd.f32 %v2653, %v2727
        %v2729 = vpop.f32.mrb[0].mxu0
        %2730 = vmatprep.mubr.f32.mxu0 0.0
        %2731 = vmatmul.mubr.f32.gmra.mrb[0].mxu0 %v2659
        %v2732 = vpop.f32.mrb[0].mxu0
        %v2733 = vadd.f32 %v2653, %v2732
        %v2734 = vpop.f32.mrb[0].mxu0
        %2735 = vdwg.mxu0
        %v2736 = vmul.f32 %v2728, 0.5
        %v2737 = vmul.f32 %v2733, 0.5
        %v2738 = vmul.f32 %v2728, 0.70710677
        %v2739 = vmul.f32 %v2733, 0.70710677
        %v2740 = verf.f32.pop %v2738
        %v2741 = verf.f32.pop %v2739
        %v2742 = vadd.f32 %v2740, 1.0
        %v2743 = vadd.f32 %v2741, 1.0
        %v2744 = vmul.f32 %v2736, %v2742
        %v2745 = vmul.f32 %v2737, %v2743
        %v2746 = vld [vmem:[%s673] sm:$0xff]
        %v2747 = vld [vmem:[%s673 + $0x8] sm:$0xff]
        %v2748 = vld [vmem:[%s673 + $0x10] sm:$0xff]
        %v2749 = vld [vmem:[%s673 + $0x18] sm:$0xff]
        %v2750 = vld [vmem:[%s673 + $0x20] sm:$0xff]
        %v2751 = vld [vmem:[%s673 + $0x28] sm:$0xff]
        %v2752 = vld [vmem:[%s673 + $0x30] sm:$0xff]
        %v2753 = vld [vmem:[%s673 + $0x38] sm:$0xff]
        %v2754 = vld [vmem:[%s676] sm:$0x1]
        %v2756 = vlaneseq
        %v2757 = vshrl.u32 %v2756, 7
        %v2758 = vsub.s32 0, %v2757
        %v2759 = vrot.slane %v2754, %v2758
        %vm2761 = vcmask 523264
        %v2763 = vsel %vm2761, %v2744, 0
        %v2766 = vsel %vm2761, %v2745, 0
        %2768 = vmatprep.subr.mxu0 0.0
        %2769 = vmatpush1.msra.mxu0 %v2746
        %2770 = vmatprep.subr.mxu0 0.0
        %2771 = vmatpush1.msra.mxu0 %v2747
        %2772 = vmatprep.subr.mxu0 0.0
        %2773 = vmatpush1.msra.mxu0 %v2748
        %2774 = vmatprep.subr.mxu0 0.0
        %2775 = vmatpush1.msra.mxu0 %v2749
        %2776 = vmatprep.subr.mxu0 0.0
        %2777 = vmatpush1.msra.mxu0 %v2750
        %2778 = vmatprep.subr.mxu0 0.0
        %2779 = vmatpush1.msra.mxu0 %v2751
        %2780 = vmatprep.subr.mxu0 0.0
        %2781 = vmatpush1.msra.mxu0 %v2752
        %2782 = vmatprep.subr.mxu0 0.0
        %2783 = vmatpush1.msra.mxu0 %v2753
        %2784 = vmatprep.subr.mxu0 0.0
        %2785 = vmatpush1.msra.mxu0 0.0
        %2786 = vmatprep.subr.mxu0 0.0
        %2787 = vmatpush1.msra.mxu0 0.0
        %2788 = vmatprep.subr.mxu0 0.0
        %2789 = vmatpush1.msra.mxu0 0.0
        %2790 = vmatprep.subr.mxu0 0.0
        %2791 = vmatpush1.msra.mxu0 0.0
        %2792 = vmatprep.subr.mxu0 0.0
        %2793 = vmatpush1.msra.mxu0 0.0
        %2794 = vmatprep.subr.mxu0 0.0
        %2795 = vmatpush1.msra.mxu0 0.0
        %2796 = vmatprep.subr.mxu0 0.0
        %2797 = vmatpush1.msra.mxu0 0.0
        %2798 = vmatprep.subr.mxu0 0.0
        %2799 = vmatpush1.msra.mxu0 0.0
        %2800 = vmatprep.subr.mxu0 0.0
        %2801 = vmatpush1.msra.mxu0 0.0
        %2802 = vmatprep.subr.mxu0 0.0
        %2803 = vmatpush1.msra.mxu0 0.0
        %2804 = vmatprep.subr.mxu0 0.0
        %2805 = vmatpush1.msra.mxu0 0.0
        %2806 = vmatprep.subr.mxu0 0.0
        %2807 = vmatpush1.msra.mxu0 0.0
        %2808 = vmatprep.subr.mxu0 0.0
        %2809 = vmatpush1.msra.mxu0 0.0
        %2810 = vmatprep.subr.mxu0 0.0
        %2811 = vmatpush1.msra.mxu0 0.0
        %2812 = vmatprep.subr.mxu0 0.0
        %2813 = vmatpush1.msra.mxu0 0.0
        %2814 = vmatprep.subr.mxu0 0.0
        %2815 = vmatpush1.msra.mxu0 0.0
        %2816 = vmatprep.subr.mxu0 0.0
        %2817 = vmatpush1.msra.mxu0 0.0
        %2818 = vmatprep.subr.mxu0 0.0
        %2819 = vmatpush1.msra.mxu0 0.0
        %2820 = vmatprep.subr.mxu0 0.0
        %2821 = vmatpush1.msra.mxu0 0.0
        %2822 = vmatprep.subr.mxu0 0.0
        %2823 = vmatpush1.msra.mxu0 0.0
        %2824 = vmatprep.subr.mxu0 0.0
        %2825 = vmatpush1.msra.mxu0 0.0
        %2826 = vmatprep.subr.mxu0 0.0
        %2827 = vmatpush1.msra.mxu0 0.0
        %2828 = vmatprep.subr.mxu0 0.0
        %2829 = vmatpush1.msra.mxu0 0.0
        %2830 = vmatprep.subr.mxu0 0.0
        %2831 = vmatpush1.msra.mxu0 0.0
        %2832 = vmatprep.mubr.f32.mxu0 0.0
        %2833 = vmatmul.mubr.f32.gmra.mrb[0].mxu0 %v2763
        %v2834 = vpop.f32.mrb[0].mxu0
        %v2835 = vadd.f32 %v2759, %v2834
        %v2836 = vpop.f32.mrb[0].mxu0
        %2837 = vmatprep.mubr.f32.mxu0 0.0
        %2838 = vmatmul.mubr.f32.gmra.mrb[0].mxu0 %v2766
        %v2839 = vpop.f32.mrb[0].mxu0
        %v2840 = vadd.f32 %v2759, %v2839
        %v2841 = vpop.f32.mrb[0].mxu0
        %2842 = vdwg.mxu0
        %v2843 = vadd.f32 %v2597, %v2835
        %v2844 = vadd.f32 %v2598, %v2840
        %v2845 = vsel %vm716, %v2843, 0.0
        %2846 = vadd.xlane.f32.xlu0 %v2845
        %v2847 = vpop.xlane.xlu0 %2846
        %v2848 = vsel %vm716, %v2844, 0.0
        %2849 = vadd.xlane.f32.xlu0 %v2848
        %v2850 = vpop.xlane.xlu0 %2849
        %v2851 = vmul.f32 %v2847, %v2605
        %v2852 = vmul.f32 %v2850, %v2605
        %v2853 = vsub.f32 %v2843, %v2851
        %v2854 = vsub.f32 %v2844, %v2852
        %v2855 = vmul.f32 %v2853, %v2853
        %v2856 = vmul.f32 %v2854, %v2854
        %v2857 = vsel %vm716, %v2855, 0.0
        %2858 = vadd.xlane.f32.xlu0 %v2857
        %v2859 = vpop.xlane.xlu0 %2858
        %v2860 = vsel %vm716, %v2856, 0.0
        %2861 = vadd.xlane.f32.xlu0 %v2860
        %v2862 = vpop.xlane.xlu0 %2861
        %v2863 = vmul.f32 %v2859, %v2605
        %v2864 = vmul.f32 %v2862, %v2605
        %v2865 = vadd.f32 %v2863, 1e-05
        %v2866 = vadd.f32 %v2864, 1e-05
        %v2867 = vrsqrt.pop %v2865
        %v2868 = vrsqrt.pop %v2866
        %v2869 = vmul.f32 %v2853, %v2867
        %v2870 = vmul.f32 %v2854, %v2868
        %v2871 = vld [vmem:[%s685] sm:$0x1]
        %v2873 = vlaneseq
        %v2874 = vshrl.u32 %v2873, 7
        %v2875 = vsub.s32 0, %v2874
        %v2876 = vrot.slane %v2871, %v2875
        %v2878 = vmul.f32 %v2869, %v2876
        %v2879 = vmul.f32 %v2870, %v2876
        %v2880 = vld [vmem:[%s688] sm:$0x1]
        %v2882 = vlaneseq
        %v2883 = vshrl.u32 %v2882, 7
        %v2884 = vsub.s32 0, %v2883
        %v2885 = vrot.slane %v2880, %v2884
        %v2887 = vadd.f32 %v2878, %v2885
        %v2888 = vadd.f32 %v2879, %v2885
        %2889 = vst.msk [vmem:[#allocation2] sm:$0xff] %vm716, %v2887
        %2890 = vst.msk [vmem:[#allocation2 + $0x8] sm:$0xff] %vm716, %v2888
        %p2891 = scmp.eq.s32.totalorder %s34, 1
        // Predicated region
        $region89: #{tpu_custom_call.1} parent=71 // pred_check
          %p2892 = pneg %p2891
        $region90: #{tpu_custom_call.1} parent=71 // pred_check_branch
          %2894 = sbr.rel (%p2892) target = $region92
        $region91: #{tpu_custom_call.1} parent=71 // pred_region
          %v2897 = vrot.slane %v2888, 7
          %vm2898 = vcmask 1041409
          %v2899 = vsel %vm2898, %v2897, %v2887
          %vm2901 = vcmask 254976
          %2902 = vst.msk [vmem:[#allocation9] sm:$0x3] %vm2901, %v2899
        $region92: #{tpu_custom_call.1} parent=71 // pred_fallthru
          _
        // Predicated region
        $region93: #{tpu_custom_call.1} parent=71 // pred_check
          %p2903 = pneg %p397
        $region94: #{tpu_custom_call.1} parent=71 // pred_check_branch
          %2905 = sbr.rel (%p2903) target = $region96
        $region95: #{tpu_custom_call.1} parent=71 // pred_region
          %s2907 = ssub.s32 32, 32
          %2908 = vsyncadd [#allocation5], %s2907
          %s2909 = smul.addr %s33, 32
          %s2910 = scalar_lea.hbm %s13, %s2909
          %s2912 = sshll.u32 [#allocation9], 4
          %s2913 = int_to_ptr.vmem [resolvable:$true] %s2912
          %2915 = dma.vmem_to_hbm [thread:$0]  %s2913, 32, %s2910, [#allocation5]
        $region96: #{tpu_custom_call.1} parent=71 // pred_fallthru
          _
        // Predicated region
        $region97: #{tpu_custom_call.1} parent=71 // pred_check
          %p2916 = pneg %p397
        $region98: #{tpu_custom_call.1} parent=71 // pred_check_branch
          %2918 = sbr.rel (%p2916) target = $region100
        $region99: #{tpu_custom_call.1} parent=71 // pred_region
          %2919 = dma.done [#allocation5], 32
        $region100: #{tpu_custom_call.1} parent=71 // pred_fallthru
          _
      $region72: #{tpu_custom_call.1} parent=5 // pred_fallthru
        _
      %p2920 = scmp.le.s32.totalorder 2, %s24
      // Predicated region
      $region101: #{tpu_custom_call.1} parent=5 // pred_check
        %p2921 = pneg %p2920
      $region102: #{tpu_custom_call.1} parent=5 // pred_check_branch
        %2923 = sbr.rel (%p2921) target = $region104
      $region103: #{tpu_custom_call.1} parent=5 // pred_region
        %s2924 = ssub.s32 %s24, 2
      $region104: #{tpu_custom_call.1} parent=5 // pred_fallthru
        _
    $region6: #{tpu_custom_call.1} parent=1 // loop_footer
      %s28 = sadd.s32 1, %s24
    $region7: #{tpu_custom_call.1} parent=1 // loop_footer_branch
      %23 = sbr.rel target = $region3
    $region8: #{tpu_custom_call.1} parent=1 // loop_exit
      _
    %2925 = vsyncpa [#allocation4], 1
    %s2926 = scalar_lea.sflag [#allocation4], 1
    %2927 = vsyncpa %s2926, 1
    %2928 = vsyncpa [#allocation7], 1
    %s2929 = scalar_lea.sflag [#allocation7], 1
    %2930 = vsyncpa %s2929, 1
    %2931 = vsyncpa [#allocation5], 1
    %s2932 = scalar_lea.sflag [#allocation5], 1
    %2933 = vsyncpa %s2932, 1

</llo_original>
